<compile_context>
chip_gen: v5e
topology: v5e:2x2
jax: 0.10.0
libtpu: 0.0.40
codegen_flags: <defaults>
</compile_context>

<pallas_src>
import functools

import jax
import jax.numpy as jnp
from jax.experimental import pallas as pl
from jax.experimental.pallas import tpu as pltpu


# ----------------------------- Pallas kernel -------------------------------

def _fused_decoder_kernel(x_ref, enc_ref,
                          w_sqkv_ref, w_sfc_ref,
                          w_cq_ref, w_ckv_ref, w_cfc_ref,
                          ln_ref,
                          ff_w1_ref, ff_b1_ref, ff_w2_ref, ff_b2_ref,
                          fc_w_ref, fc_b_ref,
                          o_ref, *, heads, num_layers, eps):
    """All decoder layers + fc_out for one batch element, fully fused in VMEM."""
    x = x_ref[0]      # (L, E)   decoder activations
    enc = enc_ref[0]  # (Lk, E)  encoder output
    L, E = x.shape
    D = E // heads
    scale = 1.0 / (E ** 0.5)

    def mha(q_in, k_in, v_in, w_fc):
        # Per-head attention (heads is small & static -> unrolled in-trace).
        outs = []
        for h in range(heads):
            sl = slice(h * D, (h + 1) * D)
            qh = q_in[:, sl]                       # (Lq, D)
            kh = k_in[:, sl]                       # (Lk, D)
            vh = v_in[:, sl]                       # (Lk, D)
            # q @ k^T via dot_general contracting on D (no explicit transpose).
            s = jax.lax.dot_general(
                qh, kh, (((1,), (1,)), ((), ())),
                preferred_element_type=jnp.float32) * scale
            m = jnp.max(s, axis=-1, keepdims=True)
            p = jnp.exp(s - m)
            denom = jnp.sum(p, axis=-1, keepdims=True)
            p = p * pl.reciprocal(denom, approx=True)
            outs.append(jnp.dot(p, vh, preferred_element_type=jnp.float32))
        concat = jnp.concatenate(outs, axis=-1)    # (Lq, E)
        return jnp.dot(concat, w_fc, preferred_element_type=jnp.float32)

    def layer_norm(z, g_row, b_row):
        mean = jnp.mean(z, axis=-1, keepdims=True)
        var = jnp.mean(jnp.square(z - mean), axis=-1, keepdims=True)
        zn = (z - mean) * jax.lax.rsqrt(var + eps)
        return zn * g_row + b_row

    for li in range(num_layers):                   # static -> unrolled
        ln = ln_ref[li]                            # (6, E)

        # --- self attention: attention(x, x, x) ----------------------------
        qkv = jnp.dot(x, w_sqkv_ref[li], preferred_element_type=jnp.float32)
        q = qkv[:, 0:E]
        k = qkv[:, E:2 * E]
        v = qkv[:, 2 * E:3 * E]
        attn = mha(q, k, v, w_sfc_ref[li])
        query = layer_norm(attn + x, ln[0:1, :], ln[1:2, :])

        # --- cross attention: attention(key=enc, query=query, value=enc) ---
        qc = jnp.dot(query, w_cq_ref[li], preferred_element_type=jnp.float32)
        kvc = jnp.dot(enc, w_ckv_ref[li], preferred_element_type=jnp.float32)
        kc = kvc[:, 0:E]
        vc = kvc[:, E:2 * E]
        cattn = mha(qc, kc, vc, w_cfc_ref[li])
        x2 = layer_norm(query + cattn, ln[2:3, :], ln[3:4, :])

        # --- feed forward ----------------------------------------------------
        h1 = jnp.dot(x2, ff_w1_ref[li], preferred_element_type=jnp.float32) + ff_b1_ref[li]
        h1 = jnp.maximum(h1, 0.0)
        ff = jnp.dot(h1, ff_w2_ref[li], preferred_element_type=jnp.float32) + ff_b2_ref[li]
        x = layer_norm(ff + x2, ln[4:5, :], ln[5:6, :])

    # --- final vocab projection (lane-dense padded vocab) --------------------
    logits = jnp.dot(x, fc_w_ref[...], preferred_element_type=jnp.float32) + fc_b_ref[...]
    o_ref[0] = logits.astype(o_ref.dtype)


# ------------------------------- wrappers -----------------------------------

def decoder_fused(x, enc, packed, fc_w_pad, fc_b_pad, *, heads, num_layers):
    """x: (N, L, E), enc: (N, Lk, E)  ->  padded logits (N, L, Vp)."""
    N, L, E = x.shape
    Lk = enc.shape[1]
    F = packed["ff_w1"].shape[-1]
    Vp = fc_w_pad.shape[1]
    nl = num_layers

    def full(shape):
        return pl.BlockSpec(shape, lambda b, _s=shape: (0,) * len(_s))

    kernel = functools.partial(_fused_decoder_kernel, heads=heads,
                               num_layers=nl, eps=1e-5)
    return pl.pallas_call(
        kernel,
        out_shape=jax.ShapeDtypeStruct((N, L, Vp), jnp.float32),
        grid=(N,),
        in_specs=[
            pl.BlockSpec((1, L, E), lambda b: (b, 0, 0)),     # x
            pl.BlockSpec((1, Lk, E), lambda b: (b, 0, 0)),    # enc
            full((nl, E, 3 * E)),                             # self-attn qkv (block-diag)
            full((nl, E, E)),                                 # self-attn out proj
            full((nl, E, E)),                                 # cross-attn q
            full((nl, E, 2 * E)),                             # cross-attn kv
            full((nl, E, E)),                                 # cross-attn out proj
            full((nl, 6, E)),                                 # packed LN gammas/betas
            full((nl, E, F)),                                 # ff_w1
            full((nl, 1, F)),                                 # ff_b1
            full((nl, F, E)),                                 # ff_w2
            full((nl, 1, E)),                                 # ff_b2
            full((E, Vp)),                                    # fc_out w (vocab-padded)
            full((1, Vp)),                                    # fc_out b (vocab-padded)
        ],
        out_specs=pl.BlockSpec((1, L, Vp), lambda b: (b, 0, 0)),
        compiler_params=pltpu.CompilerParams(
            dimension_semantics=("parallel",)),
    )(x, enc,
      packed["w_sqkv"], packed["w_sfc"],
      packed["w_cq"], packed["w_ckv"], packed["w_cfc"],
      packed["ln"],
      packed["ff_w1"], packed["ff_b1"], packed["ff_w2"], packed["ff_b2"],
      fc_w_pad, fc_b_pad)


def pack_params(params, heads):
    """Fold per-head (D,D) projections into block-diagonal (E,E) weights,
    pack q/k/v (and k/v) side by side, stack LN params, and stack all layers
    along a leading num_layers axis.  Also pad fc_out to a lane-dense vocab."""
    eye = jnp.eye(heads, dtype=jnp.float32)

    def bd(w):  # block-diagonal: same weight applied independently per head
        return jnp.kron(eye, w)

    keys = ["w_sqkv", "w_sfc", "w_cq", "w_ckv", "w_cfc",
            "ln", "ff_w1", "ff_b1", "ff_w2", "ff_b2"]
    acc = {k: [] for k in keys}
    for lp in params["layers"]:
        sa = lp["self_attn"]
        tb = lp["tblock"]
        ca = tb["attn"]
        acc["w_sqkv"].append(jnp.concatenate(
            [bd(sa["wq"]), bd(sa["wk"]), bd(sa["wv"])], axis=1))
        acc["w_sfc"].append(sa["wfc"])
        acc["w_cq"].append(bd(ca["wq"]))
        acc["w_ckv"].append(jnp.concatenate([bd(ca["wk"]), bd(ca["wv"])], axis=1))
        acc["w_cfc"].append(ca["wfc"])
        acc["ln"].append(jnp.stack([lp["n_g"], lp["n_b"],
                                    tb["n1_g"], tb["n1_b"],
                                    tb["n2_g"], tb["n2_b"]], axis=0))
        acc["ff_w1"].append(tb["ff_w1"])
        acc["ff_b1"].append(tb["ff_b1"].reshape(1, -1))
        acc["ff_w2"].append(tb["ff_w2"])
        acc["ff_b2"].append(tb["ff_b2"].reshape(1, -1))
    packed = {k: jnp.stack(v, axis=0) for k, v in acc.items()}

    E, vocab = params["fc_out_w"].shape
    Vp = pl.cdiv(vocab, 128) * 128
    fc_w_pad = jnp.zeros((E, Vp), jnp.float32).at[:, :vocab].set(params["fc_out_w"])
    fc_b_pad = jnp.zeros((1, Vp), jnp.float32).at[:, :vocab].set(
        params["fc_out_b"].reshape(1, -1))
    return packed, fc_w_pad, fc_b_pad, vocab


def decoder_forward(x_ids, enc_out, word_emb, pos_emb, packed, fc_w_pad, fc_b_pad,
                    *, vocab, heads, num_layers):
    N, L = x_ids.shape
    positions = jnp.arange(L)[None, :]
    x = word_emb[x_ids] + pos_emb[positions]                       # (N, L, E)
    logits_pad = decoder_fused(x, enc_out, packed, fc_w_pad, fc_b_pad,
                               heads=heads, num_layers=num_layers)  # (N, L, Vp)
    return logits_pad[..., :vocab]


# ------------------------------ param init ---------------------------------

def _init_attn(key, E, D):
    k = jax.random.split(key, 4)
    s = 0.05
    return {
        "wq": jax.random.normal(k[0], (D, D), jnp.float32) * s,
        "wk": jax.random.normal(k[1], (D, D), jnp.float32) * s,
        "wv": jax.random.normal(k[2], (D, D), jnp.float32) * s,
        "wfc": jax.random.normal(k[3], (E, E), jnp.float32) * s,
    }


def init_params(key, vocab, E, num_layers, heads, fwd_exp, max_len):
    D = E // heads
    keys = jax.random.split(key, 4 + num_layers)
    params = {
        "word_emb": jax.random.normal(keys[0], (vocab, E), jnp.float32) * 0.1,
        "pos_emb": jax.random.normal(keys[1], (max_len, E), jnp.float32) * 0.1,
        "fc_out_w": jax.random.normal(keys[2], (E, vocab), jnp.float32) * 0.05,
        "fc_out_b": jax.random.normal(keys[3], (vocab,), jnp.float32) * 0.01,
        "layers": [],
    }
    for li in range(num_layers):
        lk = jax.random.split(keys[4 + li], 6)
        layer = {
            "self_attn": _init_attn(lk[0], E, D),
            "n_g": jnp.ones((E,), jnp.float32),
            "n_b": jnp.zeros((E,), jnp.float32),
            "tblock": {
                "attn": _init_attn(lk[1], E, D),
                "n1_g": jnp.ones((E,), jnp.float32),
                "n1_b": jnp.zeros((E,), jnp.float32),
                "n2_g": jnp.ones((E,), jnp.float32),
                "n2_b": jnp.zeros((E,), jnp.float32),
                "ff_w1": jax.random.normal(lk[2], (E, fwd_exp * E), jnp.float32) * 0.05,
                "ff_b1": jax.random.normal(lk[3], (fwd_exp * E,), jnp.float32) * 0.01,
                "ff_w2": jax.random.normal(lk[4], (fwd_exp * E, E), jnp.float32) * 0.05,
                "ff_b2": jax.random.normal(lk[5], (E,), jnp.float32) * 0.01,
            },
        }
        params["layers"].append(layer)
    return params


# --------------------------------- main -------------------------------------

if __name__ == "__main__":
    # Small config consistent with the module.
    tgt_vocab_size = 50
    embed_size = 32
    num_layers = 2
    heads = 4
    forward_expansion = 2
    max_length = 16
    N, seq_len, src_len = 2, 8, 8

    root = jax.random.PRNGKey(0)
    k_params, k_ids, k_enc = jax.random.split(root, 3)

    params = init_params(k_params, tgt_vocab_size, embed_size, num_layers,
                         heads, forward_expansion, max_length)

    x_ids = jax.random.randint(k_ids, (N, seq_len), 0, tgt_vocab_size)
    enc_out = jax.random.normal(k_enc, (N, src_len, embed_size), jnp.float32)

    # Pack / fold weights once, outside jit (kron, concat, vocab padding).
    packed, fc_w_pad, fc_b_pad, vocab = pack_params(params, heads)

    # src_mask / tgt_mask intentionally unused (see semantics note above).
    fwd = jax.jit(functools.partial(decoder_forward, vocab=vocab, heads=heads,
                                    num_layers=num_layers))
    logits = fwd(x_ids, enc_out, params["word_emb"], params["pos_emb"],
                 packed, fc_w_pad, fc_b_pad)
    logits = jax.block_until_ready(logits)

    assert logits.shape == (N, seq_len, tgt_vocab_size)
    assert bool(jnp.all(jnp.isfinite(logits)))
    print("KERNEL_OK")
</pallas_src>

<mosaic_0001>
module attributes {stable_mosaic.version = 11 : i64} {
  func.func @_fused_decoder_kernel(%arg0: i32, %arg1: memref<1x8x32xf32, #tpu.memory_space<vmem>>, %arg2: memref<1x8x32xf32, #tpu.memory_space<vmem>>, %arg3: memref<2x32x96xf32, #tpu.memory_space<vmem>>, %arg4: memref<2x32x32xf32, #tpu.memory_space<vmem>>, %arg5: memref<2x32x32xf32, #tpu.memory_space<vmem>>, %arg6: memref<2x32x64xf32, #tpu.memory_space<vmem>>, %arg7: memref<2x32x32xf32, #tpu.memory_space<vmem>>, %arg8: memref<2x6x32xf32, #tpu.memory_space<vmem>>, %arg9: memref<2x32x64xf32, #tpu.memory_space<vmem>>, %arg10: memref<2x1x64xf32, #tpu.memory_space<vmem>>, %arg11: memref<2x64x32xf32, #tpu.memory_space<vmem>>, %arg12: memref<2x1x32xf32, #tpu.memory_space<vmem>>, %arg13: memref<32x128xf32, #tpu.memory_space<vmem>>, %arg14: memref<1x128xf32, #tpu.memory_space<vmem>>, %arg15: memref<1x8x128xf32, #tpu.memory_space<vmem>>) attributes {dimension_semantics = [#tpu.dimension_semantics<parallel>], iteration_bounds = array<i64: 2>, scalar_prefetch = 0 : i64, scratch_operands = 0 : i64, tpu.core_type = #tpu.core_type<tc>, window_params = [{transform_indices = @transform_0, window_bounds = array<i64: 1, 8, 32>}, {transform_indices = @transform_1, window_bounds = array<i64: 1, 8, 32>}, {pipeline_mode = #tpu.pipeline_mode<synchronous>, transform_indices = @transform_2, window_bounds = array<i64: 2, 32, 96>}, {pipeline_mode = #tpu.pipeline_mode<synchronous>, transform_indices = @transform_3, window_bounds = array<i64: 2, 32, 32>}, {pipeline_mode = #tpu.pipeline_mode<synchronous>, transform_indices = @transform_4, window_bounds = array<i64: 2, 32, 32>}, {pipeline_mode = #tpu.pipeline_mode<synchronous>, transform_indices = @transform_5, window_bounds = array<i64: 2, 32, 64>}, {pipeline_mode = #tpu.pipeline_mode<synchronous>, transform_indices = @transform_6, window_bounds = array<i64: 2, 32, 32>}, {pipeline_mode = #tpu.pipeline_mode<synchronous>, transform_indices = @transform_7, window_bounds = array<i64: 2, 6, 32>}, {pipeline_mode = #tpu.pipeline_mode<synchronous>, transform_indices = @transform_8, window_bounds = array<i64: 2, 32, 64>}, {pipeline_mode = #tpu.pipeline_mode<synchronous>, transform_indices = @transform_9, window_bounds = array<i64: 2, 1, 64>}, {pipeline_mode = #tpu.pipeline_mode<synchronous>, transform_indices = @transform_10, window_bounds = array<i64: 2, 64, 32>}, {pipeline_mode = #tpu.pipeline_mode<synchronous>, transform_indices = @transform_11, window_bounds = array<i64: 2, 1, 32>}, {pipeline_mode = #tpu.pipeline_mode<synchronous>, transform_indices = @transform_12, window_bounds = array<i64: 32, 128>}, {pipeline_mode = #tpu.pipeline_mode<synchronous>, transform_indices = @transform_13, window_bounds = array<i64: 1, 128>}, {transform_indices = @transform_14, window_bounds = array<i64: 1, 8, 128>}]} {
    %c0 = arith.constant 0 : index
    %c0_0 = arith.constant 0 : index
    %c0_1 = arith.constant 0 : index
    %0 = vector.load %arg1[%c0, %c0_0, %c0_1] : memref<1x8x32xf32, #tpu.memory_space<vmem>>, vector<1x8x32xf32>
    %1 = vector.shape_cast %0 : vector<1x8x32xf32> to vector<8x32xf32>
    %c0_2 = arith.constant 0 : index
    %c0_3 = arith.constant 0 : index
    %c0_4 = arith.constant 0 : index
    %2 = vector.load %arg2[%c0_2, %c0_3, %c0_4] : memref<1x8x32xf32, #tpu.memory_space<vmem>>, vector<1x8x32xf32>
    %3 = vector.shape_cast %2 : vector<1x8x32xf32> to vector<8x32xf32>
    %c0_5 = arith.constant 0 : index
    %c0_6 = arith.constant 0 : index
    %c0_7 = arith.constant 0 : index
    %4 = vector.load %arg8[%c0_5, %c0_6, %c0_7] : memref<2x6x32xf32, #tpu.memory_space<vmem>>, vector<1x6x32xf32>
    %5 = vector.shape_cast %4 : vector<1x6x32xf32> to vector<6x32xf32>
    %c0_8 = arith.constant 0 : index
    %c0_9 = arith.constant 0 : index
    %c0_10 = arith.constant 0 : index
    %6 = vector.load %arg3[%c0_8, %c0_9, %c0_10] : memref<2x32x96xf32, #tpu.memory_space<vmem>>, vector<1x32x96xf32>
    %7 = vector.shape_cast %6 : vector<1x32x96xf32> to vector<32x96xf32>
    %cst = arith.constant dense<0.000000e+00> : vector<8x96xf32>
    %8 = tpu.matmul %1, %7, %cst {dimension_numbers = #tpu.dot_dimension_numbers<[1], [0], [0], [1], [0, 0, 1, 1], [], []>} : vector<8x32xf32>, vector<32x96xf32>, vector<8x96xf32> -> vector<8x96xf32>
    %9 = vector.extract_strided_slice %8 {offsets = [0, 0], sizes = [8, 32], strides = [1, 1]} : vector<8x96xf32> to vector<8x32xf32>
    %10 = vector.extract_strided_slice %8 {offsets = [0, 32], sizes = [8, 32], strides = [1, 1]} : vector<8x96xf32> to vector<8x32xf32>
    %11 = vector.extract_strided_slice %8 {offsets = [0, 64], sizes = [8, 32], strides = [1, 1]} : vector<8x96xf32> to vector<8x32xf32>
    %c0_11 = arith.constant 0 : index
    %c0_12 = arith.constant 0 : index
    %c0_13 = arith.constant 0 : index
    %12 = vector.load %arg4[%c0_11, %c0_12, %c0_13] : memref<2x32x32xf32, #tpu.memory_space<vmem>>, vector<1x32x32xf32>
    %13 = vector.shape_cast %12 : vector<1x32x32xf32> to vector<32x32xf32>
    %14 = vector.extract_strided_slice %9 {offsets = [0, 0], sizes = [8, 8], strides = [1, 1]} : vector<8x32xf32> to vector<8x8xf32>
    %15 = vector.extract_strided_slice %10 {offsets = [0, 0], sizes = [8, 8], strides = [1, 1]} : vector<8x32xf32> to vector<8x8xf32>
    %16 = vector.extract_strided_slice %11 {offsets = [0, 0], sizes = [8, 8], strides = [1, 1]} : vector<8x32xf32> to vector<8x8xf32>
    %cst_14 = arith.constant dense<0.000000e+00> : vector<8x8xf32>
    %17 = tpu.matmul %14, %15, %cst_14 {dimension_numbers = #tpu.dot_dimension_numbers<[1], [1], [0], [0], [0, 0, 1, 0], [], []>} : vector<8x8xf32>, vector<8x8xf32>, vector<8x8xf32> -> vector<8x8xf32>
    %cst_15 = arith.constant 0.176776692 : f32
    %18 = vector.broadcast %cst_15 : f32 to vector<8x8xf32>
    %19 = arith.mulf %17, %18 : vector<8x8xf32>
    %cst_16 = arith.constant dense<0xFF800000> : vector<8xf32>
    %20 = vector.multi_reduction <maximumf>, %19, %cst_16 [1] : vector<8x8xf32> to vector<8xf32>
    %21 = vector.shape_cast %20 : vector<8xf32> to vector<8x1xf32>
    %22 = vector.broadcast %21 : vector<8x1xf32> to vector<8x8xf32>
    %23 = arith.subf %19, %22 : vector<8x8xf32>
    %24 = math.exp %23 : vector<8x8xf32>
    %cst_17 = arith.constant dense<0.000000e+00> : vector<8xf32>
    %25 = vector.multi_reduction <add>, %24, %cst_17 [1] : vector<8x8xf32> to vector<8xf32>
    %26 = vector.shape_cast %25 : vector<8xf32> to vector<8x1xf32>
    %27 = tpu.reciprocal %26 {approx = true} : vector<8x1xf32> -> vector<8x1xf32>
    %28 = vector.broadcast %27 : vector<8x1xf32> to vector<8x8xf32>
    %29 = arith.mulf %24, %28 : vector<8x8xf32>
    %cst_18 = arith.constant dense<0.000000e+00> : vector<8x8xf32>
    %30 = tpu.matmul %29, %16, %cst_18 {dimension_numbers = #tpu.dot_dimension_numbers<[1], [0], [0], [1], [0, 0, 1, 1], [], []>} : vector<8x8xf32>, vector<8x8xf32>, vector<8x8xf32> -> vector<8x8xf32>
    %31 = vector.extract_strided_slice %9 {offsets = [0, 8], sizes = [8, 8], strides = [1, 1]} : vector<8x32xf32> to vector<8x8xf32>
    %32 = vector.extract_strided_slice %10 {offsets = [0, 8], sizes = [8, 8], strides = [1, 1]} : vector<8x32xf32> to vector<8x8xf32>
    %33 = vector.extract_strided_slice %11 {offsets = [0, 8], sizes = [8, 8], strides = [1, 1]} : vector<8x32xf32> to vector<8x8xf32>
    %cst_19 = arith.constant dense<0.000000e+00> : vector<8x8xf32>
    %34 = tpu.matmul %31, %32, %cst_19 {dimension_numbers = #tpu.dot_dimension_numbers<[1], [1], [0], [0], [0, 0, 1, 0], [], []>} : vector<8x8xf32>, vector<8x8xf32>, vector<8x8xf32> -> vector<8x8xf32>
    %cst_20 = arith.constant 0.176776692 : f32
    %35 = vector.broadcast %cst_20 : f32 to vector<8x8xf32>
    %36 = arith.mulf %34, %35 : vector<8x8xf32>
    %cst_21 = arith.constant dense<0xFF800000> : vector<8xf32>
    %37 = vector.multi_reduction <maximumf>, %36, %cst_21 [1] : vector<8x8xf32> to vector<8xf32>
    %38 = vector.shape_cast %37 : vector<8xf32> to vector<8x1xf32>
    %39 = vector.broadcast %38 : vector<8x1xf32> to vector<8x8xf32>
    %40 = arith.subf %36, %39 : vector<8x8xf32>
    %41 = math.exp %40 : vector<8x8xf32>
    %cst_22 = arith.constant dense<0.000000e+00> : vector<8xf32>
    %42 = vector.multi_reduction <add>, %41, %cst_22 [1] : vector<8x8xf32> to vector<8xf32>
    %43 = vector.shape_cast %42 : vector<8xf32> to vector<8x1xf32>
    %44 = tpu.reciprocal %43 {approx = true} : vector<8x1xf32> -> vector<8x1xf32>
    %45 = vector.broadcast %44 : vector<8x1xf32> to vector<8x8xf32>
    %46 = arith.mulf %41, %45 : vector<8x8xf32>
    %cst_23 = arith.constant dense<0.000000e+00> : vector<8x8xf32>
    %47 = tpu.matmul %46, %33, %cst_23 {dimension_numbers = #tpu.dot_dimension_numbers<[1], [0], [0], [1], [0, 0, 1, 1], [], []>} : vector<8x8xf32>, vector<8x8xf32>, vector<8x8xf32> -> vector<8x8xf32>
    %48 = vector.extract_strided_slice %9 {offsets = [0, 16], sizes = [8, 8], strides = [1, 1]} : vector<8x32xf32> to vector<8x8xf32>
    %49 = vector.extract_strided_slice %10 {offsets = [0, 16], sizes = [8, 8], strides = [1, 1]} : vector<8x32xf32> to vector<8x8xf32>
    %50 = vector.extract_strided_slice %11 {offsets = [0, 16], sizes = [8, 8], strides = [1, 1]} : vector<8x32xf32> to vector<8x8xf32>
    %cst_24 = arith.constant dense<0.000000e+00> : vector<8x8xf32>
    %51 = tpu.matmul %48, %49, %cst_24 {dimension_numbers = #tpu.dot_dimension_numbers<[1], [1], [0], [0], [0, 0, 1, 0], [], []>} : vector<8x8xf32>, vector<8x8xf32>, vector<8x8xf32> -> vector<8x8xf32>
    %cst_25 = arith.constant 0.176776692 : f32
    %52 = vector.broadcast %cst_25 : f32 to vector<8x8xf32>
    %53 = arith.mulf %51, %52 : vector<8x8xf32>
    %cst_26 = arith.constant dense<0xFF800000> : vector<8xf32>
    %54 = vector.multi_reduction <maximumf>, %53, %cst_26 [1] : vector<8x8xf32> to vector<8xf32>
    %55 = vector.shape_cast %54 : vector<8xf32> to vector<8x1xf32>
    %56 = vector.broadcast %55 : vector<8x1xf32> to vector<8x8xf32>
    %57 = arith.subf %53, %56 : vector<8x8xf32>
    %58 = math.exp %57 : vector<8x8xf32>
    %cst_27 = arith.constant dense<0.000000e+00> : vector<8xf32>
    %59 = vector.multi_reduction <add>, %58, %cst_27 [1] : vector<8x8xf32> to vector<8xf32>
    %60 = vector.shape_cast %59 : vector<8xf32> to vector<8x1xf32>
    %61 = tpu.reciprocal %60 {approx = true} : vector<8x1xf32> -> vector<8x1xf32>
    %62 = vector.broadcast %61 : vector<8x1xf32> to vector<8x8xf32>
    %63 = arith.mulf %58, %62 : vector<8x8xf32>
    %cst_28 = arith.constant dense<0.000000e+00> : vector<8x8xf32>
    %64 = tpu.matmul %63, %50, %cst_28 {dimension_numbers = #tpu.dot_dimension_numbers<[1], [0], [0], [1], [0, 0, 1, 1], [], []>} : vector<8x8xf32>, vector<8x8xf32>, vector<8x8xf32> -> vector<8x8xf32>
    %65 = vector.extract_strided_slice %9 {offsets = [0, 24], sizes = [8, 8], strides = [1, 1]} : vector<8x32xf32> to vector<8x8xf32>
    %66 = vector.extract_strided_slice %10 {offsets = [0, 24], sizes = [8, 8], strides = [1, 1]} : vector<8x32xf32> to vector<8x8xf32>
    %67 = vector.extract_strided_slice %11 {offsets = [0, 24], sizes = [8, 8], strides = [1, 1]} : vector<8x32xf32> to vector<8x8xf32>
    %cst_29 = arith.constant dense<0.000000e+00> : vector<8x8xf32>
    %68 = tpu.matmul %65, %66, %cst_29 {dimension_numbers = #tpu.dot_dimension_numbers<[1], [1], [0], [0], [0, 0, 1, 0], [], []>} : vector<8x8xf32>, vector<8x8xf32>, vector<8x8xf32> -> vector<8x8xf32>
    %cst_30 = arith.constant 0.176776692 : f32
    %69 = vector.broadcast %cst_30 : f32 to vector<8x8xf32>
    %70 = arith.mulf %68, %69 : vector<8x8xf32>
    %cst_31 = arith.constant dense<0xFF800000> : vector<8xf32>
    %71 = vector.multi_reduction <maximumf>, %70, %cst_31 [1] : vector<8x8xf32> to vector<8xf32>
    %72 = vector.shape_cast %71 : vector<8xf32> to vector<8x1xf32>
    %73 = vector.broadcast %72 : vector<8x1xf32> to vector<8x8xf32>
    %74 = arith.subf %70, %73 : vector<8x8xf32>
    %75 = math.exp %74 : vector<8x8xf32>
    %cst_32 = arith.constant dense<0.000000e+00> : vector<8xf32>
    %76 = vector.multi_reduction <add>, %75, %cst_32 [1] : vector<8x8xf32> to vector<8xf32>
    %77 = vector.shape_cast %76 : vector<8xf32> to vector<8x1xf32>
    %78 = tpu.reciprocal %77 {approx = true} : vector<8x1xf32> -> vector<8x1xf32>
    %79 = vector.broadcast %78 : vector<8x1xf32> to vector<8x8xf32>
    %80 = arith.mulf %75, %79 : vector<8x8xf32>
    %cst_33 = arith.constant dense<0.000000e+00> : vector<8x8xf32>
    %81 = tpu.matmul %80, %67, %cst_33 {dimension_numbers = #tpu.dot_dimension_numbers<[1], [0], [0], [1], [0, 0, 1, 1], [], []>} : vector<8x8xf32>, vector<8x8xf32>, vector<8x8xf32> -> vector<8x8xf32>
    %82 = tpu.concatenate %30, %47, %64, %81 in 1 : vector<8x8xf32>, vector<8x8xf32>, vector<8x8xf32>, vector<8x8xf32> -> vector<8x32xf32>
    %cst_34 = arith.constant dense<0.000000e+00> : vector<8x32xf32>
    %83 = tpu.matmul %82, %13, %cst_34 {dimension_numbers = #tpu.dot_dimension_numbers<[1], [0], [0], [1], [0, 0, 1, 1], [], []>} : vector<8x32xf32>, vector<32x32xf32>, vector<8x32xf32> -> vector<8x32xf32>
    %84 = arith.addf %83, %1 : vector<8x32xf32>
    %85 = vector.extract_strided_slice %5 {offsets = [0, 0], sizes = [1, 32], strides = [1, 1]} : vector<6x32xf32> to vector<1x32xf32>
    %86 = vector.extract_strided_slice %5 {offsets = [1, 0], sizes = [1, 32], strides = [1, 1]} : vector<6x32xf32> to vector<1x32xf32>
    %cst_35 = arith.constant dense<0.000000e+00> : vector<8xf32>
    %87 = vector.multi_reduction <add>, %84, %cst_35 [1] : vector<8x32xf32> to vector<8xf32>
    %88 = vector.shape_cast %87 : vector<8xf32> to vector<8x1xf32>
    %cst_36 = arith.constant 3.200000e+01 : f32
    %89 = vector.broadcast %cst_36 : f32 to vector<8x1xf32>
    %90 = arith.divf %88, %89 : vector<8x1xf32>
    %91 = vector.broadcast %90 : vector<8x1xf32> to vector<8x32xf32>
    %92 = arith.subf %84, %91 : vector<8x32xf32>
    %93 = arith.mulf %92, %92 : vector<8x32xf32>
    %cst_37 = arith.constant dense<0.000000e+00> : vector<8xf32>
    %94 = vector.multi_reduction <add>, %93, %cst_37 [1] : vector<8x32xf32> to vector<8xf32>
    %95 = vector.shape_cast %94 : vector<8xf32> to vector<8x1xf32>
    %cst_38 = arith.constant 3.200000e+01 : f32
    %96 = vector.broadcast %cst_38 : f32 to vector<8x1xf32>
    %97 = arith.divf %95, %96 : vector<8x1xf32>
    %98 = vector.broadcast %90 : vector<8x1xf32> to vector<8x32xf32>
    %99 = arith.subf %84, %98 : vector<8x32xf32>
    %cst_39 = arith.constant 9.99999974E-6 : f32
    %100 = vector.broadcast %cst_39 : f32 to vector<8x1xf32>
    %101 = arith.addf %97, %100 : vector<8x1xf32>
    %102 = math.rsqrt %101 : vector<8x1xf32>
    %103 = vector.broadcast %102 : vector<8x1xf32> to vector<8x32xf32>
    %104 = arith.mulf %99, %103 : vector<8x32xf32>
    %105 = vector.broadcast %85 : vector<1x32xf32> to vector<8x32xf32>
    %106 = arith.mulf %104, %105 : vector<8x32xf32>
    %107 = vector.broadcast %86 : vector<1x32xf32> to vector<8x32xf32>
    %108 = arith.addf %106, %107 : vector<8x32xf32>
    %c0_40 = arith.constant 0 : index
    %c0_41 = arith.constant 0 : index
    %c0_42 = arith.constant 0 : index
    %109 = vector.load %arg5[%c0_40, %c0_41, %c0_42] : memref<2x32x32xf32, #tpu.memory_space<vmem>>, vector<1x32x32xf32>
    %110 = vector.shape_cast %109 : vector<1x32x32xf32> to vector<32x32xf32>
    %cst_43 = arith.constant dense<0.000000e+00> : vector<8x32xf32>
    %111 = tpu.matmul %108, %110, %cst_43 {dimension_numbers = #tpu.dot_dimension_numbers<[1], [0], [0], [1], [0, 0, 1, 1], [], []>} : vector<8x32xf32>, vector<32x32xf32>, vector<8x32xf32> -> vector<8x32xf32>
    %c0_44 = arith.constant 0 : index
    %c0_45 = arith.constant 0 : index
    %c0_46 = arith.constant 0 : index
    %112 = vector.load %arg6[%c0_44, %c0_45, %c0_46] : memref<2x32x64xf32, #tpu.memory_space<vmem>>, vector<1x32x64xf32>
    %113 = vector.shape_cast %112 : vector<1x32x64xf32> to vector<32x64xf32>
    %cst_47 = arith.constant dense<0.000000e+00> : vector<8x64xf32>
    %114 = tpu.matmul %3, %113, %cst_47 {dimension_numbers = #tpu.dot_dimension_numbers<[1], [0], [0], [1], [0, 0, 1, 1], [], []>} : vector<8x32xf32>, vector<32x64xf32>, vector<8x64xf32> -> vector<8x64xf32>
    %115 = vector.extract_strided_slice %114 {offsets = [0, 0], sizes = [8, 32], strides = [1, 1]} : vector<8x64xf32> to vector<8x32xf32>
    %116 = vector.extract_strided_slice %114 {offsets = [0, 32], sizes = [8, 32], strides = [1, 1]} : vector<8x64xf32> to vector<8x32xf32>
    %c0_48 = arith.constant 0 : index
    %c0_49 = arith.constant 0 : index
    %c0_50 = arith.constant 0 : index
    %117 = vector.load %arg7[%c0_48, %c0_49, %c0_50] : memref<2x32x32xf32, #tpu.memory_space<vmem>>, vector<1x32x32xf32>
    %118 = vector.shape_cast %117 : vector<1x32x32xf32> to vector<32x32xf32>
    %119 = vector.extract_strided_slice %111 {offsets = [0, 0], sizes = [8, 8], strides = [1, 1]} : vector<8x32xf32> to vector<8x8xf32>
    %120 = vector.extract_strided_slice %115 {offsets = [0, 0], sizes = [8, 8], strides = [1, 1]} : vector<8x32xf32> to vector<8x8xf32>
    %121 = vector.extract_strided_slice %116 {offsets = [0, 0], sizes = [8, 8], strides = [1, 1]} : vector<8x32xf32> to vector<8x8xf32>
    %cst_51 = arith.constant dense<0.000000e+00> : vector<8x8xf32>
    %122 = tpu.matmul %119, %120, %cst_51 {dimension_numbers = #tpu.dot_dimension_numbers<[1], [1], [0], [0], [0, 0, 1, 0], [], []>} : vector<8x8xf32>, vector<8x8xf32>, vector<8x8xf32> -> vector<8x8xf32>
    %cst_52 = arith.constant 0.176776692 : f32
    %123 = vector.broadcast %cst_52 : f32 to vector<8x8xf32>
    %124 = arith.mulf %122, %123 : vector<8x8xf32>
    %cst_53 = arith.constant dense<0xFF800000> : vector<8xf32>
    %125 = vector.multi_reduction <maximumf>, %124, %cst_53 [1] : vector<8x8xf32> to vector<8xf32>
    %126 = vector.shape_cast %125 : vector<8xf32> to vector<8x1xf32>
    %127 = vector.broadcast %126 : vector<8x1xf32> to vector<8x8xf32>
    %128 = arith.subf %124, %127 : vector<8x8xf32>
    %129 = math.exp %128 : vector<8x8xf32>
    %cst_54 = arith.constant dense<0.000000e+00> : vector<8xf32>
    %130 = vector.multi_reduction <add>, %129, %cst_54 [1] : vector<8x8xf32> to vector<8xf32>
    %131 = vector.shape_cast %130 : vector<8xf32> to vector<8x1xf32>
    %132 = tpu.reciprocal %131 {approx = true} : vector<8x1xf32> -> vector<8x1xf32>
    %133 = vector.broadcast %132 : vector<8x1xf32> to vector<8x8xf32>
    %134 = arith.mulf %129, %133 : vector<8x8xf32>
    %cst_55 = arith.constant dense<0.000000e+00> : vector<8x8xf32>
    %135 = tpu.matmul %134, %121, %cst_55 {dimension_numbers = #tpu.dot_dimension_numbers<[1], [0], [0], [1], [0, 0, 1, 1], [], []>} : vector<8x8xf32>, vector<8x8xf32>, vector<8x8xf32> -> vector<8x8xf32>
    %136 = vector.extract_strided_slice %111 {offsets = [0, 8], sizes = [8, 8], strides = [1, 1]} : vector<8x32xf32> to vector<8x8xf32>
    %137 = vector.extract_strided_slice %115 {offsets = [0, 8], sizes = [8, 8], strides = [1, 1]} : vector<8x32xf32> to vector<8x8xf32>
    %138 = vector.extract_strided_slice %116 {offsets = [0, 8], sizes = [8, 8], strides = [1, 1]} : vector<8x32xf32> to vector<8x8xf32>
    %cst_56 = arith.constant dense<0.000000e+00> : vector<8x8xf32>
    %139 = tpu.matmul %136, %137, %cst_56 {dimension_numbers = #tpu.dot_dimension_numbers<[1], [1], [0], [0], [0, 0, 1, 0], [], []>} : vector<8x8xf32>, vector<8x8xf32>, vector<8x8xf32> -> vector<8x8xf32>
    %cst_57 = arith.constant 0.176776692 : f32
    %140 = vector.broadcast %cst_57 : f32 to vector<8x8xf32>
    %141 = arith.mulf %139, %140 : vector<8x8xf32>
    %cst_58 = arith.constant dense<0xFF800000> : vector<8xf32>
    %142 = vector.multi_reduction <maximumf>, %141, %cst_58 [1] : vector<8x8xf32> to vector<8xf32>
    %143 = vector.shape_cast %142 : vector<8xf32> to vector<8x1xf32>
    %144 = vector.broadcast %143 : vector<8x1xf32> to vector<8x8xf32>
    %145 = arith.subf %141, %144 : vector<8x8xf32>
    %146 = math.exp %145 : vector<8x8xf32>
    %cst_59 = arith.constant dense<0.000000e+00> : vector<8xf32>
    %147 = vector.multi_reduction <add>, %146, %cst_59 [1] : vector<8x8xf32> to vector<8xf32>
    %148 = vector.shape_cast %147 : vector<8xf32> to vector<8x1xf32>
    %149 = tpu.reciprocal %148 {approx = true} : vector<8x1xf32> -> vector<8x1xf32>
    %150 = vector.broadcast %149 : vector<8x1xf32> to vector<8x8xf32>
    %151 = arith.mulf %146, %150 : vector<8x8xf32>
    %cst_60 = arith.constant dense<0.000000e+00> : vector<8x8xf32>
    %152 = tpu.matmul %151, %138, %cst_60 {dimension_numbers = #tpu.dot_dimension_numbers<[1], [0], [0], [1], [0, 0, 1, 1], [], []>} : vector<8x8xf32>, vector<8x8xf32>, vector<8x8xf32> -> vector<8x8xf32>
    %153 = vector.extract_strided_slice %111 {offsets = [0, 16], sizes = [8, 8], strides = [1, 1]} : vector<8x32xf32> to vector<8x8xf32>
    %154 = vector.extract_strided_slice %115 {offsets = [0, 16], sizes = [8, 8], strides = [1, 1]} : vector<8x32xf32> to vector<8x8xf32>
    %155 = vector.extract_strided_slice %116 {offsets = [0, 16], sizes = [8, 8], strides = [1, 1]} : vector<8x32xf32> to vector<8x8xf32>
    %cst_61 = arith.constant dense<0.000000e+00> : vector<8x8xf32>
    %156 = tpu.matmul %153, %154, %cst_61 {dimension_numbers = #tpu.dot_dimension_numbers<[1], [1], [0], [0], [0, 0, 1, 0], [], []>} : vector<8x8xf32>, vector<8x8xf32>, vector<8x8xf32> -> vector<8x8xf32>
    %cst_62 = arith.constant 0.176776692 : f32
    %157 = vector.broadcast %cst_62 : f32 to vector<8x8xf32>
    %158 = arith.mulf %156, %157 : vector<8x8xf32>
    %cst_63 = arith.constant dense<0xFF800000> : vector<8xf32>
    %159 = vector.multi_reduction <maximumf>, %158, %cst_63 [1] : vector<8x8xf32> to vector<8xf32>
    %160 = vector.shape_cast %159 : vector<8xf32> to vector<8x1xf32>
    %161 = vector.broadcast %160 : vector<8x1xf32> to vector<8x8xf32>
    %162 = arith.subf %158, %161 : vector<8x8xf32>
    %163 = math.exp %162 : vector<8x8xf32>
    %cst_64 = arith.constant dense<0.000000e+00> : vector<8xf32>
    %164 = vector.multi_reduction <add>, %163, %cst_64 [1] : vector<8x8xf32> to vector<8xf32>
    %165 = vector.shape_cast %164 : vector<8xf32> to vector<8x1xf32>
    %166 = tpu.reciprocal %165 {approx = true} : vector<8x1xf32> -> vector<8x1xf32>
    %167 = vector.broadcast %166 : vector<8x1xf32> to vector<8x8xf32>
    %168 = arith.mulf %163, %167 : vector<8x8xf32>
    %cst_65 = arith.constant dense<0.000000e+00> : vector<8x8xf32>
    %169 = tpu.matmul %168, %155, %cst_65 {dimension_numbers = #tpu.dot_dimension_numbers<[1], [0], [0], [1], [0, 0, 1, 1], [], []>} : vector<8x8xf32>, vector<8x8xf32>, vector<8x8xf32> -> vector<8x8xf32>
    %170 = vector.extract_strided_slice %111 {offsets = [0, 24], sizes = [8, 8], strides = [1, 1]} : vector<8x32xf32> to vector<8x8xf32>
    %171 = vector.extract_strided_slice %115 {offsets = [0, 24], sizes = [8, 8], strides = [1, 1]} : vector<8x32xf32> to vector<8x8xf32>
    %172 = vector.extract_strided_slice %116 {offsets = [0, 24], sizes = [8, 8], strides = [1, 1]} : vector<8x32xf32> to vector<8x8xf32>
    %cst_66 = arith.constant dense<0.000000e+00> : vector<8x8xf32>
    %173 = tpu.matmul %170, %171, %cst_66 {dimension_numbers = #tpu.dot_dimension_numbers<[1], [1], [0], [0], [0, 0, 1, 0], [], []>} : vector<8x8xf32>, vector<8x8xf32>, vector<8x8xf32> -> vector<8x8xf32>
    %cst_67 = arith.constant 0.176776692 : f32
    %174 = vector.broadcast %cst_67 : f32 to vector<8x8xf32>
    %175 = arith.mulf %173, %174 : vector<8x8xf32>
    %cst_68 = arith.constant dense<0xFF800000> : vector<8xf32>
    %176 = vector.multi_reduction <maximumf>, %175, %cst_68 [1] : vector<8x8xf32> to vector<8xf32>
    %177 = vector.shape_cast %176 : vector<8xf32> to vector<8x1xf32>
    %178 = vector.broadcast %177 : vector<8x1xf32> to vector<8x8xf32>
    %179 = arith.subf %175, %178 : vector<8x8xf32>
    %180 = math.exp %179 : vector<8x8xf32>
    %cst_69 = arith.constant dense<0.000000e+00> : vector<8xf32>
    %181 = vector.multi_reduction <add>, %180, %cst_69 [1] : vector<8x8xf32> to vector<8xf32>
    %182 = vector.shape_cast %181 : vector<8xf32> to vector<8x1xf32>
    %183 = tpu.reciprocal %182 {approx = true} : vector<8x1xf32> -> vector<8x1xf32>
    %184 = vector.broadcast %183 : vector<8x1xf32> to vector<8x8xf32>
    %185 = arith.mulf %180, %184 : vector<8x8xf32>
    %cst_70 = arith.constant dense<0.000000e+00> : vector<8x8xf32>
    %186 = tpu.matmul %185, %172, %cst_70 {dimension_numbers = #tpu.dot_dimension_numbers<[1], [0], [0], [1], [0, 0, 1, 1], [], []>} : vector<8x8xf32>, vector<8x8xf32>, vector<8x8xf32> -> vector<8x8xf32>
    %187 = tpu.concatenate %135, %152, %169, %186 in 1 : vector<8x8xf32>, vector<8x8xf32>, vector<8x8xf32>, vector<8x8xf32> -> vector<8x32xf32>
    %cst_71 = arith.constant dense<0.000000e+00> : vector<8x32xf32>
    %188 = tpu.matmul %187, %118, %cst_71 {dimension_numbers = #tpu.dot_dimension_numbers<[1], [0], [0], [1], [0, 0, 1, 1], [], []>} : vector<8x32xf32>, vector<32x32xf32>, vector<8x32xf32> -> vector<8x32xf32>
    %189 = arith.addf %108, %188 : vector<8x32xf32>
    %190 = vector.extract_strided_slice %5 {offsets = [2, 0], sizes = [1, 32], strides = [1, 1]} : vector<6x32xf32> to vector<1x32xf32>
    %191 = vector.extract_strided_slice %5 {offsets = [3, 0], sizes = [1, 32], strides = [1, 1]} : vector<6x32xf32> to vector<1x32xf32>
    %cst_72 = arith.constant dense<0.000000e+00> : vector<8xf32>
    %192 = vector.multi_reduction <add>, %189, %cst_72 [1] : vector<8x32xf32> to vector<8xf32>
    %193 = vector.shape_cast %192 : vector<8xf32> to vector<8x1xf32>
    %cst_73 = arith.constant 3.200000e+01 : f32
    %194 = vector.broadcast %cst_73 : f32 to vector<8x1xf32>
    %195 = arith.divf %193, %194 : vector<8x1xf32>
    %196 = vector.broadcast %195 : vector<8x1xf32> to vector<8x32xf32>
    %197 = arith.subf %189, %196 : vector<8x32xf32>
    %198 = arith.mulf %197, %197 : vector<8x32xf32>
    %cst_74 = arith.constant dense<0.000000e+00> : vector<8xf32>
    %199 = vector.multi_reduction <add>, %198, %cst_74 [1] : vector<8x32xf32> to vector<8xf32>
    %200 = vector.shape_cast %199 : vector<8xf32> to vector<8x1xf32>
    %cst_75 = arith.constant 3.200000e+01 : f32
    %201 = vector.broadcast %cst_75 : f32 to vector<8x1xf32>
    %202 = arith.divf %200, %201 : vector<8x1xf32>
    %203 = vector.broadcast %195 : vector<8x1xf32> to vector<8x32xf32>
    %204 = arith.subf %189, %203 : vector<8x32xf32>
    %cst_76 = arith.constant 9.99999974E-6 : f32
    %205 = vector.broadcast %cst_76 : f32 to vector<8x1xf32>
    %206 = arith.addf %202, %205 : vector<8x1xf32>
    %207 = math.rsqrt %206 : vector<8x1xf32>
    %208 = vector.broadcast %207 : vector<8x1xf32> to vector<8x32xf32>
    %209 = arith.mulf %204, %208 : vector<8x32xf32>
    %210 = vector.broadcast %190 : vector<1x32xf32> to vector<8x32xf32>
    %211 = arith.mulf %209, %210 : vector<8x32xf32>
    %212 = vector.broadcast %191 : vector<1x32xf32> to vector<8x32xf32>
    %213 = arith.addf %211, %212 : vector<8x32xf32>
    %c0_77 = arith.constant 0 : index
    %c0_78 = arith.constant 0 : index
    %c0_79 = arith.constant 0 : index
    %214 = vector.load %arg9[%c0_77, %c0_78, %c0_79] : memref<2x32x64xf32, #tpu.memory_space<vmem>>, vector<1x32x64xf32>
    %215 = vector.shape_cast %214 : vector<1x32x64xf32> to vector<32x64xf32>
    %cst_80 = arith.constant dense<0.000000e+00> : vector<8x64xf32>
    %216 = tpu.matmul %213, %215, %cst_80 {dimension_numbers = #tpu.dot_dimension_numbers<[1], [0], [0], [1], [0, 0, 1, 1], [], []>} : vector<8x32xf32>, vector<32x64xf32>, vector<8x64xf32> -> vector<8x64xf32>
    %c0_81 = arith.constant 0 : index
    %c0_82 = arith.constant 0 : index
    %c0_83 = arith.constant 0 : index
    %217 = vector.load %arg10[%c0_81, %c0_82, %c0_83] : memref<2x1x64xf32, #tpu.memory_space<vmem>>, vector<1x1x64xf32>
    %218 = vector.shape_cast %217 : vector<1x1x64xf32> to vector<1x64xf32>
    %219 = vector.broadcast %218 : vector<1x64xf32> to vector<8x64xf32>
    %220 = arith.addf %216, %219 : vector<8x64xf32>
    %cst_84 = arith.constant 0.000000e+00 : f32
    %221 = vector.broadcast %cst_84 : f32 to vector<8x64xf32>
    %222 = arith.maximumf %220, %221 : vector<8x64xf32>
    %c0_85 = arith.constant 0 : index
    %c0_86 = arith.constant 0 : index
    %c0_87 = arith.constant 0 : index
    %223 = vector.load %arg11[%c0_85, %c0_86, %c0_87] : memref<2x64x32xf32, #tpu.memory_space<vmem>>, vector<1x64x32xf32>
    %224 = vector.shape_cast %223 : vector<1x64x32xf32> to vector<64x32xf32>
    %cst_88 = arith.constant dense<0.000000e+00> : vector<8x32xf32>
    %225 = tpu.matmul %222, %224, %cst_88 {dimension_numbers = #tpu.dot_dimension_numbers<[1], [0], [0], [1], [0, 0, 1, 1], [], []>} : vector<8x64xf32>, vector<64x32xf32>, vector<8x32xf32> -> vector<8x32xf32>
    %c0_89 = arith.constant 0 : index
    %c0_90 = arith.constant 0 : index
    %c0_91 = arith.constant 0 : index
    %226 = vector.load %arg12[%c0_89, %c0_90, %c0_91] : memref<2x1x32xf32, #tpu.memory_space<vmem>>, vector<1x1x32xf32>
    %227 = vector.shape_cast %226 : vector<1x1x32xf32> to vector<1x32xf32>
    %228 = vector.broadcast %227 : vector<1x32xf32> to vector<8x32xf32>
    %229 = arith.addf %225, %228 : vector<8x32xf32>
    %230 = arith.addf %229, %213 : vector<8x32xf32>
    %231 = vector.extract_strided_slice %5 {offsets = [4, 0], sizes = [1, 32], strides = [1, 1]} : vector<6x32xf32> to vector<1x32xf32>
    %232 = vector.extract_strided_slice %5 {offsets = [5, 0], sizes = [1, 32], strides = [1, 1]} : vector<6x32xf32> to vector<1x32xf32>
    %cst_92 = arith.constant dense<0.000000e+00> : vector<8xf32>
    %233 = vector.multi_reduction <add>, %230, %cst_92 [1] : vector<8x32xf32> to vector<8xf32>
    %234 = vector.shape_cast %233 : vector<8xf32> to vector<8x1xf32>
    %cst_93 = arith.constant 3.200000e+01 : f32
    %235 = vector.broadcast %cst_93 : f32 to vector<8x1xf32>
    %236 = arith.divf %234, %235 : vector<8x1xf32>
    %237 = vector.broadcast %236 : vector<8x1xf32> to vector<8x32xf32>
    %238 = arith.subf %230, %237 : vector<8x32xf32>
    %239 = arith.mulf %238, %238 : vector<8x32xf32>
    %cst_94 = arith.constant dense<0.000000e+00> : vector<8xf32>
    %240 = vector.multi_reduction <add>, %239, %cst_94 [1] : vector<8x32xf32> to vector<8xf32>
    %241 = vector.shape_cast %240 : vector<8xf32> to vector<8x1xf32>
    %cst_95 = arith.constant 3.200000e+01 : f32
    %242 = vector.broadcast %cst_95 : f32 to vector<8x1xf32>
    %243 = arith.divf %241, %242 : vector<8x1xf32>
    %244 = vector.broadcast %236 : vector<8x1xf32> to vector<8x32xf32>
    %245 = arith.subf %230, %244 : vector<8x32xf32>
    %cst_96 = arith.constant 9.99999974E-6 : f32
    %246 = vector.broadcast %cst_96 : f32 to vector<8x1xf32>
    %247 = arith.addf %243, %246 : vector<8x1xf32>
    %248 = math.rsqrt %247 : vector<8x1xf32>
    %249 = vector.broadcast %248 : vector<8x1xf32> to vector<8x32xf32>
    %250 = arith.mulf %245, %249 : vector<8x32xf32>
    %251 = vector.broadcast %231 : vector<1x32xf32> to vector<8x32xf32>
    %252 = arith.mulf %250, %251 : vector<8x32xf32>
    %253 = vector.broadcast %232 : vector<1x32xf32> to vector<8x32xf32>
    %254 = arith.addf %252, %253 : vector<8x32xf32>
    %c1 = arith.constant 1 : index
    %c0_97 = arith.constant 0 : index
    %c0_98 = arith.constant 0 : index
    %255 = vector.load %arg8[%c1, %c0_97, %c0_98] : memref<2x6x32xf32, #tpu.memory_space<vmem>>, vector<1x6x32xf32>
    %256 = vector.shape_cast %255 : vector<1x6x32xf32> to vector<6x32xf32>
    %c1_99 = arith.constant 1 : index
    %c0_100 = arith.constant 0 : index
    %c0_101 = arith.constant 0 : index
    %257 = vector.load %arg3[%c1_99, %c0_100, %c0_101] : memref<2x32x96xf32, #tpu.memory_space<vmem>>, vector<1x32x96xf32>
    %258 = vector.shape_cast %257 : vector<1x32x96xf32> to vector<32x96xf32>
    %cst_102 = arith.constant dense<0.000000e+00> : vector<8x96xf32>
    %259 = tpu.matmul %254, %258, %cst_102 {dimension_numbers = #tpu.dot_dimension_numbers<[1], [0], [0], [1], [0, 0, 1, 1], [], []>} : vector<8x32xf32>, vector<32x96xf32>, vector<8x96xf32> -> vector<8x96xf32>
    %260 = vector.extract_strided_slice %259 {offsets = [0, 0], sizes = [8, 32], strides = [1, 1]} : vector<8x96xf32> to vector<8x32xf32>
    %261 = vector.extract_strided_slice %259 {offsets = [0, 32], sizes = [8, 32], strides = [1, 1]} : vector<8x96xf32> to vector<8x32xf32>
    %262 = vector.extract_strided_slice %259 {offsets = [0, 64], sizes = [8, 32], strides = [1, 1]} : vector<8x96xf32> to vector<8x32xf32>
    %c1_103 = arith.constant 1 : index
    %c0_104 = arith.constant 0 : index
    %c0_105 = arith.constant 0 : index
    %263 = vector.load %arg4[%c1_103, %c0_104, %c0_105] : memref<2x32x32xf32, #tpu.memory_space<vmem>>, vector<1x32x32xf32>
    %264 = vector.shape_cast %263 : vector<1x32x32xf32> to vector<32x32xf32>
    %265 = vector.extract_strided_slice %260 {offsets = [0, 0], sizes = [8, 8], strides = [1, 1]} : vector<8x32xf32> to vector<8x8xf32>
    %266 = vector.extract_strided_slice %261 {offsets = [0, 0], sizes = [8, 8], strides = [1, 1]} : vector<8x32xf32> to vector<8x8xf32>
    %267 = vector.extract_strided_slice %262 {offsets = [0, 0], sizes = [8, 8], strides = [1, 1]} : vector<8x32xf32> to vector<8x8xf32>
    %cst_106 = arith.constant dense<0.000000e+00> : vector<8x8xf32>
    %268 = tpu.matmul %265, %266, %cst_106 {dimension_numbers = #tpu.dot_dimension_numbers<[1], [1], [0], [0], [0, 0, 1, 0], [], []>} : vector<8x8xf32>, vector<8x8xf32>, vector<8x8xf32> -> vector<8x8xf32>
    %cst_107 = arith.constant 0.176776692 : f32
    %269 = vector.broadcast %cst_107 : f32 to vector<8x8xf32>
    %270 = arith.mulf %268, %269 : vector<8x8xf32>
    %cst_108 = arith.constant dense<0xFF800000> : vector<8xf32>
    %271 = vector.multi_reduction <maximumf>, %270, %cst_108 [1] : vector<8x8xf32> to vector<8xf32>
    %272 = vector.shape_cast %271 : vector<8xf32> to vector<8x1xf32>
    %273 = vector.broadcast %272 : vector<8x1xf32> to vector<8x8xf32>
    %274 = arith.subf %270, %273 : vector<8x8xf32>
    %275 = math.exp %274 : vector<8x8xf32>
    %cst_109 = arith.constant dense<0.000000e+00> : vector<8xf32>
    %276 = vector.multi_reduction <add>, %275, %cst_109 [1] : vector<8x8xf32> to vector<8xf32>
    %277 = vector.shape_cast %276 : vector<8xf32> to vector<8x1xf32>
    %278 = tpu.reciprocal %277 {approx = true} : vector<8x1xf32> -> vector<8x1xf32>
    %279 = vector.broadcast %278 : vector<8x1xf32> to vector<8x8xf32>
    %280 = arith.mulf %275, %279 : vector<8x8xf32>
    %cst_110 = arith.constant dense<0.000000e+00> : vector<8x8xf32>
    %281 = tpu.matmul %280, %267, %cst_110 {dimension_numbers = #tpu.dot_dimension_numbers<[1], [0], [0], [1], [0, 0, 1, 1], [], []>} : vector<8x8xf32>, vector<8x8xf32>, vector<8x8xf32> -> vector<8x8xf32>
    %282 = vector.extract_strided_slice %260 {offsets = [0, 8], sizes = [8, 8], strides = [1, 1]} : vector<8x32xf32> to vector<8x8xf32>
    %283 = vector.extract_strided_slice %261 {offsets = [0, 8], sizes = [8, 8], strides = [1, 1]} : vector<8x32xf32> to vector<8x8xf32>
    %284 = vector.extract_strided_slice %262 {offsets = [0, 8], sizes = [8, 8], strides = [1, 1]} : vector<8x32xf32> to vector<8x8xf32>
    %cst_111 = arith.constant dense<0.000000e+00> : vector<8x8xf32>
    %285 = tpu.matmul %282, %283, %cst_111 {dimension_numbers = #tpu.dot_dimension_numbers<[1], [1], [0], [0], [0, 0, 1, 0], [], []>} : vector<8x8xf32>, vector<8x8xf32>, vector<8x8xf32> -> vector<8x8xf32>
    %cst_112 = arith.constant 0.176776692 : f32
    %286 = vector.broadcast %cst_112 : f32 to vector<8x8xf32>
    %287 = arith.mulf %285, %286 : vector<8x8xf32>
    %cst_113 = arith.constant dense<0xFF800000> : vector<8xf32>
    %288 = vector.multi_reduction <maximumf>, %287, %cst_113 [1] : vector<8x8xf32> to vector<8xf32>
    %289 = vector.shape_cast %288 : vector<8xf32> to vector<8x1xf32>
    %290 = vector.broadcast %289 : vector<8x1xf32> to vector<8x8xf32>
    %291 = arith.subf %287, %290 : vector<8x8xf32>
    %292 = math.exp %291 : vector<8x8xf32>
    %cst_114 = arith.constant dense<0.000000e+00> : vector<8xf32>
    %293 = vector.multi_reduction <add>, %292, %cst_114 [1] : vector<8x8xf32> to vector<8xf32>
    %294 = vector.shape_cast %293 : vector<8xf32> to vector<8x1xf32>
    %295 = tpu.reciprocal %294 {approx = true} : vector<8x1xf32> -> vector<8x1xf32>
    %296 = vector.broadcast %295 : vector<8x1xf32> to vector<8x8xf32>
    %297 = arith.mulf %292, %296 : vector<8x8xf32>
    %cst_115 = arith.constant dense<0.000000e+00> : vector<8x8xf32>
    %298 = tpu.matmul %297, %284, %cst_115 {dimension_numbers = #tpu.dot_dimension_numbers<[1], [0], [0], [1], [0, 0, 1, 1], [], []>} : vector<8x8xf32>, vector<8x8xf32>, vector<8x8xf32> -> vector<8x8xf32>
    %299 = vector.extract_strided_slice %260 {offsets = [0, 16], sizes = [8, 8], strides = [1, 1]} : vector<8x32xf32> to vector<8x8xf32>
    %300 = vector.extract_strided_slice %261 {offsets = [0, 16], sizes = [8, 8], strides = [1, 1]} : vector<8x32xf32> to vector<8x8xf32>
    %301 = vector.extract_strided_slice %262 {offsets = [0, 16], sizes = [8, 8], strides = [1, 1]} : vector<8x32xf32> to vector<8x8xf32>
    %cst_116 = arith.constant dense<0.000000e+00> : vector<8x8xf32>
    %302 = tpu.matmul %299, %300, %cst_116 {dimension_numbers = #tpu.dot_dimension_numbers<[1], [1], [0], [0], [0, 0, 1, 0], [], []>} : vector<8x8xf32>, vector<8x8xf32>, vector<8x8xf32> -> vector<8x8xf32>
    %cst_117 = arith.constant 0.176776692 : f32
    %303 = vector.broadcast %cst_117 : f32 to vector<8x8xf32>
    %304 = arith.mulf %302, %303 : vector<8x8xf32>
    %cst_118 = arith.constant dense<0xFF800000> : vector<8xf32>
    %305 = vector.multi_reduction <maximumf>, %304, %cst_118 [1] : vector<8x8xf32> to vector<8xf32>
    %306 = vector.shape_cast %305 : vector<8xf32> to vector<8x1xf32>
    %307 = vector.broadcast %306 : vector<8x1xf32> to vector<8x8xf32>
    %308 = arith.subf %304, %307 : vector<8x8xf32>
    %309 = math.exp %308 : vector<8x8xf32>
    %cst_119 = arith.constant dense<0.000000e+00> : vector<8xf32>
    %310 = vector.multi_reduction <add>, %309, %cst_119 [1] : vector<8x8xf32> to vector<8xf32>
    %311 = vector.shape_cast %310 : vector<8xf32> to vector<8x1xf32>
    %312 = tpu.reciprocal %311 {approx = true} : vector<8x1xf32> -> vector<8x1xf32>
    %313 = vector.broadcast %312 : vector<8x1xf32> to vector<8x8xf32>
    %314 = arith.mulf %309, %313 : vector<8x8xf32>
    %cst_120 = arith.constant dense<0.000000e+00> : vector<8x8xf32>
    %315 = tpu.matmul %314, %301, %cst_120 {dimension_numbers = #tpu.dot_dimension_numbers<[1], [0], [0], [1], [0, 0, 1, 1], [], []>} : vector<8x8xf32>, vector<8x8xf32>, vector<8x8xf32> -> vector<8x8xf32>
    %316 = vector.extract_strided_slice %260 {offsets = [0, 24], sizes = [8, 8], strides = [1, 1]} : vector<8x32xf32> to vector<8x8xf32>
    %317 = vector.extract_strided_slice %261 {offsets = [0, 24], sizes = [8, 8], strides = [1, 1]} : vector<8x32xf32> to vector<8x8xf32>
    %318 = vector.extract_strided_slice %262 {offsets = [0, 24], sizes = [8, 8], strides = [1, 1]} : vector<8x32xf32> to vector<8x8xf32>
    %cst_121 = arith.constant dense<0.000000e+00> : vector<8x8xf32>
    %319 = tpu.matmul %316, %317, %cst_121 {dimension_numbers = #tpu.dot_dimension_numbers<[1], [1], [0], [0], [0, 0, 1, 0], [], []>} : vector<8x8xf32>, vector<8x8xf32>, vector<8x8xf32> -> vector<8x8xf32>
    %cst_122 = arith.constant 0.176776692 : f32
    %320 = vector.broadcast %cst_122 : f32 to vector<8x8xf32>
    %321 = arith.mulf %319, %320 : vector<8x8xf32>
    %cst_123 = arith.constant dense<0xFF800000> : vector<8xf32>
    %322 = vector.multi_reduction <maximumf>, %321, %cst_123 [1] : vector<8x8xf32> to vector<8xf32>
    %323 = vector.shape_cast %322 : vector<8xf32> to vector<8x1xf32>
    %324 = vector.broadcast %323 : vector<8x1xf32> to vector<8x8xf32>
    %325 = arith.subf %321, %324 : vector<8x8xf32>
    %326 = math.exp %325 : vector<8x8xf32>
    %cst_124 = arith.constant dense<0.000000e+00> : vector<8xf32>
    %327 = vector.multi_reduction <add>, %326, %cst_124 [1] : vector<8x8xf32> to vector<8xf32>
    %328 = vector.shape_cast %327 : vector<8xf32> to vector<8x1xf32>
    %329 = tpu.reciprocal %328 {approx = true} : vector<8x1xf32> -> vector<8x1xf32>
    %330 = vector.broadcast %329 : vector<8x1xf32> to vector<8x8xf32>
    %331 = arith.mulf %326, %330 : vector<8x8xf32>
    %cst_125 = arith.constant dense<0.000000e+00> : vector<8x8xf32>
    %332 = tpu.matmul %331, %318, %cst_125 {dimension_numbers = #tpu.dot_dimension_numbers<[1], [0], [0], [1], [0, 0, 1, 1], [], []>} : vector<8x8xf32>, vector<8x8xf32>, vector<8x8xf32> -> vector<8x8xf32>
    %333 = tpu.concatenate %281, %298, %315, %332 in 1 : vector<8x8xf32>, vector<8x8xf32>, vector<8x8xf32>, vector<8x8xf32> -> vector<8x32xf32>
    %cst_126 = arith.constant dense<0.000000e+00> : vector<8x32xf32>
    %334 = tpu.matmul %333, %264, %cst_126 {dimension_numbers = #tpu.dot_dimension_numbers<[1], [0], [0], [1], [0, 0, 1, 1], [], []>} : vector<8x32xf32>, vector<32x32xf32>, vector<8x32xf32> -> vector<8x32xf32>
    %335 = arith.addf %334, %254 : vector<8x32xf32>
    %336 = vector.extract_strided_slice %256 {offsets = [0, 0], sizes = [1, 32], strides = [1, 1]} : vector<6x32xf32> to vector<1x32xf32>
    %337 = vector.extract_strided_slice %256 {offsets = [1, 0], sizes = [1, 32], strides = [1, 1]} : vector<6x32xf32> to vector<1x32xf32>
    %cst_127 = arith.constant dense<0.000000e+00> : vector<8xf32>
    %338 = vector.multi_reduction <add>, %335, %cst_127 [1] : vector<8x32xf32> to vector<8xf32>
    %339 = vector.shape_cast %338 : vector<8xf32> to vector<8x1xf32>
    %cst_128 = arith.constant 3.200000e+01 : f32
    %340 = vector.broadcast %cst_128 : f32 to vector<8x1xf32>
    %341 = arith.divf %339, %340 : vector<8x1xf32>
    %342 = vector.broadcast %341 : vector<8x1xf32> to vector<8x32xf32>
    %343 = arith.subf %335, %342 : vector<8x32xf32>
    %344 = arith.mulf %343, %343 : vector<8x32xf32>
    %cst_129 = arith.constant dense<0.000000e+00> : vector<8xf32>
    %345 = vector.multi_reduction <add>, %344, %cst_129 [1] : vector<8x32xf32> to vector<8xf32>
    %346 = vector.shape_cast %345 : vector<8xf32> to vector<8x1xf32>
    %cst_130 = arith.constant 3.200000e+01 : f32
    %347 = vector.broadcast %cst_130 : f32 to vector<8x1xf32>
    %348 = arith.divf %346, %347 : vector<8x1xf32>
    %349 = vector.broadcast %341 : vector<8x1xf32> to vector<8x32xf32>
    %350 = arith.subf %335, %349 : vector<8x32xf32>
    %cst_131 = arith.constant 9.99999974E-6 : f32
    %351 = vector.broadcast %cst_131 : f32 to vector<8x1xf32>
    %352 = arith.addf %348, %351 : vector<8x1xf32>
    %353 = math.rsqrt %352 : vector<8x1xf32>
    %354 = vector.broadcast %353 : vector<8x1xf32> to vector<8x32xf32>
    %355 = arith.mulf %350, %354 : vector<8x32xf32>
    %356 = vector.broadcast %336 : vector<1x32xf32> to vector<8x32xf32>
    %357 = arith.mulf %355, %356 : vector<8x32xf32>
    %358 = vector.broadcast %337 : vector<1x32xf32> to vector<8x32xf32>
    %359 = arith.addf %357, %358 : vector<8x32xf32>
    %c1_132 = arith.constant 1 : index
    %c0_133 = arith.constant 0 : index
    %c0_134 = arith.constant 0 : index
    %360 = vector.load %arg5[%c1_132, %c0_133, %c0_134] : memref<2x32x32xf32, #tpu.memory_space<vmem>>, vector<1x32x32xf32>
    %361 = vector.shape_cast %360 : vector<1x32x32xf32> to vector<32x32xf32>
    %cst_135 = arith.constant dense<0.000000e+00> : vector<8x32xf32>
    %362 = tpu.matmul %359, %361, %cst_135 {dimension_numbers = #tpu.dot_dimension_numbers<[1], [0], [0], [1], [0, 0, 1, 1], [], []>} : vector<8x32xf32>, vector<32x32xf32>, vector<8x32xf32> -> vector<8x32xf32>
    %c1_136 = arith.constant 1 : index
    %c0_137 = arith.constant 0 : index
    %c0_138 = arith.constant 0 : index
    %363 = vector.load %arg6[%c1_136, %c0_137, %c0_138] : memref<2x32x64xf32, #tpu.memory_space<vmem>>, vector<1x32x64xf32>
    %364 = vector.shape_cast %363 : vector<1x32x64xf32> to vector<32x64xf32>
    %cst_139 = arith.constant dense<0.000000e+00> : vector<8x64xf32>
    %365 = tpu.matmul %3, %364, %cst_139 {dimension_numbers = #tpu.dot_dimension_numbers<[1], [0], [0], [1], [0, 0, 1, 1], [], []>} : vector<8x32xf32>, vector<32x64xf32>, vector<8x64xf32> -> vector<8x64xf32>
    %366 = vector.extract_strided_slice %365 {offsets = [0, 0], sizes = [8, 32], strides = [1, 1]} : vector<8x64xf32> to vector<8x32xf32>
    %367 = vector.extract_strided_slice %365 {offsets = [0, 32], sizes = [8, 32], strides = [1, 1]} : vector<8x64xf32> to vector<8x32xf32>
    %c1_140 = arith.constant 1 : index
    %c0_141 = arith.constant 0 : index
    %c0_142 = arith.constant 0 : index
    %368 = vector.load %arg7[%c1_140, %c0_141, %c0_142] : memref<2x32x32xf32, #tpu.memory_space<vmem>>, vector<1x32x32xf32>
    %369 = vector.shape_cast %368 : vector<1x32x32xf32> to vector<32x32xf32>
    %370 = vector.extract_strided_slice %362 {offsets = [0, 0], sizes = [8, 8], strides = [1, 1]} : vector<8x32xf32> to vector<8x8xf32>
    %371 = vector.extract_strided_slice %366 {offsets = [0, 0], sizes = [8, 8], strides = [1, 1]} : vector<8x32xf32> to vector<8x8xf32>
    %372 = vector.extract_strided_slice %367 {offsets = [0, 0], sizes = [8, 8], strides = [1, 1]} : vector<8x32xf32> to vector<8x8xf32>
    %cst_143 = arith.constant dense<0.000000e+00> : vector<8x8xf32>
    %373 = tpu.matmul %370, %371, %cst_143 {dimension_numbers = #tpu.dot_dimension_numbers<[1], [1], [0], [0], [0, 0, 1, 0], [], []>} : vector<8x8xf32>, vector<8x8xf32>, vector<8x8xf32> -> vector<8x8xf32>
    %cst_144 = arith.constant 0.176776692 : f32
    %374 = vector.broadcast %cst_144 : f32 to vector<8x8xf32>
    %375 = arith.mulf %373, %374 : vector<8x8xf32>
    %cst_145 = arith.constant dense<0xFF800000> : vector<8xf32>
    %376 = vector.multi_reduction <maximumf>, %375, %cst_145 [1] : vector<8x8xf32> to vector<8xf32>
    %377 = vector.shape_cast %376 : vector<8xf32> to vector<8x1xf32>
    %378 = vector.broadcast %377 : vector<8x1xf32> to vector<8x8xf32>
    %379 = arith.subf %375, %378 : vector<8x8xf32>
    %380 = math.exp %379 : vector<8x8xf32>
    %cst_146 = arith.constant dense<0.000000e+00> : vector<8xf32>
    %381 = vector.multi_reduction <add>, %380, %cst_146 [1] : vector<8x8xf32> to vector<8xf32>
    %382 = vector.shape_cast %381 : vector<8xf32> to vector<8x1xf32>
    %383 = tpu.reciprocal %382 {approx = true} : vector<8x1xf32> -> vector<8x1xf32>
    %384 = vector.broadcast %383 : vector<8x1xf32> to vector<8x8xf32>
    %385 = arith.mulf %380, %384 : vector<8x8xf32>
    %cst_147 = arith.constant dense<0.000000e+00> : vector<8x8xf32>
    %386 = tpu.matmul %385, %372, %cst_147 {dimension_numbers = #tpu.dot_dimension_numbers<[1], [0], [0], [1], [0, 0, 1, 1], [], []>} : vector<8x8xf32>, vector<8x8xf32>, vector<8x8xf32> -> vector<8x8xf32>
    %387 = vector.extract_strided_slice %362 {offsets = [0, 8], sizes = [8, 8], strides = [1, 1]} : vector<8x32xf32> to vector<8x8xf32>
    %388 = vector.extract_strided_slice %366 {offsets = [0, 8], sizes = [8, 8], strides = [1, 1]} : vector<8x32xf32> to vector<8x8xf32>
    %389 = vector.extract_strided_slice %367 {offsets = [0, 8], sizes = [8, 8], strides = [1, 1]} : vector<8x32xf32> to vector<8x8xf32>
    %cst_148 = arith.constant dense<0.000000e+00> : vector<8x8xf32>
    %390 = tpu.matmul %387, %388, %cst_148 {dimension_numbers = #tpu.dot_dimension_numbers<[1], [1], [0], [0], [0, 0, 1, 0], [], []>} : vector<8x8xf32>, vector<8x8xf32>, vector<8x8xf32> -> vector<8x8xf32>
    %cst_149 = arith.constant 0.176776692 : f32
    %391 = vector.broadcast %cst_149 : f32 to vector<8x8xf32>
    %392 = arith.mulf %390, %391 : vector<8x8xf32>
    %cst_150 = arith.constant dense<0xFF800000> : vector<8xf32>
    %393 = vector.multi_reduction <maximumf>, %392, %cst_150 [1] : vector<8x8xf32> to vector<8xf32>
    %394 = vector.shape_cast %393 : vector<8xf32> to vector<8x1xf32>
    %395 = vector.broadcast %394 : vector<8x1xf32> to vector<8x8xf32>
    %396 = arith.subf %392, %395 : vector<8x8xf32>
    %397 = math.exp %396 : vector<8x8xf32>
    %cst_151 = arith.constant dense<0.000000e+00> : vector<8xf32>
    %398 = vector.multi_reduction <add>, %397, %cst_151 [1] : vector<8x8xf32> to vector<8xf32>
    %399 = vector.shape_cast %398 : vector<8xf32> to vector<8x1xf32>
    %400 = tpu.reciprocal %399 {approx = true} : vector<8x1xf32> -> vector<8x1xf32>
    %401 = vector.broadcast %400 : vector<8x1xf32> to vector<8x8xf32>
    %402 = arith.mulf %397, %401 : vector<8x8xf32>
    %cst_152 = arith.constant dense<0.000000e+00> : vector<8x8xf32>
    %403 = tpu.matmul %402, %389, %cst_152 {dimension_numbers = #tpu.dot_dimension_numbers<[1], [0], [0], [1], [0, 0, 1, 1], [], []>} : vector<8x8xf32>, vector<8x8xf32>, vector<8x8xf32> -> vector<8x8xf32>
    %404 = vector.extract_strided_slice %362 {offsets = [0, 16], sizes = [8, 8], strides = [1, 1]} : vector<8x32xf32> to vector<8x8xf32>
    %405 = vector.extract_strided_slice %366 {offsets = [0, 16], sizes = [8, 8], strides = [1, 1]} : vector<8x32xf32> to vector<8x8xf32>
    %406 = vector.extract_strided_slice %367 {offsets = [0, 16], sizes = [8, 8], strides = [1, 1]} : vector<8x32xf32> to vector<8x8xf32>
    %cst_153 = arith.constant dense<0.000000e+00> : vector<8x8xf32>
    %407 = tpu.matmul %404, %405, %cst_153 {dimension_numbers = #tpu.dot_dimension_numbers<[1], [1], [0], [0], [0, 0, 1, 0], [], []>} : vector<8x8xf32>, vector<8x8xf32>, vector<8x8xf32> -> vector<8x8xf32>
    %cst_154 = arith.constant 0.176776692 : f32
    %408 = vector.broadcast %cst_154 : f32 to vector<8x8xf32>
    %409 = arith.mulf %407, %408 : vector<8x8xf32>
    %cst_155 = arith.constant dense<0xFF800000> : vector<8xf32>
    %410 = vector.multi_reduction <maximumf>, %409, %cst_155 [1] : vector<8x8xf32> to vector<8xf32>
    %411 = vector.shape_cast %410 : vector<8xf32> to vector<8x1xf32>
    %412 = vector.broadcast %411 : vector<8x1xf32> to vector<8x8xf32>
    %413 = arith.subf %409, %412 : vector<8x8xf32>
    %414 = math.exp %413 : vector<8x8xf32>
    %cst_156 = arith.constant dense<0.000000e+00> : vector<8xf32>
    %415 = vector.multi_reduction <add>, %414, %cst_156 [1] : vector<8x8xf32> to vector<8xf32>
    %416 = vector.shape_cast %415 : vector<8xf32> to vector<8x1xf32>
    %417 = tpu.reciprocal %416 {approx = true} : vector<8x1xf32> -> vector<8x1xf32>
    %418 = vector.broadcast %417 : vector<8x1xf32> to vector<8x8xf32>
    %419 = arith.mulf %414, %418 : vector<8x8xf32>
    %cst_157 = arith.constant dense<0.000000e+00> : vector<8x8xf32>
    %420 = tpu.matmul %419, %406, %cst_157 {dimension_numbers = #tpu.dot_dimension_numbers<[1], [0], [0], [1], [0, 0, 1, 1], [], []>} : vector<8x8xf32>, vector<8x8xf32>, vector<8x8xf32> -> vector<8x8xf32>
    %421 = vector.extract_strided_slice %362 {offsets = [0, 24], sizes = [8, 8], strides = [1, 1]} : vector<8x32xf32> to vector<8x8xf32>
    %422 = vector.extract_strided_slice %366 {offsets = [0, 24], sizes = [8, 8], strides = [1, 1]} : vector<8x32xf32> to vector<8x8xf32>
    %423 = vector.extract_strided_slice %367 {offsets = [0, 24], sizes = [8, 8], strides = [1, 1]} : vector<8x32xf32> to vector<8x8xf32>
    %cst_158 = arith.constant dense<0.000000e+00> : vector<8x8xf32>
    %424 = tpu.matmul %421, %422, %cst_158 {dimension_numbers = #tpu.dot_dimension_numbers<[1], [1], [0], [0], [0, 0, 1, 0], [], []>} : vector<8x8xf32>, vector<8x8xf32>, vector<8x8xf32> -> vector<8x8xf32>
    %cst_159 = arith.constant 0.176776692 : f32
    %425 = vector.broadcast %cst_159 : f32 to vector<8x8xf32>
    %426 = arith.mulf %424, %425 : vector<8x8xf32>
    %cst_160 = arith.constant dense<0xFF800000> : vector<8xf32>
    %427 = vector.multi_reduction <maximumf>, %426, %cst_160 [1] : vector<8x8xf32> to vector<8xf32>
    %428 = vector.shape_cast %427 : vector<8xf32> to vector<8x1xf32>
    %429 = vector.broadcast %428 : vector<8x1xf32> to vector<8x8xf32>
    %430 = arith.subf %426, %429 : vector<8x8xf32>
    %431 = math.exp %430 : vector<8x8xf32>
    %cst_161 = arith.constant dense<0.000000e+00> : vector<8xf32>
    %432 = vector.multi_reduction <add>, %431, %cst_161 [1] : vector<8x8xf32> to vector<8xf32>
    %433 = vector.shape_cast %432 : vector<8xf32> to vector<8x1xf32>
    %434 = tpu.reciprocal %433 {approx = true} : vector<8x1xf32> -> vector<8x1xf32>
    %435 = vector.broadcast %434 : vector<8x1xf32> to vector<8x8xf32>
    %436 = arith.mulf %431, %435 : vector<8x8xf32>
    %cst_162 = arith.constant dense<0.000000e+00> : vector<8x8xf32>
    %437 = tpu.matmul %436, %423, %cst_162 {dimension_numbers = #tpu.dot_dimension_numbers<[1], [0], [0], [1], [0, 0, 1, 1], [], []>} : vector<8x8xf32>, vector<8x8xf32>, vector<8x8xf32> -> vector<8x8xf32>
    %438 = tpu.concatenate %386, %403, %420, %437 in 1 : vector<8x8xf32>, vector<8x8xf32>, vector<8x8xf32>, vector<8x8xf32> -> vector<8x32xf32>
    %cst_163 = arith.constant dense<0.000000e+00> : vector<8x32xf32>
    %439 = tpu.matmul %438, %369, %cst_163 {dimension_numbers = #tpu.dot_dimension_numbers<[1], [0], [0], [1], [0, 0, 1, 1], [], []>} : vector<8x32xf32>, vector<32x32xf32>, vector<8x32xf32> -> vector<8x32xf32>
    %440 = arith.addf %359, %439 : vector<8x32xf32>
    %441 = vector.extract_strided_slice %256 {offsets = [2, 0], sizes = [1, 32], strides = [1, 1]} : vector<6x32xf32> to vector<1x32xf32>
    %442 = vector.extract_strided_slice %256 {offsets = [3, 0], sizes = [1, 32], strides = [1, 1]} : vector<6x32xf32> to vector<1x32xf32>
    %cst_164 = arith.constant dense<0.000000e+00> : vector<8xf32>
    %443 = vector.multi_reduction <add>, %440, %cst_164 [1] : vector<8x32xf32> to vector<8xf32>
    %444 = vector.shape_cast %443 : vector<8xf32> to vector<8x1xf32>
    %cst_165 = arith.constant 3.200000e+01 : f32
    %445 = vector.broadcast %cst_165 : f32 to vector<8x1xf32>
    %446 = arith.divf %444, %445 : vector<8x1xf32>
    %447 = vector.broadcast %446 : vector<8x1xf32> to vector<8x32xf32>
    %448 = arith.subf %440, %447 : vector<8x32xf32>
    %449 = arith.mulf %448, %448 : vector<8x32xf32>
    %cst_166 = arith.constant dense<0.000000e+00> : vector<8xf32>
    %450 = vector.multi_reduction <add>, %449, %cst_166 [1] : vector<8x32xf32> to vector<8xf32>
    %451 = vector.shape_cast %450 : vector<8xf32> to vector<8x1xf32>
    %cst_167 = arith.constant 3.200000e+01 : f32
    %452 = vector.broadcast %cst_167 : f32 to vector<8x1xf32>
    %453 = arith.divf %451, %452 : vector<8x1xf32>
    %454 = vector.broadcast %446 : vector<8x1xf32> to vector<8x32xf32>
    %455 = arith.subf %440, %454 : vector<8x32xf32>
    %cst_168 = arith.constant 9.99999974E-6 : f32
    %456 = vector.broadcast %cst_168 : f32 to vector<8x1xf32>
    %457 = arith.addf %453, %456 : vector<8x1xf32>
    %458 = math.rsqrt %457 : vector<8x1xf32>
    %459 = vector.broadcast %458 : vector<8x1xf32> to vector<8x32xf32>
    %460 = arith.mulf %455, %459 : vector<8x32xf32>
    %461 = vector.broadcast %441 : vector<1x32xf32> to vector<8x32xf32>
    %462 = arith.mulf %460, %461 : vector<8x32xf32>
    %463 = vector.broadcast %442 : vector<1x32xf32> to vector<8x32xf32>
    %464 = arith.addf %462, %463 : vector<8x32xf32>
    %c1_169 = arith.constant 1 : index
    %c0_170 = arith.constant 0 : index
    %c0_171 = arith.constant 0 : index
    %465 = vector.load %arg9[%c1_169, %c0_170, %c0_171] : memref<2x32x64xf32, #tpu.memory_space<vmem>>, vector<1x32x64xf32>
    %466 = vector.shape_cast %465 : vector<1x32x64xf32> to vector<32x64xf32>
    %cst_172 = arith.constant dense<0.000000e+00> : vector<8x64xf32>
    %467 = tpu.matmul %464, %466, %cst_172 {dimension_numbers = #tpu.dot_dimension_numbers<[1], [0], [0], [1], [0, 0, 1, 1], [], []>} : vector<8x32xf32>, vector<32x64xf32>, vector<8x64xf32> -> vector<8x64xf32>
    %c1_173 = arith.constant 1 : index
    %c0_174 = arith.constant 0 : index
    %c0_175 = arith.constant 0 : index
    %468 = vector.load %arg10[%c1_173, %c0_174, %c0_175] : memref<2x1x64xf32, #tpu.memory_space<vmem>>, vector<1x1x64xf32>
    %469 = vector.shape_cast %468 : vector<1x1x64xf32> to vector<1x64xf32>
    %470 = vector.broadcast %469 : vector<1x64xf32> to vector<8x64xf32>
    %471 = arith.addf %467, %470 : vector<8x64xf32>
    %cst_176 = arith.constant 0.000000e+00 : f32
    %472 = vector.broadcast %cst_176 : f32 to vector<8x64xf32>
    %473 = arith.maximumf %471, %472 : vector<8x64xf32>
    %c1_177 = arith.constant 1 : index
    %c0_178 = arith.constant 0 : index
    %c0_179 = arith.constant 0 : index
    %474 = vector.load %arg11[%c1_177, %c0_178, %c0_179] : memref<2x64x32xf32, #tpu.memory_space<vmem>>, vector<1x64x32xf32>
    %475 = vector.shape_cast %474 : vector<1x64x32xf32> to vector<64x32xf32>
    %cst_180 = arith.constant dense<0.000000e+00> : vector<8x32xf32>
    %476 = tpu.matmul %473, %475, %cst_180 {dimension_numbers = #tpu.dot_dimension_numbers<[1], [0], [0], [1], [0, 0, 1, 1], [], []>} : vector<8x64xf32>, vector<64x32xf32>, vector<8x32xf32> -> vector<8x32xf32>
    %c1_181 = arith.constant 1 : index
    %c0_182 = arith.constant 0 : index
    %c0_183 = arith.constant 0 : index
    %477 = vector.load %arg12[%c1_181, %c0_182, %c0_183] : memref<2x1x32xf32, #tpu.memory_space<vmem>>, vector<1x1x32xf32>
    %478 = vector.shape_cast %477 : vector<1x1x32xf32> to vector<1x32xf32>
    %479 = vector.broadcast %478 : vector<1x32xf32> to vector<8x32xf32>
    %480 = arith.addf %476, %479 : vector<8x32xf32>
    %481 = arith.addf %480, %464 : vector<8x32xf32>
    %482 = vector.extract_strided_slice %256 {offsets = [4, 0], sizes = [1, 32], strides = [1, 1]} : vector<6x32xf32> to vector<1x32xf32>
    %483 = vector.extract_strided_slice %256 {offsets = [5, 0], sizes = [1, 32], strides = [1, 1]} : vector<6x32xf32> to vector<1x32xf32>
    %cst_184 = arith.constant dense<0.000000e+00> : vector<8xf32>
    %484 = vector.multi_reduction <add>, %481, %cst_184 [1] : vector<8x32xf32> to vector<8xf32>
    %485 = vector.shape_cast %484 : vector<8xf32> to vector<8x1xf32>
    %cst_185 = arith.constant 3.200000e+01 : f32
    %486 = vector.broadcast %cst_185 : f32 to vector<8x1xf32>
    %487 = arith.divf %485, %486 : vector<8x1xf32>
    %488 = vector.broadcast %487 : vector<8x1xf32> to vector<8x32xf32>
    %489 = arith.subf %481, %488 : vector<8x32xf32>
    %490 = arith.mulf %489, %489 : vector<8x32xf32>
    %cst_186 = arith.constant dense<0.000000e+00> : vector<8xf32>
    %491 = vector.multi_reduction <add>, %490, %cst_186 [1] : vector<8x32xf32> to vector<8xf32>
    %492 = vector.shape_cast %491 : vector<8xf32> to vector<8x1xf32>
    %cst_187 = arith.constant 3.200000e+01 : f32
    %493 = vector.broadcast %cst_187 : f32 to vector<8x1xf32>
    %494 = arith.divf %492, %493 : vector<8x1xf32>
    %495 = vector.broadcast %487 : vector<8x1xf32> to vector<8x32xf32>
    %496 = arith.subf %481, %495 : vector<8x32xf32>
    %cst_188 = arith.constant 9.99999974E-6 : f32
    %497 = vector.broadcast %cst_188 : f32 to vector<8x1xf32>
    %498 = arith.addf %494, %497 : vector<8x1xf32>
    %499 = math.rsqrt %498 : vector<8x1xf32>
    %500 = vector.broadcast %499 : vector<8x1xf32> to vector<8x32xf32>
    %501 = arith.mulf %496, %500 : vector<8x32xf32>
    %502 = vector.broadcast %482 : vector<1x32xf32> to vector<8x32xf32>
    %503 = arith.mulf %501, %502 : vector<8x32xf32>
    %504 = vector.broadcast %483 : vector<1x32xf32> to vector<8x32xf32>
    %505 = arith.addf %503, %504 : vector<8x32xf32>
    %c0_189 = arith.constant 0 : index
    %c0_190 = arith.constant 0 : index
    %506 = vector.load %arg13[%c0_189, %c0_190] : memref<32x128xf32, #tpu.memory_space<vmem>>, vector<32x128xf32>
    %cst_191 = arith.constant dense<0.000000e+00> : vector<8x128xf32>
    %507 = tpu.matmul %505, %506, %cst_191 {dimension_numbers = #tpu.dot_dimension_numbers<[1], [0], [0], [1], [0, 0, 1, 1], [], []>} : vector<8x32xf32>, vector<32x128xf32>, vector<8x128xf32> -> vector<8x128xf32>
    %c0_192 = arith.constant 0 : index
    %c0_193 = arith.constant 0 : index
    %508 = vector.load %arg14[%c0_192, %c0_193] : memref<1x128xf32, #tpu.memory_space<vmem>>, vector<1x128xf32>
    %509 = vector.broadcast %508 : vector<1x128xf32> to vector<8x128xf32>
    %510 = arith.addf %507, %509 : vector<8x128xf32>
    %c0_194 = arith.constant 0 : index
    %c0_195 = arith.constant 0 : index
    %c0_196 = arith.constant 0 : index
    %511 = vector.load %arg15[%c0_194, %c0_195, %c0_196] : memref<1x8x128xf32, #tpu.memory_space<vmem>>, vector<1x8x128xf32>
    %512 = vector.shape_cast %511 : vector<1x8x128xf32> to vector<8x128xf32>
    %513 = vector.shape_cast %510 : vector<8x128xf32> to vector<1x8x128xf32>
    tpu.vector_store %arg15[%c0_194, %c0_195, %c0_196], %513 {strides = array<i32>} : memref<1x8x128xf32, #tpu.memory_space<vmem>>, vector<1x8x128xf32>,
    return
  }
  func.func @transform_0(%arg0: i32) -> (i32, i32, i32) {
    %c0_i32 = arith.constant 0 : i32
    %c0_i32_0 = arith.constant 0 : i32
    %c0_i32_1 = arith.constant 0 : i32
    return %arg0, %c0_i32, %c0_i32_0 : i32, i32, i32
  }
  func.func @transform_1(%arg0: i32) -> (i32, i32, i32) {
    %c0_i32 = arith.constant 0 : i32
    %c0_i32_0 = arith.constant 0 : i32
    %c0_i32_1 = arith.constant 0 : i32
    return %arg0, %c0_i32, %c0_i32_0 : i32, i32, i32
  }
  func.func @transform_2(%arg0: i32) -> (i32, i32, i32) {
    %c0_i32 = arith.constant 0 : i32
    %c0_i32_0 = arith.constant 0 : i32
    %c0_i32_1 = arith.constant 0 : i32
    %c0_i32_2 = arith.constant 0 : i32
    return %c0_i32, %c0_i32_0, %c0_i32_1 : i32, i32, i32
  }
  func.func @transform_3(%arg0: i32) -> (i32, i32, i32) {
    %c0_i32 = arith.constant 0 : i32
    %c0_i32_0 = arith.constant 0 : i32
    %c0_i32_1 = arith.constant 0 : i32
    %c0_i32_2 = arith.constant 0 : i32
    return %c0_i32, %c0_i32_0, %c0_i32_1 : i32, i32, i32
  }
  func.func @transform_4(%arg0: i32) -> (i32, i32, i32) {
    %c0_i32 = arith.constant 0 : i32
    %c0_i32_0 = arith.constant 0 : i32
    %c0_i32_1 = arith.constant 0 : i32
    %c0_i32_2 = arith.constant 0 : i32
    return %c0_i32, %c0_i32_0, %c0_i32_1 : i32, i32, i32
  }
  func.func @transform_5(%arg0: i32) -> (i32, i32, i32) {
    %c0_i32 = arith.constant 0 : i32
    %c0_i32_0 = arith.constant 0 : i32
    %c0_i32_1 = arith.constant 0 : i32
    %c0_i32_2 = arith.constant 0 : i32
    return %c0_i32, %c0_i32_0, %c0_i32_1 : i32, i32, i32
  }
  func.func @transform_6(%arg0: i32) -> (i32, i32, i32) {
    %c0_i32 = arith.constant 0 : i32
    %c0_i32_0 = arith.constant 0 : i32
    %c0_i32_1 = arith.constant 0 : i32
    %c0_i32_2 = arith.constant 0 : i32
    return %c0_i32, %c0_i32_0, %c0_i32_1 : i32, i32, i32
  }
  func.func @transform_7(%arg0: i32) -> (i32, i32, i32) {
    %c0_i32 = arith.constant 0 : i32
    %c0_i32_0 = arith.constant 0 : i32
    %c0_i32_1 = arith.constant 0 : i32
    %c0_i32_2 = arith.constant 0 : i32
    return %c0_i32, %c0_i32_0, %c0_i32_1 : i32, i32, i32
  }
  func.func @transform_8(%arg0: i32) -> (i32, i32, i32) {
    %c0_i32 = arith.constant 0 : i32
    %c0_i32_0 = arith.constant 0 : i32
    %c0_i32_1 = arith.constant 0 : i32
    %c0_i32_2 = arith.constant 0 : i32
    return %c0_i32, %c0_i32_0, %c0_i32_1 : i32, i32, i32
  }
  func.func @transform_9(%arg0: i32) -> (i32, i32, i32) {
    %c0_i32 = arith.constant 0 : i32
    %c0_i32_0 = arith.constant 0 : i32
    %c0_i32_1 = arith.constant 0 : i32
    %c0_i32_2 = arith.constant 0 : i32
    return %c0_i32, %c0_i32_0, %c0_i32_1 : i32, i32, i32
  }
  func.func @transform_10(%arg0: i32) -> (i32, i32, i32) {
    %c0_i32 = arith.constant 0 : i32
    %c0_i32_0 = arith.constant 0 : i32
    %c0_i32_1 = arith.constant 0 : i32
    %c0_i32_2 = arith.constant 0 : i32
    return %c0_i32, %c0_i32_0, %c0_i32_1 : i32, i32, i32
  }
  func.func @transform_11(%arg0: i32) -> (i32, i32, i32) {
    %c0_i32 = arith.constant 0 : i32
    %c0_i32_0 = arith.constant 0 : i32
    %c0_i32_1 = arith.constant 0 : i32
    %c0_i32_2 = arith.constant 0 : i32
    return %c0_i32, %c0_i32_0, %c0_i32_1 : i32, i32, i32
  }
  func.func @transform_12(%arg0: i32) -> (i32, i32) {
    %c0_i32 = arith.constant 0 : i32
    %c0_i32_0 = arith.constant 0 : i32
    %c0_i32_1 = arith.constant 0 : i32
    return %c0_i32, %c0_i32_0 : i32, i32
  }
  func.func @transform_13(%arg0: i32) -> (i32, i32) {
    %c0_i32 = arith.constant 0 : i32
    %c0_i32_0 = arith.constant 0 : i32
    %c0_i32_1 = arith.constant 0 : i32
    return %c0_i32, %c0_i32_0 : i32, i32
  }
  func.func @transform_14(%arg0: i32) -> (i32, i32, i32) {
    %c0_i32 = arith.constant 0 : i32
    %c0_i32_0 = arith.constant 0 : i32
    %c0_i32_1 = arith.constant 0 : i32
    return %arg0, %c0_i32, %c0_i32_0 : i32, i32, i32
  }
}

</mosaic_0001>

<llo_original>
// kernel: decoder_forward.1
$region0: #{decoder_forward.1}
  #allocation0 [shape = 'u32[]', space=smem, size = 0x4, offset = 0x4, fixed_abs, tag = 'smem constant byte address 0x4 - core index']
  #allocation1 [shape = 'u32[72,128]{1,0:T(1,128)}', space=vmem, size = 0x9000, scoped, tag = 'internal scratch']
  %s0 = inlined_call_operand.vmem [shape: f32[2,8,32], index: 0, kind: input, shape index: {}]
  %s1 = inlined_call_operand.vmem [shape: f32[2,8,32], index: 1, kind: input, shape index: {}]
  %s2 = inlined_call_operand.vmem [shape: f32[2,32,96], index: 2, kind: input, shape index: {}]
  %s3 = inlined_call_operand.vmem [shape: f32[2,32,32], index: 3, kind: input, shape index: {}]
  %s4 = inlined_call_operand.vmem [shape: f32[2,32,32], index: 4, kind: input, shape index: {}]
  %s5 = inlined_call_operand.vmem [shape: f32[2,32,64], index: 5, kind: input, shape index: {}]
  %s6 = inlined_call_operand.vmem [shape: f32[2,32,32], index: 6, kind: input, shape index: {}]
  %s7 = inlined_call_operand.vmem [shape: f32[2,6,32], index: 7, kind: input, shape index: {}]
  %s8 = inlined_call_operand.vmem [shape: f32[2,32,64], index: 8, kind: input, shape index: {}]
  %s9 = inlined_call_operand.vmem [shape: f32[2,1,64], index: 9, kind: input, shape index: {}]
  %s10 = inlined_call_operand.vmem [shape: f32[2,64,32], index: 10, kind: input, shape index: {}]
  %s11 = inlined_call_operand.vmem [shape: f32[2,1,32], index: 11, kind: input, shape index: {}]
  %s12 = inlined_call_operand.vmem [shape: f32[32,128], index: 12, kind: input, shape index: {}]
  %s13 = inlined_call_operand.vmem [shape: f32[1,128], index: 13, kind: input, shape index: {}]
  %s14 = inlined_call_operand.hbm [shape: f32[2,8,128], index: 14, kind: output, shape index: {}]
  %s15 = sld [smem:[#allocation0]]
  $region89: #{decoder_forward.1} parent=0
    _
  %s17 = ssub.s32 1, %s15
  %s18 = scalar_select 0, %s17, %s15
  $region1: #{decoder_forward.1} parent=0
    #allocation2 [shape = 'u8[8192]{0}', space=vmem, size = 0x2000, scoped, tag = 'output window, operand 0']
    #allocation3 [shape = 's32[2]{0}', space=sflag, size = 0x8, scoped, tag = 'scoped memory for decoder_forward.1']
    %19 = vsyncpa [#allocation3], 0
    %s20 = scalar_lea.sflag [#allocation3], 1
    %21 = vsyncpa %s20, 0
    loop: start=0, step=1, limit=4
    $region2: #{decoder_forward.1} parent=1 // loop_pre_header
      _
    $region3: #{decoder_forward.1} parent=1 // loop_header
      %s23 = sphi 0, %s27
      %p24 = scmp.ge.s32.totalorder %s23, 4
      %s33 = sphi 0, %s35
      %s36 = sphi 0, %s33
      %s37 = sphi 0, %s36
      %s53 = sphi 0, %s37
      %s59 = sphi 0, %s61
      %s62 = sphi 0, %s59
      %s63 = sphi 0, %s62
      %s79 = sphi 0, %s63
      %s83 = sphi 0, %s83
      %s85 = sphi 0, %s83
      %s86 = sphi 0, %s85
      %s100 = sphi 0, %s86
      %s104 = sphi 0, %s104
      %s106 = sphi 0, %s104
      %s107 = sphi 0, %s106
      %s121 = sphi 0, %s107
      %s125 = sphi 0, %s125
      %s127 = sphi 0, %s125
      %s128 = sphi 0, %s127
      %s142 = sphi 0, %s128
      %s146 = sphi 0, %s146
      %s148 = sphi 0, %s146
      %s149 = sphi 0, %s148
      %s163 = sphi 0, %s149
      %s167 = sphi 0, %s167
      %s169 = sphi 0, %s167
      %s170 = sphi 0, %s169
      %s184 = sphi 0, %s170
      %s188 = sphi 0, %s188
      %s190 = sphi 0, %s188
      %s191 = sphi 0, %s190
      %s205 = sphi 0, %s191
      %s209 = sphi 0, %s209
      %s211 = sphi 0, %s209
      %s212 = sphi 0, %s211
      %s226 = sphi 0, %s212
      %s230 = sphi 0, %s230
      %s232 = sphi 0, %s230
      %s233 = sphi 0, %s232
      %s247 = sphi 0, %s233
      %s251 = sphi 0, %s251
      %s253 = sphi 0, %s251
      %s254 = sphi 0, %s253
      %s268 = sphi 0, %s254
      %s272 = sphi 0, %s272
      %s274 = sphi 0, %s272
      %s275 = sphi 0, %s274
      %s289 = sphi 0, %s275
      %s293 = sphi 0, %s293
      %s295 = sphi 0, %s293
      %s296 = sphi 0, %s295
      %s310 = sphi 0, %s296
      %s314 = sphi 0, %s314
      %s316 = sphi 0, %s314
      %s317 = sphi 0, %s316
      %s331 = sphi 0, %s317
      %s337 = sphi 0, %s339
      %s340 = sphi 0, %s337
      %s341 = sphi 0, %s340
      %s357 = sphi 0, %s341
    $region4: #{decoder_forward.1} parent=1 // loop_header_branch
      %26 = sbr.rel (%p24) target = $region8
    $region5: #{decoder_forward.1} parent=1 // loop_body
      %s28 = ssub.s32 %s23, 1
      %s29 = ssub.s32 %s23, 2
      %s30 = sadd.s32 %s23, 1
      %s31 = ssub.s32 %s23, %s30
      %p32 = scmp.eq.s32.totalorder %s31, 0
      %s34 = sadd.s32 %s33, 1
      %s35 = scalar_select %p32, %s33, %s34
      %p38 = pneg %p32
      %p39 = scmp.eq.s32.totalorder %s23, 1
      %p40 = por %p38, %p39
      %p41 = scmp.ne.s32.totalorder %s33, %s36
      %p42 = scmp.eq.s32.totalorder %s23, 0
      %p43 = por %p41, %p42
      %p44 = scmp.ne.s32.totalorder %s33, %s36
      %p45 = scmp.eq.s32.totalorder %s28, 1
      %p46 = por %p44, %p45
      %p47 = scmp.ne.s32.totalorder %s36, %s37
      %p48 = scmp.eq.s32.totalorder %s28, 0
      %p49 = por %p47, %p48
      %p50 = scmp.ne.s32.totalorder %s36, %s37
      %p51 = scmp.eq.s32.totalorder %s29, 1
      %p52 = por %p50, %p51
      %p54 = scmp.ne.s32.totalorder %s37, %s53
      %p55 = scmp.eq.s32.totalorder %s29, 0
      %p56 = por %p54, %p55
      %s57 = ssub.s32 %s23, %s30
      %p58 = scmp.eq.s32.totalorder %s57, 0
      %s60 = sadd.s32 %s59, 1
      %s61 = scalar_select %p58, %s59, %s60
      %p64 = pneg %p58
      %p65 = scmp.eq.s32.totalorder %s23, 1
      %p66 = por %p64, %p65
      %p67 = scmp.ne.s32.totalorder %s59, %s62
      %p68 = scmp.eq.s32.totalorder %s23, 0
      %p69 = por %p67, %p68
      %p70 = scmp.ne.s32.totalorder %s59, %s62
      %p71 = scmp.eq.s32.totalorder %s28, 1
      %p72 = por %p70, %p71
      %p73 = scmp.ne.s32.totalorder %s62, %s63
      %p74 = scmp.eq.s32.totalorder %s28, 0
      %p75 = por %p73, %p74
      %p76 = scmp.ne.s32.totalorder %s62, %s63
      %p77 = scmp.eq.s32.totalorder %s29, 1
      %p78 = por %p76, %p77
      %p80 = scmp.ne.s32.totalorder %s63, %s79
      %p81 = scmp.eq.s32.totalorder %s29, 0
      %p82 = por %p80, %p81
      %s84 = sadd.s32 %s83, 1
      %p87 = scmp.eq.s32.totalorder %s23, 1
      %p88 = scmp.ne.s32.totalorder %s83, %s85
      %p89 = scmp.eq.s32.totalorder %s23, 0
      %p90 = por %p88, %p89
      %p91 = scmp.ne.s32.totalorder %s83, %s85
      %p92 = scmp.eq.s32.totalorder %s28, 1
      %p93 = por %p91, %p92
      %p94 = scmp.ne.s32.totalorder %s85, %s86
      %p95 = scmp.eq.s32.totalorder %s28, 0
      %p96 = por %p94, %p95
      %p97 = scmp.ne.s32.totalorder %s85, %s86
      %p98 = scmp.eq.s32.totalorder %s29, 1
      %p99 = por %p97, %p98
      %p101 = scmp.ne.s32.totalorder %s86, %s100
      %p102 = scmp.eq.s32.totalorder %s29, 0
      %p103 = por %p101, %p102
      %s105 = sadd.s32 %s104, 1
      %p108 = scmp.eq.s32.totalorder %s23, 1
      %p109 = scmp.ne.s32.totalorder %s104, %s106
      %p110 = scmp.eq.s32.totalorder %s23, 0
      %p111 = por %p109, %p110
      %p112 = scmp.ne.s32.totalorder %s104, %s106
      %p113 = scmp.eq.s32.totalorder %s28, 1
      %p114 = por %p112, %p113
      %p115 = scmp.ne.s32.totalorder %s106, %s107
      %p116 = scmp.eq.s32.totalorder %s28, 0
      %p117 = por %p115, %p116
      %p118 = scmp.ne.s32.totalorder %s106, %s107
      %p119 = scmp.eq.s32.totalorder %s29, 1
      %p120 = por %p118, %p119
      %p122 = scmp.ne.s32.totalorder %s107, %s121
      %p123 = scmp.eq.s32.totalorder %s29, 0
      %p124 = por %p122, %p123
      %s126 = sadd.s32 %s125, 1
      %p129 = scmp.eq.s32.totalorder %s23, 1
      %p130 = scmp.ne.s32.totalorder %s125, %s127
      %p131 = scmp.eq.s32.totalorder %s23, 0
      %p132 = por %p130, %p131
      %p133 = scmp.ne.s32.totalorder %s125, %s127
      %p134 = scmp.eq.s32.totalorder %s28, 1
      %p135 = por %p133, %p134
      %p136 = scmp.ne.s32.totalorder %s127, %s128
      %p137 = scmp.eq.s32.totalorder %s28, 0
      %p138 = por %p136, %p137
      %p139 = scmp.ne.s32.totalorder %s127, %s128
      %p140 = scmp.eq.s32.totalorder %s29, 1
      %p141 = por %p139, %p140
      %p143 = scmp.ne.s32.totalorder %s128, %s142
      %p144 = scmp.eq.s32.totalorder %s29, 0
      %p145 = por %p143, %p144
      %s147 = sadd.s32 %s146, 1
      %p150 = scmp.eq.s32.totalorder %s23, 1
      %p151 = scmp.ne.s32.totalorder %s146, %s148
      %p152 = scmp.eq.s32.totalorder %s23, 0
      %p153 = por %p151, %p152
      %p154 = scmp.ne.s32.totalorder %s146, %s148
      %p155 = scmp.eq.s32.totalorder %s28, 1
      %p156 = por %p154, %p155
      %p157 = scmp.ne.s32.totalorder %s148, %s149
      %p158 = scmp.eq.s32.totalorder %s28, 0
      %p159 = por %p157, %p158
      %p160 = scmp.ne.s32.totalorder %s148, %s149
      %p161 = scmp.eq.s32.totalorder %s29, 1
      %p162 = por %p160, %p161
      %p164 = scmp.ne.s32.totalorder %s149, %s163
      %p165 = scmp.eq.s32.totalorder %s29, 0
      %p166 = por %p164, %p165
      %s168 = sadd.s32 %s167, 1
      %p171 = scmp.eq.s32.totalorder %s23, 1
      %p172 = scmp.ne.s32.totalorder %s167, %s169
      %p173 = scmp.eq.s32.totalorder %s23, 0
      %p174 = por %p172, %p173
      %p175 = scmp.ne.s32.totalorder %s167, %s169
      %p176 = scmp.eq.s32.totalorder %s28, 1
      %p177 = por %p175, %p176
      %p178 = scmp.ne.s32.totalorder %s169, %s170
      %p179 = scmp.eq.s32.totalorder %s28, 0
      %p180 = por %p178, %p179
      %p181 = scmp.ne.s32.totalorder %s169, %s170
      %p182 = scmp.eq.s32.totalorder %s29, 1
      %p183 = por %p181, %p182
      %p185 = scmp.ne.s32.totalorder %s170, %s184
      %p186 = scmp.eq.s32.totalorder %s29, 0
      %p187 = por %p185, %p186
      %s189 = sadd.s32 %s188, 1
      %p192 = scmp.eq.s32.totalorder %s23, 1
      %p193 = scmp.ne.s32.totalorder %s188, %s190
      %p194 = scmp.eq.s32.totalorder %s23, 0
      %p195 = por %p193, %p194
      %p196 = scmp.ne.s32.totalorder %s188, %s190
      %p197 = scmp.eq.s32.totalorder %s28, 1
      %p198 = por %p196, %p197
      %p199 = scmp.ne.s32.totalorder %s190, %s191
      %p200 = scmp.eq.s32.totalorder %s28, 0
      %p201 = por %p199, %p200
      %p202 = scmp.ne.s32.totalorder %s190, %s191
      %p203 = scmp.eq.s32.totalorder %s29, 1
      %p204 = por %p202, %p203
      %p206 = scmp.ne.s32.totalorder %s191, %s205
      %p207 = scmp.eq.s32.totalorder %s29, 0
      %p208 = por %p206, %p207
      %s210 = sadd.s32 %s209, 1
      %p213 = scmp.eq.s32.totalorder %s23, 1
      %p214 = scmp.ne.s32.totalorder %s209, %s211
      %p215 = scmp.eq.s32.totalorder %s23, 0
      %p216 = por %p214, %p215
      %p217 = scmp.ne.s32.totalorder %s209, %s211
      %p218 = scmp.eq.s32.totalorder %s28, 1
      %p219 = por %p217, %p218
      %p220 = scmp.ne.s32.totalorder %s211, %s212
      %p221 = scmp.eq.s32.totalorder %s28, 0
      %p222 = por %p220, %p221
      %p223 = scmp.ne.s32.totalorder %s211, %s212
      %p224 = scmp.eq.s32.totalorder %s29, 1
      %p225 = por %p223, %p224
      %p227 = scmp.ne.s32.totalorder %s212, %s226
      %p228 = scmp.eq.s32.totalorder %s29, 0
      %p229 = por %p227, %p228
      %s231 = sadd.s32 %s230, 1
      %p234 = scmp.eq.s32.totalorder %s23, 1
      %p235 = scmp.ne.s32.totalorder %s230, %s232
      %p236 = scmp.eq.s32.totalorder %s23, 0
      %p237 = por %p235, %p236
      %p238 = scmp.ne.s32.totalorder %s230, %s232
      %p239 = scmp.eq.s32.totalorder %s28, 1
      %p240 = por %p238, %p239
      %p241 = scmp.ne.s32.totalorder %s232, %s233
      %p242 = scmp.eq.s32.totalorder %s28, 0
      %p243 = por %p241, %p242
      %p244 = scmp.ne.s32.totalorder %s232, %s233
      %p245 = scmp.eq.s32.totalorder %s29, 1
      %p246 = por %p244, %p245
      %p248 = scmp.ne.s32.totalorder %s233, %s247
      %p249 = scmp.eq.s32.totalorder %s29, 0
      %p250 = por %p248, %p249
      %s252 = sadd.s32 %s251, 1
      %p255 = scmp.eq.s32.totalorder %s23, 1
      %p256 = scmp.ne.s32.totalorder %s251, %s253
      %p257 = scmp.eq.s32.totalorder %s23, 0
      %p258 = por %p256, %p257
      %p259 = scmp.ne.s32.totalorder %s251, %s253
      %p260 = scmp.eq.s32.totalorder %s28, 1
      %p261 = por %p259, %p260
      %p262 = scmp.ne.s32.totalorder %s253, %s254
      %p263 = scmp.eq.s32.totalorder %s28, 0
      %p264 = por %p262, %p263
      %p265 = scmp.ne.s32.totalorder %s253, %s254
      %p266 = scmp.eq.s32.totalorder %s29, 1
      %p267 = por %p265, %p266
      %p269 = scmp.ne.s32.totalorder %s254, %s268
      %p270 = scmp.eq.s32.totalorder %s29, 0
      %p271 = por %p269, %p270
      %s273 = sadd.s32 %s272, 1
      %p276 = scmp.eq.s32.totalorder %s23, 1
      %p277 = scmp.ne.s32.totalorder %s272, %s274
      %p278 = scmp.eq.s32.totalorder %s23, 0
      %p279 = por %p277, %p278
      %p280 = scmp.ne.s32.totalorder %s272, %s274
      %p281 = scmp.eq.s32.totalorder %s28, 1
      %p282 = por %p280, %p281
      %p283 = scmp.ne.s32.totalorder %s274, %s275
      %p284 = scmp.eq.s32.totalorder %s28, 0
      %p285 = por %p283, %p284
      %p286 = scmp.ne.s32.totalorder %s274, %s275
      %p287 = scmp.eq.s32.totalorder %s29, 1
      %p288 = por %p286, %p287
      %p290 = scmp.ne.s32.totalorder %s275, %s289
      %p291 = scmp.eq.s32.totalorder %s29, 0
      %p292 = por %p290, %p291
      %s294 = sadd.s32 %s293, 1
      %p297 = scmp.eq.s32.totalorder %s23, 1
      %p298 = scmp.ne.s32.totalorder %s293, %s295
      %p299 = scmp.eq.s32.totalorder %s23, 0
      %p300 = por %p298, %p299
      %p301 = scmp.ne.s32.totalorder %s293, %s295
      %p302 = scmp.eq.s32.totalorder %s28, 1
      %p303 = por %p301, %p302
      %p304 = scmp.ne.s32.totalorder %s295, %s296
      %p305 = scmp.eq.s32.totalorder %s28, 0
      %p306 = por %p304, %p305
      %p307 = scmp.ne.s32.totalorder %s295, %s296
      %p308 = scmp.eq.s32.totalorder %s29, 1
      %p309 = por %p307, %p308
      %p311 = scmp.ne.s32.totalorder %s296, %s310
      %p312 = scmp.eq.s32.totalorder %s29, 0
      %p313 = por %p311, %p312
      %s315 = sadd.s32 %s314, 1
      %p318 = scmp.eq.s32.totalorder %s23, 1
      %p319 = scmp.ne.s32.totalorder %s314, %s316
      %p320 = scmp.eq.s32.totalorder %s23, 0
      %p321 = por %p319, %p320
      %p322 = scmp.ne.s32.totalorder %s314, %s316
      %p323 = scmp.eq.s32.totalorder %s28, 1
      %p324 = por %p322, %p323
      %p325 = scmp.ne.s32.totalorder %s316, %s317
      %p326 = scmp.eq.s32.totalorder %s28, 0
      %p327 = por %p325, %p326
      %p328 = scmp.ne.s32.totalorder %s316, %s317
      %p329 = scmp.eq.s32.totalorder %s29, 1
      %p330 = por %p328, %p329
      %p332 = scmp.ne.s32.totalorder %s317, %s331
      %p333 = scmp.eq.s32.totalorder %s29, 0
      %p334 = por %p332, %p333
      %s335 = ssub.s32 %s23, %s30
      %p336 = scmp.eq.s32.totalorder %s335, 0
      %s338 = sadd.s32 %s337, 1
      %s339 = scalar_select %p336, %s337, %s338
      %p342 = pneg %p336
      %p343 = scmp.eq.s32.totalorder %s23, 1
      %p344 = por %p342, %p343
      %p345 = scmp.ne.s32.totalorder %s337, %s340
      %p346 = scmp.eq.s32.totalorder %s23, 0
      %p347 = por %p345, %p346
      %p348 = scmp.ne.s32.totalorder %s337, %s340
      %p349 = scmp.eq.s32.totalorder %s28, 1
      %p350 = por %p348, %p349
      %p351 = scmp.ne.s32.totalorder %s340, %s341
      %p352 = scmp.eq.s32.totalorder %s28, 0
      %p353 = por %p351, %p352
      %p354 = scmp.ne.s32.totalorder %s340, %s341
      %p355 = scmp.eq.s32.totalorder %s29, 1
      %p356 = por %p354, %p355
      %p358 = scmp.ne.s32.totalorder %s341, %s357
      %p359 = scmp.eq.s32.totalorder %s29, 0
      %p360 = por %p358, %p359
      %p361 = scmp.le.s32.totalorder 1, %s23
      %p362 = scmp.lt.s32.totalorder %s23, 3
      %p363 = pnand %p361, %p362
      %p364 = pneg %p363
      // Predicated region
      $region9: #{decoder_forward.1} parent=5 // pred_check
        _
      $region10: #{decoder_forward.1} parent=5 // pred_check_branch
        %366 = sbr.rel (%p363) target = $region12
      $region11: #{decoder_forward.1} parent=5 // pred_region
        %s367 = ssub.s32 %s23, 1
        // Predicated region
        $region13: #{decoder_forward.1} parent=11 // pred_check
          %p368 = pneg %p96
        $region14: #{decoder_forward.1} parent=11 // pred_check_branch
          %370 = sbr.rel (%p368) target = $region16
        $region15: #{decoder_forward.1} parent=11 // pred_region
          _
        $region16: #{decoder_forward.1} parent=11 // pred_fallthru
          _
        // Predicated region
        $region17: #{decoder_forward.1} parent=11 // pred_check
          %p371 = pneg %p117
        $region18: #{decoder_forward.1} parent=11 // pred_check_branch
          %373 = sbr.rel (%p371) target = $region20
        $region19: #{decoder_forward.1} parent=11 // pred_region
          _
        $region20: #{decoder_forward.1} parent=11 // pred_fallthru
          _
        // Predicated region
        $region21: #{decoder_forward.1} parent=11 // pred_check
          %p374 = pneg %p138
        $region22: #{decoder_forward.1} parent=11 // pred_check_branch
          %376 = sbr.rel (%p374) target = $region24
        $region23: #{decoder_forward.1} parent=11 // pred_region
          _
        $region24: #{decoder_forward.1} parent=11 // pred_fallthru
          _
        // Predicated region
        $region25: #{decoder_forward.1} parent=11 // pred_check
          %p377 = pneg %p159
        $region26: #{decoder_forward.1} parent=11 // pred_check_branch
          %379 = sbr.rel (%p377) target = $region28
        $region27: #{decoder_forward.1} parent=11 // pred_region
          _
        $region28: #{decoder_forward.1} parent=11 // pred_fallthru
          _
        // Predicated region
        $region29: #{decoder_forward.1} parent=11 // pred_check
          %p380 = pneg %p180
        $region30: #{decoder_forward.1} parent=11 // pred_check_branch
          %382 = sbr.rel (%p380) target = $region32
        $region31: #{decoder_forward.1} parent=11 // pred_region
          _
        $region32: #{decoder_forward.1} parent=11 // pred_fallthru
          _
        // Predicated region
        $region33: #{decoder_forward.1} parent=11 // pred_check
          %p383 = pneg %p201
        $region34: #{decoder_forward.1} parent=11 // pred_check_branch
          %385 = sbr.rel (%p383) target = $region36
        $region35: #{decoder_forward.1} parent=11 // pred_region
          _
        $region36: #{decoder_forward.1} parent=11 // pred_fallthru
          _
        // Predicated region
        $region37: #{decoder_forward.1} parent=11 // pred_check
          %p386 = pneg %p222
        $region38: #{decoder_forward.1} parent=11 // pred_check_branch
          %388 = sbr.rel (%p386) target = $region40
        $region39: #{decoder_forward.1} parent=11 // pred_region
          _
        $region40: #{decoder_forward.1} parent=11 // pred_fallthru
          _
        // Predicated region
        $region41: #{decoder_forward.1} parent=11 // pred_check
          %p389 = pneg %p243
        $region42: #{decoder_forward.1} parent=11 // pred_check_branch
          %391 = sbr.rel (%p389) target = $region44
        $region43: #{decoder_forward.1} parent=11 // pred_region
          _
        $region44: #{decoder_forward.1} parent=11 // pred_fallthru
          _
        // Predicated region
        $region45: #{decoder_forward.1} parent=11 // pred_check
          %p392 = pneg %p264
        $region46: #{decoder_forward.1} parent=11 // pred_check_branch
          %394 = sbr.rel (%p392) target = $region48
        $region47: #{decoder_forward.1} parent=11 // pred_region
          _
        $region48: #{decoder_forward.1} parent=11 // pred_fallthru
          _
        // Predicated region
        $region49: #{decoder_forward.1} parent=11 // pred_check
          %p395 = pneg %p285
        $region50: #{decoder_forward.1} parent=11 // pred_check_branch
          %397 = sbr.rel (%p395) target = $region52
        $region51: #{decoder_forward.1} parent=11 // pred_region
          _
        $region52: #{decoder_forward.1} parent=11 // pred_fallthru
          _
        // Predicated region
        $region53: #{decoder_forward.1} parent=11 // pred_check
          %p398 = pneg %p306
        $region54: #{decoder_forward.1} parent=11 // pred_check_branch
          %400 = sbr.rel (%p398) target = $region56
        $region55: #{decoder_forward.1} parent=11 // pred_region
          _
        $region56: #{decoder_forward.1} parent=11 // pred_fallthru
          _
        // Predicated region
        $region57: #{decoder_forward.1} parent=11 // pred_check
          %p401 = pneg %p327
        $region58: #{decoder_forward.1} parent=11 // pred_check_branch
          %403 = sbr.rel (%p401) target = $region60
        $region59: #{decoder_forward.1} parent=11 // pred_region
          _
        $region60: #{decoder_forward.1} parent=11 // pred_fallthru
          _
      $region12: #{decoder_forward.1} parent=5 // pred_fallthru
        _
      %p404 = scmp.lt.s32.totalorder %s23, 2
      // Predicated region
      $region61: #{decoder_forward.1} parent=5 // pred_check
        %p405 = pneg %p404
      $region62: #{decoder_forward.1} parent=5 // pred_check_branch
        %407 = sbr.rel (%p405) target = $region64
      $region63: #{decoder_forward.1} parent=5 // pred_region
        // Predicated region
        $region65: #{decoder_forward.1} parent=63 // pred_check
          %p408 = pneg %p43
        $region66: #{decoder_forward.1} parent=63 // pred_check_branch
          %410 = sbr.rel (%p408) target = $region68
        $region67: #{decoder_forward.1} parent=63 // pred_region
          %p411 = scmp.lt.s32.totalorder %s23, 1
          %s412 = scalar_select %p411, %s23, 1
          %s413 = smul.addr %s412, 8
          %s414 = scalar_lea.vmem %s0, %s413
        $region68: #{decoder_forward.1} parent=63 // pred_fallthru
          _
        // Predicated region
        $region69: #{decoder_forward.1} parent=63 // pred_check
          %p415 = pneg %p69
        $region70: #{decoder_forward.1} parent=63 // pred_check_branch
          %417 = sbr.rel (%p415) target = $region72
        $region71: #{decoder_forward.1} parent=63 // pred_region
          %p418 = scmp.lt.s32.totalorder %s23, 1
          %s419 = scalar_select %p418, %s23, 1
          %s420 = smul.addr %s419, 8
          %s421 = scalar_lea.vmem %s1, %s420
        $region72: #{decoder_forward.1} parent=63 // pred_fallthru
          _
      $region64: #{decoder_forward.1} parent=5 // pred_fallthru
        _
      %p422 = scmp.le.s32.totalorder 1, %s23
      %p423 = scmp.lt.s32.totalorder %s23, 3
      %p424 = pnand %p422, %p423
      %p425 = pneg %p424
      // Predicated region
      $region73: #{decoder_forward.1} parent=5 // pred_check
        _
      $region74: #{decoder_forward.1} parent=5 // pred_check_branch
        %427 = sbr.rel (%p424) target = $region76
      $region75: #{decoder_forward.1} parent=5 // pred_region
        %s428 = ssub.s32 %s23, 1
        %p429 = scmp.lt.s32.totalorder %s28, 1
        %s430 = scalar_select %p429, %s28, 1
        %s431 = smul.addr %s430, 8
        %s432 = scalar_lea.vmem %s0, %s431
        %p433 = pneg %p49
        %p434 = pneg %p46
        %p435 = scmp.lt.s32.totalorder %s28, 1
        %s436 = scalar_select %p435, %s28, 1
        %s437 = smul.addr %s436, 8
        %s438 = scalar_lea.vmem %s1, %s437
        %p439 = pneg %p75
        %p440 = pneg %p72
        %p441 = pneg %p96
        %p442 = pneg %p93
        %p443 = pneg %p117
        %p444 = pneg %p114
        %p445 = pneg %p138
        %p446 = pneg %p135
        %p447 = pneg %p159
        %p448 = pneg %p156
        %p449 = pneg %p180
        %p450 = pneg %p177
        %p451 = pneg %p201
        %p452 = pneg %p198
        %p453 = pneg %p222
        %p454 = pneg %p219
        %p455 = pneg %p243
        %p456 = pneg %p240
        %p457 = pneg %p264
        %p458 = pneg %p261
        %p459 = pneg %p285
        %p460 = pneg %p282
        %p461 = pneg %p306
        %p462 = pneg %p303
        %p463 = pneg %p327
        %p464 = pneg %p324
        %p465 = pneg %p353
        %p466 = pneg %p350
        %s467 = sand.u32 %s340, 1
        %s468 = scalar_lea.sflag [#allocation3], %s467
        %s469 = sand.u32 %s340, 1
        %s470 = smul.addr %s469, 8
        %s471 = scalar_lea.vmem [#allocation2], %s470
        %p472 = scmp.lt.s32.totalorder %s28, 1
        %s473 = scalar_select %p472, %s28, 1
        %s474 = smul.addr %s473, 8
        %s475 = scalar_lea.vmem %s0, %s474
        %p476 = scmp.lt.s32.totalorder %s28, 1
        %s477 = scalar_select %p476, %s28, 1
        %s478 = smul.addr %s477, 8
        %s479 = scalar_lea.vmem %s1, %s478
        %v480 = vld [vmem:[%s475] sm:$0xff]
        %v481 = vld [vmem:[%s479] sm:$0xff]
        %v482 = vld [vmem:[%s7] sm:$0x3f]
        %v483 = vld [vmem:[%s2] sm:$0xff]
        %v484 = vld [vmem:[%s2 + $0x8] sm:$0xff]
        %v485 = vld [vmem:[%s2 + $0x10] sm:$0xff]
        %v486 = vld [vmem:[%s2 + $0x18] sm:$0xff]
        %vm487 = vcmask 261120
        %v489 = vsel %vm487, %v480, 0
        %491 = vmatpush.msra.mxu0 0.0
        %492 = vmatpush.msra.mxu0 0.0
        %493 = vmatpush.msra.mxu0 0.0
        %494 = vmatpush.msra.mxu0 0.0
        %495 = vmatpush.msra.mxu0 0.0
        %496 = vmatpush.msra.mxu0 0.0
        %497 = vmatpush.msra.mxu0 0.0
        %498 = vmatpush.msra.mxu0 0.0
        %499 = vmatpush.msra.mxu0 0.0
        %500 = vmatpush.msra.mxu0 0.0
        %501 = vmatpush.msra.mxu0 0.0
        %502 = vmatpush.msra.mxu0 0.0
        %503 = vmatpush.msra.mxu0 %v486
        %504 = vmatpush.msra.mxu0 %v485
        %505 = vmatpush.msra.mxu0 %v484
        %506 = vmatpush.msra.mxu0 %v483
        %507 = vmatmul.f32.gmra.mxu0 %v489
        %v508 = vpop.f32.mrf.mxu0
        %v509 = vadd.f32 0.0, %v508
        %510 = vdwg.mxu0
        %v511 = vld [vmem:[%s3] sm:$0xff]
        %v512 = vld [vmem:[%s3 + $0x8] sm:$0xff]
        %v513 = vld [vmem:[%s3 + $0x10] sm:$0xff]
        %v514 = vld [vmem:[%s3 + $0x18] sm:$0xff]
        %516 = vrot.lane.b32.xlu0 %v509, 96
        %v517 = vpop.permute.xlu0 %516
        %vm518 = vcmask 64512
        %v519 = vsel %vm518, %v509, 0
        %v521 = vsel %vm518, %v517, 0
        %523 = vmatpush.xpose.msra.mxu0 0.0
        %524 = vmatpush.xpose.msra.mxu0 0.0
        %525 = vmatpush.xpose.msra.mxu0 0.0
        %526 = vmatpush.xpose.msra.mxu0 0.0
        %527 = vmatpush.xpose.msra.mxu0 0.0
        %528 = vmatpush.xpose.msra.mxu0 0.0
        %529 = vmatpush.xpose.msra.mxu0 0.0
        %530 = vmatpush.xpose.msra.mxu0 0.0
        %531 = vmatpush.xpose.msra.mxu0 0.0
        %532 = vmatpush.xpose.msra.mxu0 0.0
        %533 = vmatpush.xpose.msra.mxu0 0.0
        %534 = vmatpush.xpose.msra.mxu0 0.0
        %535 = vmatpush.xpose.msra.mxu0 0.0
        %536 = vmatpush.xpose.msra.mxu0 0.0
        %537 = vmatpush.xpose.msra.mxu0 0.0
        %538 = vmatpush.xpose.msra.mxu0 %v521
        %539 = vmatmul.f32.gmra.mxu0 %v519
        %v540 = vpop.f32.mrf.mxu0
        %v541 = vadd.f32 0.0, %v540
        %542 = vdwg.mxu0
        %v543 = vmul.f32 %v541, 0.17677669
        %v544 = vsel %vm518, %v543, -inf
        %545 = vmax.xlane.f32.xlu0 %v544
        %v546 = vpop.xlane.xlu0 %545
        %v547 = vsub.f32 %v543, %v546
        %v548 = vmul.f32 %v547, 1.442695
        %v549 = vpow.pop %v548
        %v550 = vsel %vm518, %v549, 0.0
        %551 = vadd.xlane.f32.xlu0 %v550
        %v552 = vpop.xlane.xlu0 %551
        %v553 = vrcp.pop %v552
        %v554 = vmul.f32 %v549, %v553
        %555 = vrot.lane.b32.xlu0 %v509, 64
        %v556 = vpop.permute.xlu0 %555
        %v559 = vsel %vm518, %v554, 0
        %561 = vmatpush.msra.mxu0 0.0
        %562 = vmatpush.msra.mxu0 0.0
        %563 = vmatpush.msra.mxu0 0.0
        %564 = vmatpush.msra.mxu0 0.0
        %565 = vmatpush.msra.mxu0 0.0
        %566 = vmatpush.msra.mxu0 0.0
        %567 = vmatpush.msra.mxu0 0.0
        %568 = vmatpush.msra.mxu0 0.0
        %569 = vmatpush.msra.mxu0 0.0
        %570 = vmatpush.msra.mxu0 0.0
        %571 = vmatpush.msra.mxu0 0.0
        %572 = vmatpush.msra.mxu0 0.0
        %573 = vmatpush.msra.mxu0 0.0
        %574 = vmatpush.msra.mxu0 0.0
        %575 = vmatpush.msra.mxu0 0.0
        %576 = vmatpush.msra.mxu0 %v556
        %577 = vmatmul.f32.gmra.mxu0 %v559
        %v578 = vpop.f32.mrf.mxu0
        %v579 = vadd.f32 0.0, %v578
        %580 = vdwg.mxu0
        %581 = vrot.lane.b32.xlu0 %v509, 120
        %v582 = vpop.permute.xlu0 %581
        %583 = vrot.lane.b32.xlu0 %v509, 88
        %v584 = vpop.permute.xlu0 %583
        %v585 = vsel %vm518, %v582, 0
        %v587 = vsel %vm518, %v584, 0
        %589 = vmatpush.xpose.msra.mxu0 0.0
        %590 = vmatpush.xpose.msra.mxu0 0.0
        %591 = vmatpush.xpose.msra.mxu0 0.0
        %592 = vmatpush.xpose.msra.mxu0 0.0
        %593 = vmatpush.xpose.msra.mxu0 0.0
        %594 = vmatpush.xpose.msra.mxu0 0.0
        %595 = vmatpush.xpose.msra.mxu0 0.0
        %596 = vmatpush.xpose.msra.mxu0 0.0
        %597 = vmatpush.xpose.msra.mxu0 0.0
        %598 = vmatpush.xpose.msra.mxu0 0.0
        %599 = vmatpush.xpose.msra.mxu0 0.0
        %600 = vmatpush.xpose.msra.mxu0 0.0
        %601 = vmatpush.xpose.msra.mxu0 0.0
        %602 = vmatpush.xpose.msra.mxu0 0.0
        %603 = vmatpush.xpose.msra.mxu0 0.0
        %604 = vmatpush.xpose.msra.mxu0 %v587
        %605 = vmatmul.f32.gmra.mxu0 %v585
        %v606 = vpop.f32.mrf.mxu0
        %v607 = vadd.f32 0.0, %v606
        %608 = vdwg.mxu0
        %v609 = vmul.f32 %v607, 0.17677669
        %v610 = vsel %vm518, %v609, -inf
        %611 = vmax.xlane.f32.xlu0 %v610
        %v612 = vpop.xlane.xlu0 %611
        %v613 = vsub.f32 %v609, %v612
        %v614 = vmul.f32 %v613, 1.442695
        %v615 = vpow.pop %v614
        %v616 = vsel %vm518, %v615, 0.0
        %617 = vadd.xlane.f32.xlu0 %v616
        %v618 = vpop.xlane.xlu0 %617
        %v619 = vrcp.pop %v618
        %v620 = vmul.f32 %v615, %v619
        %621 = vrot.lane.b32.xlu0 %v509, 56
        %v622 = vpop.permute.xlu0 %621
        %v625 = vsel %vm518, %v620, 0
        %627 = vmatpush.msra.mxu0 0.0
        %628 = vmatpush.msra.mxu0 0.0
        %629 = vmatpush.msra.mxu0 0.0
        %630 = vmatpush.msra.mxu0 0.0
        %631 = vmatpush.msra.mxu0 0.0
        %632 = vmatpush.msra.mxu0 0.0
        %633 = vmatpush.msra.mxu0 0.0
        %634 = vmatpush.msra.mxu0 0.0
        %635 = vmatpush.msra.mxu0 0.0
        %636 = vmatpush.msra.mxu0 0.0
        %637 = vmatpush.msra.mxu0 0.0
        %638 = vmatpush.msra.mxu0 0.0
        %639 = vmatpush.msra.mxu0 0.0
        %640 = vmatpush.msra.mxu0 0.0
        %641 = vmatpush.msra.mxu0 0.0
        %642 = vmatpush.msra.mxu0 %v622
        %643 = vmatmul.f32.gmra.mxu0 %v625
        %v644 = vpop.f32.mrf.mxu0
        %v645 = vadd.f32 0.0, %v644
        %646 = vdwg.mxu0
        %647 = vrot.lane.b32.xlu0 %v509, 112
        %v648 = vpop.permute.xlu0 %647
        %649 = vrot.lane.b32.xlu0 %v509, 80
        %v650 = vpop.permute.xlu0 %649
        %v651 = vsel %vm518, %v648, 0
        %v653 = vsel %vm518, %v650, 0
        %655 = vmatpush.xpose.msra.mxu0 0.0
        %656 = vmatpush.xpose.msra.mxu0 0.0
        %657 = vmatpush.xpose.msra.mxu0 0.0
        %658 = vmatpush.xpose.msra.mxu0 0.0
        %659 = vmatpush.xpose.msra.mxu0 0.0
        %660 = vmatpush.xpose.msra.mxu0 0.0
        %661 = vmatpush.xpose.msra.mxu0 0.0
        %662 = vmatpush.xpose.msra.mxu0 0.0
        %663 = vmatpush.xpose.msra.mxu0 0.0
        %664 = vmatpush.xpose.msra.mxu0 0.0
        %665 = vmatpush.xpose.msra.mxu0 0.0
        %666 = vmatpush.xpose.msra.mxu0 0.0
        %667 = vmatpush.xpose.msra.mxu0 0.0
        %668 = vmatpush.xpose.msra.mxu0 0.0
        %669 = vmatpush.xpose.msra.mxu0 0.0
        %670 = vmatpush.xpose.msra.mxu0 %v653
        %671 = vmatmul.f32.gmra.mxu0 %v651
        %v672 = vpop.f32.mrf.mxu0
        %v673 = vadd.f32 0.0, %v672
        %674 = vdwg.mxu0
        %v675 = vmul.f32 %v673, 0.17677669
        %v676 = vsel %vm518, %v675, -inf
        %677 = vmax.xlane.f32.xlu0 %v676
        %v678 = vpop.xlane.xlu0 %677
        %v679 = vsub.f32 %v675, %v678
        %v680 = vmul.f32 %v679, 1.442695
        %v681 = vpow.pop %v680
        %v682 = vsel %vm518, %v681, 0.0
        %683 = vadd.xlane.f32.xlu0 %v682
        %v684 = vpop.xlane.xlu0 %683
        %v685 = vrcp.pop %v684
        %v686 = vmul.f32 %v681, %v685
        %687 = vrot.lane.b32.xlu0 %v509, 48
        %v688 = vpop.permute.xlu0 %687
        %v691 = vsel %vm518, %v686, 0
        %693 = vmatpush.msra.mxu0 0.0
        %694 = vmatpush.msra.mxu0 0.0
        %695 = vmatpush.msra.mxu0 0.0
        %696 = vmatpush.msra.mxu0 0.0
        %697 = vmatpush.msra.mxu0 0.0
        %698 = vmatpush.msra.mxu0 0.0
        %699 = vmatpush.msra.mxu0 0.0
        %700 = vmatpush.msra.mxu0 0.0
        %701 = vmatpush.msra.mxu0 0.0
        %702 = vmatpush.msra.mxu0 0.0
        %703 = vmatpush.msra.mxu0 0.0
        %704 = vmatpush.msra.mxu0 0.0
        %705 = vmatpush.msra.mxu0 0.0
        %706 = vmatpush.msra.mxu0 0.0
        %707 = vmatpush.msra.mxu0 0.0
        %708 = vmatpush.msra.mxu0 %v688
        %709 = vmatmul.f32.gmra.mxu0 %v691
        %v710 = vpop.f32.mrf.mxu0
        %v711 = vadd.f32 0.0, %v710
        %712 = vdwg.mxu0
        %713 = vrot.lane.b32.xlu0 %v509, 104
        %v714 = vpop.permute.xlu0 %713
        %715 = vrot.lane.b32.xlu0 %v509, 72
        %v716 = vpop.permute.xlu0 %715
        %v717 = vsel %vm518, %v714, 0
        %v719 = vsel %vm518, %v716, 0
        %721 = vmatpush.xpose.msra.mxu0 0.0
        %722 = vmatpush.xpose.msra.mxu0 0.0
        %723 = vmatpush.xpose.msra.mxu0 0.0
        %724 = vmatpush.xpose.msra.mxu0 0.0
        %725 = vmatpush.xpose.msra.mxu0 0.0
        %726 = vmatpush.xpose.msra.mxu0 0.0
        %727 = vmatpush.xpose.msra.mxu0 0.0
        %728 = vmatpush.xpose.msra.mxu0 0.0
        %729 = vmatpush.xpose.msra.mxu0 0.0
        %730 = vmatpush.xpose.msra.mxu0 0.0
        %731 = vmatpush.xpose.msra.mxu0 0.0
        %732 = vmatpush.xpose.msra.mxu0 0.0
        %733 = vmatpush.xpose.msra.mxu0 0.0
        %734 = vmatpush.xpose.msra.mxu0 0.0
        %735 = vmatpush.xpose.msra.mxu0 0.0
        %736 = vmatpush.xpose.msra.mxu0 %v719
        %737 = vmatmul.f32.gmra.mxu0 %v717
        %v738 = vpop.f32.mrf.mxu0
        %v739 = vadd.f32 0.0, %v738
        %740 = vdwg.mxu0
        %v741 = vmul.f32 %v739, 0.17677669
        %v742 = vsel %vm518, %v741, -inf
        %743 = vmax.xlane.f32.xlu0 %v742
        %v744 = vpop.xlane.xlu0 %743
        %v745 = vsub.f32 %v741, %v744
        %v746 = vmul.f32 %v745, 1.442695
        %v747 = vpow.pop %v746
        %v748 = vsel %vm518, %v747, 0.0
        %749 = vadd.xlane.f32.xlu0 %v748
        %v750 = vpop.xlane.xlu0 %749
        %v751 = vrcp.pop %v750
        %v752 = vmul.f32 %v747, %v751
        %753 = vrot.lane.b32.xlu0 %v509, 40
        %v754 = vpop.permute.xlu0 %753
        %v757 = vsel %vm518, %v752, 0
        %759 = vmatpush.msra.mxu0 0.0
        %760 = vmatpush.msra.mxu0 0.0
        %761 = vmatpush.msra.mxu0 0.0
        %762 = vmatpush.msra.mxu0 0.0
        %763 = vmatpush.msra.mxu0 0.0
        %764 = vmatpush.msra.mxu0 0.0
        %765 = vmatpush.msra.mxu0 0.0
        %766 = vmatpush.msra.mxu0 0.0
        %767 = vmatpush.msra.mxu0 0.0
        %768 = vmatpush.msra.mxu0 0.0
        %769 = vmatpush.msra.mxu0 0.0
        %770 = vmatpush.msra.mxu0 0.0
        %771 = vmatpush.msra.mxu0 0.0
        %772 = vmatpush.msra.mxu0 0.0
        %773 = vmatpush.msra.mxu0 0.0
        %774 = vmatpush.msra.mxu0 %v754
        %775 = vmatmul.f32.gmra.mxu0 %v757
        %v776 = vpop.f32.mrf.mxu0
        %v777 = vadd.f32 0.0, %v776
        %778 = vdwg.mxu0
        %780 = vrot.lane.b32.xlu0 %v645, 8
        %v781 = vpop.permute.xlu0 %780
        %784 = vrot.lane.b32.xlu0 %v711, 16
        %v785 = vpop.permute.xlu0 %784
        %788 = vrot.lane.b32.xlu0 %v777, 24
        %v789 = vpop.permute.xlu0 %788
        %v791 = vsel %vm518, %v579, %v781
        %vm792 = vcmask 130048
        %v793 = vsel %vm792, %v791, %v785
        %vm794 = vcmask 195584
        %v795 = vsel %vm794, %v793, %v789
        %v797 = vsel %vm487, %v795, 0
        %799 = vmatpush.msra.mxu0 0.0
        %800 = vmatpush.msra.mxu0 0.0
        %801 = vmatpush.msra.mxu0 0.0
        %802 = vmatpush.msra.mxu0 0.0
        %803 = vmatpush.msra.mxu0 0.0
        %804 = vmatpush.msra.mxu0 0.0
        %805 = vmatpush.msra.mxu0 0.0
        %806 = vmatpush.msra.mxu0 0.0
        %807 = vmatpush.msra.mxu0 0.0
        %808 = vmatpush.msra.mxu0 0.0
        %809 = vmatpush.msra.mxu0 0.0
        %810 = vmatpush.msra.mxu0 0.0
        %811 = vmatpush.msra.mxu0 %v514
        %812 = vmatpush.msra.mxu0 %v513
        %813 = vmatpush.msra.mxu0 %v512
        %814 = vmatpush.msra.mxu0 %v511
        %815 = vmatmul.f32.gmra.mxu0 %v797
        %v816 = vpop.f32.mrf.mxu0
        %v817 = vadd.f32 %v480, %v816
        %818 = vdwg.mxu0
        %v819 = vsel %vm487, %v817, 0.0
        %820 = vadd.xlane.f32.xlu0 %v819
        %v821 = vpop.xlane.xlu0 %820
        %v822 = vrcp.pop 32.0
        %v823 = vmul.f32 32.0, %v822
        %v824 = vsub.f32 1.0, %v823
        %v825 = vmul.f32 %v822, %v824
        %v826 = vadd.f32 %v822, %v825
        %vm827 = vweird.f32 %v822
        %v828 = vsel %vm827, %v822, %v826
        %v829 = vmul.f32 %v821, %v828
        %v830 = vsub.f32 %v817, %v829
        %v831 = vmul.f32 %v830, %v830
        %v832 = vsel %vm487, %v831, 0.0
        %833 = vadd.xlane.f32.xlu0 %v832
        %v834 = vpop.xlane.xlu0 %833
        %v835 = vmul.f32 %v834, %v828
        %v836 = vadd.f32 %v835, 1e-05
        %v837 = vrsqrt.pop %v836
        %v838 = vmul.f32 %v837, %v836
        %v839 = vmul.f32 %v838, %v837
        %v840 = vmul.f32 0.5, %v839
        %v841 = vsub.f32 1.5, %v840
        %v842 = vmul.f32 %v837, %v841
        %vm843 = vweird.f32 %v836
        %vm844 = vweird.f32 %v837
        %vm845 = vmor %vm843, %vm844
        %v846 = vsel %vm845, %v837, %v842
        %v847 = vmul.f32 %v830, %v846
        %v848 = vperm.slane %v482, 0
        %v849 = vmul.f32 %v847, %v848
        %v850 = vperm.slane %v482, 1
        %v851 = vadd.f32 %v849, %v850
        %v852 = vld [vmem:[%s4] sm:$0xff]
        %v853 = vld [vmem:[%s4 + $0x8] sm:$0xff]
        %v854 = vld [vmem:[%s4 + $0x10] sm:$0xff]
        %v855 = vld [vmem:[%s4 + $0x18] sm:$0xff]
        %v857 = vsel %vm487, %v851, 0
        %859 = vmatpush.msra.mxu0 0.0
        %860 = vmatpush.msra.mxu0 0.0
        %861 = vmatpush.msra.mxu0 0.0
        %862 = vmatpush.msra.mxu0 0.0
        %863 = vmatpush.msra.mxu0 0.0
        %864 = vmatpush.msra.mxu0 0.0
        %865 = vmatpush.msra.mxu0 0.0
        %866 = vmatpush.msra.mxu0 0.0
        %867 = vmatpush.msra.mxu0 0.0
        %868 = vmatpush.msra.mxu0 0.0
        %869 = vmatpush.msra.mxu0 0.0
        %870 = vmatpush.msra.mxu0 0.0
        %871 = vmatpush.msra.mxu0 %v855
        %872 = vmatpush.msra.mxu0 %v854
        %873 = vmatpush.msra.mxu0 %v853
        %874 = vmatpush.msra.mxu0 %v852
        %875 = vmatmul.f32.gmra.mxu0 %v857
        %v876 = vpop.f32.mrf.mxu0
        %v877 = vadd.f32 0.0, %v876
        %878 = vdwg.mxu0
        %v879 = vld [vmem:[%s5] sm:$0xff]
        %v880 = vld [vmem:[%s5 + $0x8] sm:$0xff]
        %v881 = vld [vmem:[%s5 + $0x10] sm:$0xff]
        %v882 = vld [vmem:[%s5 + $0x18] sm:$0xff]
        %v884 = vsel %vm487, %v481, 0
        %886 = vmatpush.msra.mxu0 0.0
        %887 = vmatpush.msra.mxu0 0.0
        %888 = vmatpush.msra.mxu0 0.0
        %889 = vmatpush.msra.mxu0 0.0
        %890 = vmatpush.msra.mxu0 0.0
        %891 = vmatpush.msra.mxu0 0.0
        %892 = vmatpush.msra.mxu0 0.0
        %893 = vmatpush.msra.mxu0 0.0
        %894 = vmatpush.msra.mxu0 0.0
        %895 = vmatpush.msra.mxu0 0.0
        %896 = vmatpush.msra.mxu0 0.0
        %897 = vmatpush.msra.mxu0 0.0
        %898 = vmatpush.msra.mxu0 %v882
        %899 = vmatpush.msra.mxu0 %v881
        %900 = vmatpush.msra.mxu0 %v880
        %901 = vmatpush.msra.mxu0 %v879
        %902 = vmatmul.f32.gmra.mxu0 %v884
        %v903 = vpop.f32.mrf.mxu0
        %v904 = vadd.f32 0.0, %v903
        %905 = vdwg.mxu0
        %v906 = vld [vmem:[%s6] sm:$0xff]
        %v907 = vld [vmem:[%s6 + $0x8] sm:$0xff]
        %v908 = vld [vmem:[%s6 + $0x10] sm:$0xff]
        %v909 = vld [vmem:[%s6 + $0x18] sm:$0xff]
        %v911 = vsel %vm518, %v877, 0
        %v914 = vsel %vm518, %v904, 0
        %916 = vmatpush.xpose.msra.mxu0 0.0
        %917 = vmatpush.xpose.msra.mxu0 0.0
        %918 = vmatpush.xpose.msra.mxu0 0.0
        %919 = vmatpush.xpose.msra.mxu0 0.0
        %920 = vmatpush.xpose.msra.mxu0 0.0
        %921 = vmatpush.xpose.msra.mxu0 0.0
        %922 = vmatpush.xpose.msra.mxu0 0.0
        %923 = vmatpush.xpose.msra.mxu0 0.0
        %924 = vmatpush.xpose.msra.mxu0 0.0
        %925 = vmatpush.xpose.msra.mxu0 0.0
        %926 = vmatpush.xpose.msra.mxu0 0.0
        %927 = vmatpush.xpose.msra.mxu0 0.0
        %928 = vmatpush.xpose.msra.mxu0 0.0
        %929 = vmatpush.xpose.msra.mxu0 0.0
        %930 = vmatpush.xpose.msra.mxu0 0.0
        %931 = vmatpush.xpose.msra.mxu0 %v914
        %932 = vmatmul.f32.gmra.mxu0 %v911
        %v933 = vpop.f32.mrf.mxu0
        %v934 = vadd.f32 0.0, %v933
        %935 = vdwg.mxu0
        %v936 = vmul.f32 %v934, 0.17677669
        %v937 = vsel %vm518, %v936, -inf
        %938 = vmax.xlane.f32.xlu0 %v937
        %v939 = vpop.xlane.xlu0 %938
        %v940 = vsub.f32 %v936, %v939
        %v941 = vmul.f32 %v940, 1.442695
        %v942 = vpow.pop %v941
        %v943 = vsel %vm518, %v942, 0.0
        %944 = vadd.xlane.f32.xlu0 %v943
        %v945 = vpop.xlane.xlu0 %944
        %v946 = vrcp.pop %v945
        %v947 = vmul.f32 %v942, %v946
        %948 = vrot.lane.b32.xlu0 %v904, 96
        %v949 = vpop.permute.xlu0 %948
        %v952 = vsel %vm518, %v947, 0
        %954 = vmatpush.msra.mxu0 0.0
        %955 = vmatpush.msra.mxu0 0.0
        %956 = vmatpush.msra.mxu0 0.0
        %957 = vmatpush.msra.mxu0 0.0
        %958 = vmatpush.msra.mxu0 0.0
        %959 = vmatpush.msra.mxu0 0.0
        %960 = vmatpush.msra.mxu0 0.0
        %961 = vmatpush.msra.mxu0 0.0
        %962 = vmatpush.msra.mxu0 0.0
        %963 = vmatpush.msra.mxu0 0.0
        %964 = vmatpush.msra.mxu0 0.0
        %965 = vmatpush.msra.mxu0 0.0
        %966 = vmatpush.msra.mxu0 0.0
        %967 = vmatpush.msra.mxu0 0.0
        %968 = vmatpush.msra.mxu0 0.0
        %969 = vmatpush.msra.mxu0 %v949
        %970 = vmatmul.f32.gmra.mxu0 %v952
        %v971 = vpop.f32.mrf.mxu0
        %v972 = vadd.f32 0.0, %v971
        %973 = vdwg.mxu0
        %974 = vrot.lane.b32.xlu0 %v877, 120
        %v975 = vpop.permute.xlu0 %974
        %976 = vrot.lane.b32.xlu0 %v904, 120
        %v977 = vpop.permute.xlu0 %976
        %v978 = vsel %vm518, %v975, 0
        %v980 = vsel %vm518, %v977, 0
        %982 = vmatpush.xpose.msra.mxu0 0.0
        %983 = vmatpush.xpose.msra.mxu0 0.0
        %984 = vmatpush.xpose.msra.mxu0 0.0
        %985 = vmatpush.xpose.msra.mxu0 0.0
        %986 = vmatpush.xpose.msra.mxu0 0.0
        %987 = vmatpush.xpose.msra.mxu0 0.0
        %988 = vmatpush.xpose.msra.mxu0 0.0
        %989 = vmatpush.xpose.msra.mxu0 0.0
        %990 = vmatpush.xpose.msra.mxu0 0.0
        %991 = vmatpush.xpose.msra.mxu0 0.0
        %992 = vmatpush.xpose.msra.mxu0 0.0
        %993 = vmatpush.xpose.msra.mxu0 0.0
        %994 = vmatpush.xpose.msra.mxu0 0.0
        %995 = vmatpush.xpose.msra.mxu0 0.0
        %996 = vmatpush.xpose.msra.mxu0 0.0
        %997 = vmatpush.xpose.msra.mxu0 %v980
        %998 = vmatmul.f32.gmra.mxu0 %v978
        %v999 = vpop.f32.mrf.mxu0
        %v1000 = vadd.f32 0.0, %v999
        %1001 = vdwg.mxu0
        %v1002 = vmul.f32 %v1000, 0.17677669
        %v1003 = vsel %vm518, %v1002, -inf
        %1004 = vmax.xlane.f32.xlu0 %v1003
        %v1005 = vpop.xlane.xlu0 %1004
        %v1006 = vsub.f32 %v1002, %v1005
        %v1007 = vmul.f32 %v1006, 1.442695
        %v1008 = vpow.pop %v1007
        %v1009 = vsel %vm518, %v1008, 0.0
        %1010 = vadd.xlane.f32.xlu0 %v1009
        %v1011 = vpop.xlane.xlu0 %1010
        %v1012 = vrcp.pop %v1011
        %v1013 = vmul.f32 %v1008, %v1012
        %1014 = vrot.lane.b32.xlu0 %v904, 88
        %v1015 = vpop.permute.xlu0 %1014
        %v1018 = vsel %vm518, %v1013, 0
        %1020 = vmatpush.msra.mxu0 0.0
        %1021 = vmatpush.msra.mxu0 0.0
        %1022 = vmatpush.msra.mxu0 0.0
        %1023 = vmatpush.msra.mxu0 0.0
        %1024 = vmatpush.msra.mxu0 0.0
        %1025 = vmatpush.msra.mxu0 0.0
        %1026 = vmatpush.msra.mxu0 0.0
        %1027 = vmatpush.msra.mxu0 0.0
        %1028 = vmatpush.msra.mxu0 0.0
        %1029 = vmatpush.msra.mxu0 0.0
        %1030 = vmatpush.msra.mxu0 0.0
        %1031 = vmatpush.msra.mxu0 0.0
        %1032 = vmatpush.msra.mxu0 0.0
        %1033 = vmatpush.msra.mxu0 0.0
        %1034 = vmatpush.msra.mxu0 0.0
        %1035 = vmatpush.msra.mxu0 %v1015
        %1036 = vmatmul.f32.gmra.mxu0 %v1018
        %v1037 = vpop.f32.mrf.mxu0
        %v1038 = vadd.f32 0.0, %v1037
        %1039 = vdwg.mxu0
        %1040 = vrot.lane.b32.xlu0 %v877, 112
        %v1041 = vpop.permute.xlu0 %1040
        %1042 = vrot.lane.b32.xlu0 %v904, 112
        %v1043 = vpop.permute.xlu0 %1042
        %v1044 = vsel %vm518, %v1041, 0
        %v1046 = vsel %vm518, %v1043, 0
        %1048 = vmatpush.xpose.msra.mxu0 0.0
        %1049 = vmatpush.xpose.msra.mxu0 0.0
        %1050 = vmatpush.xpose.msra.mxu0 0.0
        %1051 = vmatpush.xpose.msra.mxu0 0.0
        %1052 = vmatpush.xpose.msra.mxu0 0.0
        %1053 = vmatpush.xpose.msra.mxu0 0.0
        %1054 = vmatpush.xpose.msra.mxu0 0.0
        %1055 = vmatpush.xpose.msra.mxu0 0.0
        %1056 = vmatpush.xpose.msra.mxu0 0.0
        %1057 = vmatpush.xpose.msra.mxu0 0.0
        %1058 = vmatpush.xpose.msra.mxu0 0.0
        %1059 = vmatpush.xpose.msra.mxu0 0.0
        %1060 = vmatpush.xpose.msra.mxu0 0.0
        %1061 = vmatpush.xpose.msra.mxu0 0.0
        %1062 = vmatpush.xpose.msra.mxu0 0.0
        %1063 = vmatpush.xpose.msra.mxu0 %v1046
        %1064 = vmatmul.f32.gmra.mxu0 %v1044
        %v1065 = vpop.f32.mrf.mxu0
        %v1066 = vadd.f32 0.0, %v1065
        %1067 = vdwg.mxu0
        %v1068 = vmul.f32 %v1066, 0.17677669
        %v1069 = vsel %vm518, %v1068, -inf
        %1070 = vmax.xlane.f32.xlu0 %v1069
        %v1071 = vpop.xlane.xlu0 %1070
        %v1072 = vsub.f32 %v1068, %v1071
        %v1073 = vmul.f32 %v1072, 1.442695
        %v1074 = vpow.pop %v1073
        %v1075 = vsel %vm518, %v1074, 0.0
        %1076 = vadd.xlane.f32.xlu0 %v1075
        %v1077 = vpop.xlane.xlu0 %1076
        %v1078 = vrcp.pop %v1077
        %v1079 = vmul.f32 %v1074, %v1078
        %1080 = vrot.lane.b32.xlu0 %v904, 80
        %v1081 = vpop.permute.xlu0 %1080
        %v1084 = vsel %vm518, %v1079, 0
        %1086 = vmatpush.msra.mxu0 0.0
        %1087 = vmatpush.msra.mxu0 0.0
        %1088 = vmatpush.msra.mxu0 0.0
        %1089 = vmatpush.msra.mxu0 0.0
        %1090 = vmatpush.msra.mxu0 0.0
        %1091 = vmatpush.msra.mxu0 0.0
        %1092 = vmatpush.msra.mxu0 0.0
        %1093 = vmatpush.msra.mxu0 0.0
        %1094 = vmatpush.msra.mxu0 0.0
        %1095 = vmatpush.msra.mxu0 0.0
        %1096 = vmatpush.msra.mxu0 0.0
        %1097 = vmatpush.msra.mxu0 0.0
        %1098 = vmatpush.msra.mxu0 0.0
        %1099 = vmatpush.msra.mxu0 0.0
        %1100 = vmatpush.msra.mxu0 0.0
        %1101 = vmatpush.msra.mxu0 %v1081
        %1102 = vmatmul.f32.gmra.mxu0 %v1084
        %v1103 = vpop.f32.mrf.mxu0
        %v1104 = vadd.f32 0.0, %v1103
        %1105 = vdwg.mxu0
        %1106 = vrot.lane.b32.xlu0 %v877, 104
        %v1107 = vpop.permute.xlu0 %1106
        %1108 = vrot.lane.b32.xlu0 %v904, 104
        %v1109 = vpop.permute.xlu0 %1108
        %v1110 = vsel %vm518, %v1107, 0
        %v1112 = vsel %vm518, %v1109, 0
        %1114 = vmatpush.xpose.msra.mxu0 0.0
        %1115 = vmatpush.xpose.msra.mxu0 0.0
        %1116 = vmatpush.xpose.msra.mxu0 0.0
        %1117 = vmatpush.xpose.msra.mxu0 0.0
        %1118 = vmatpush.xpose.msra.mxu0 0.0
        %1119 = vmatpush.xpose.msra.mxu0 0.0
        %1120 = vmatpush.xpose.msra.mxu0 0.0
        %1121 = vmatpush.xpose.msra.mxu0 0.0
        %1122 = vmatpush.xpose.msra.mxu0 0.0
        %1123 = vmatpush.xpose.msra.mxu0 0.0
        %1124 = vmatpush.xpose.msra.mxu0 0.0
        %1125 = vmatpush.xpose.msra.mxu0 0.0
        %1126 = vmatpush.xpose.msra.mxu0 0.0
        %1127 = vmatpush.xpose.msra.mxu0 0.0
        %1128 = vmatpush.xpose.msra.mxu0 0.0
        %1129 = vmatpush.xpose.msra.mxu0 %v1112
        %1130 = vmatmul.f32.gmra.mxu0 %v1110
        %v1131 = vpop.f32.mrf.mxu0
        %v1132 = vadd.f32 0.0, %v1131
        %1133 = vdwg.mxu0
        %v1134 = vmul.f32 %v1132, 0.17677669
        %v1135 = vsel %vm518, %v1134, -inf
        %1136 = vmax.xlane.f32.xlu0 %v1135
        %v1137 = vpop.xlane.xlu0 %1136
        %v1138 = vsub.f32 %v1134, %v1137
        %v1139 = vmul.f32 %v1138, 1.442695
        %v1140 = vpow.pop %v1139
        %v1141 = vsel %vm518, %v1140, 0.0
        %1142 = vadd.xlane.f32.xlu0 %v1141
        %v1143 = vpop.xlane.xlu0 %1142
        %v1144 = vrcp.pop %v1143
        %v1145 = vmul.f32 %v1140, %v1144
        %1146 = vrot.lane.b32.xlu0 %v904, 72
        %v1147 = vpop.permute.xlu0 %1146
        %v1150 = vsel %vm518, %v1145, 0
        %1152 = vmatpush.msra.mxu0 0.0
        %1153 = vmatpush.msra.mxu0 0.0
        %1154 = vmatpush.msra.mxu0 0.0
        %1155 = vmatpush.msra.mxu0 0.0
        %1156 = vmatpush.msra.mxu0 0.0
        %1157 = vmatpush.msra.mxu0 0.0
        %1158 = vmatpush.msra.mxu0 0.0
        %1159 = vmatpush.msra.mxu0 0.0
        %1160 = vmatpush.msra.mxu0 0.0
        %1161 = vmatpush.msra.mxu0 0.0
        %1162 = vmatpush.msra.mxu0 0.0
        %1163 = vmatpush.msra.mxu0 0.0
        %1164 = vmatpush.msra.mxu0 0.0
        %1165 = vmatpush.msra.mxu0 0.0
        %1166 = vmatpush.msra.mxu0 0.0
        %1167 = vmatpush.msra.mxu0 %v1147
        %1168 = vmatmul.f32.gmra.mxu0 %v1150
        %v1169 = vpop.f32.mrf.mxu0
        %v1170 = vadd.f32 0.0, %v1169
        %1171 = vdwg.mxu0
        %1173 = vrot.lane.b32.xlu0 %v1038, 8
        %v1174 = vpop.permute.xlu0 %1173
        %1177 = vrot.lane.b32.xlu0 %v1104, 16
        %v1178 = vpop.permute.xlu0 %1177
        %1181 = vrot.lane.b32.xlu0 %v1170, 24
        %v1182 = vpop.permute.xlu0 %1181
        %v1184 = vsel %vm518, %v972, %v1174
        %v1185 = vsel %vm792, %v1184, %v1178
        %v1186 = vsel %vm794, %v1185, %v1182
        %v1188 = vsel %vm487, %v1186, 0
        %1190 = vmatpush.msra.mxu0 0.0
        %1191 = vmatpush.msra.mxu0 0.0
        %1192 = vmatpush.msra.mxu0 0.0
        %1193 = vmatpush.msra.mxu0 0.0
        %1194 = vmatpush.msra.mxu0 0.0
        %1195 = vmatpush.msra.mxu0 0.0
        %1196 = vmatpush.msra.mxu0 0.0
        %1197 = vmatpush.msra.mxu0 0.0
        %1198 = vmatpush.msra.mxu0 0.0
        %1199 = vmatpush.msra.mxu0 0.0
        %1200 = vmatpush.msra.mxu0 0.0
        %1201 = vmatpush.msra.mxu0 0.0
        %1202 = vmatpush.msra.mxu0 %v909
        %1203 = vmatpush.msra.mxu0 %v908
        %1204 = vmatpush.msra.mxu0 %v907
        %1205 = vmatpush.msra.mxu0 %v906
        %1206 = vmatmul.f32.gmra.mxu0 %v1188
        %v1207 = vpop.f32.mrf.mxu0
        %v1208 = vadd.f32 0.0, %v1207
        %1209 = vdwg.mxu0
        %v1210 = vadd.f32 %v851, %v1208
        %v1211 = vsel %vm487, %v1210, 0.0
        %1212 = vadd.xlane.f32.xlu0 %v1211
        %v1213 = vpop.xlane.xlu0 %1212
        %v1214 = vmul.f32 %v1213, %v828
        %v1215 = vsub.f32 %v1210, %v1214
        %v1216 = vmul.f32 %v1215, %v1215
        %v1217 = vsel %vm487, %v1216, 0.0
        %1218 = vadd.xlane.f32.xlu0 %v1217
        %v1219 = vpop.xlane.xlu0 %1218
        %v1220 = vmul.f32 %v1219, %v828
        %v1221 = vadd.f32 %v1220, 1e-05
        %v1222 = vrsqrt.pop %v1221
        %v1223 = vmul.f32 %v1222, %v1221
        %v1224 = vmul.f32 %v1223, %v1222
        %v1225 = vmul.f32 0.5, %v1224
        %v1226 = vsub.f32 1.5, %v1225
        %v1227 = vmul.f32 %v1222, %v1226
        %vm1228 = vweird.f32 %v1221
        %vm1229 = vweird.f32 %v1222
        %vm1230 = vmor %vm1228, %vm1229
        %v1231 = vsel %vm1230, %v1222, %v1227
        %v1232 = vmul.f32 %v1215, %v1231
        %v1233 = vperm.slane %v482, 2
        %v1234 = vmul.f32 %v1232, %v1233
        %v1235 = vperm.slane %v482, 3
        %v1236 = vadd.f32 %v1234, %v1235
        %v1237 = vld [vmem:[%s8] sm:$0xff]
        %v1238 = vld [vmem:[%s8 + $0x8] sm:$0xff]
        %v1239 = vld [vmem:[%s8 + $0x10] sm:$0xff]
        %v1240 = vld [vmem:[%s8 + $0x18] sm:$0xff]
        %v1241 = vld [vmem:[%s9] sm:$0x1]
        %v1243 = vperm.slane %v1241, 0
        %v1246 = vsel %vm487, %v1236, 0
        %1248 = vmatpush.msra.mxu0 0.0
        %1249 = vmatpush.msra.mxu0 0.0
        %1250 = vmatpush.msra.mxu0 0.0
        %1251 = vmatpush.msra.mxu0 0.0
        %1252 = vmatpush.msra.mxu0 0.0
        %1253 = vmatpush.msra.mxu0 0.0
        %1254 = vmatpush.msra.mxu0 0.0
        %1255 = vmatpush.msra.mxu0 0.0
        %1256 = vmatpush.msra.mxu0 0.0
        %1257 = vmatpush.msra.mxu0 0.0
        %1258 = vmatpush.msra.mxu0 0.0
        %1259 = vmatpush.msra.mxu0 0.0
        %1260 = vmatpush.msra.mxu0 %v1240
        %1261 = vmatpush.msra.mxu0 %v1239
        %1262 = vmatpush.msra.mxu0 %v1238
        %1263 = vmatpush.msra.mxu0 %v1237
        %1264 = vmatmul.f32.gmra.mxu0 %v1246
        %v1265 = vpop.f32.mrf.mxu0
        %v1266 = vadd.f32 %v1243, %v1265
        %1267 = vdwg.mxu0
        %v1268 = vmax.f32 %v1266, 0.0
        %v1269 = vld [vmem:[%s10] sm:$0xff]
        %v1270 = vld [vmem:[%s10 + $0x8] sm:$0xff]
        %v1271 = vld [vmem:[%s10 + $0x10] sm:$0xff]
        %v1272 = vld [vmem:[%s10 + $0x18] sm:$0xff]
        %v1273 = vld [vmem:[%s10 + $0x20] sm:$0xff]
        %v1274 = vld [vmem:[%s10 + $0x28] sm:$0xff]
        %v1275 = vld [vmem:[%s10 + $0x30] sm:$0xff]
        %v1276 = vld [vmem:[%s10 + $0x38] sm:$0xff]
        %v1277 = vld [vmem:[%s11] sm:$0x1]
        %v1279 = vperm.slane %v1277, 0
        %vm1281 = vcmask 523264
        %v1283 = vsel %vm1281, %v1268, 0
        %1285 = vmatpush.msra.mxu0 0.0
        %1286 = vmatpush.msra.mxu0 0.0
        %1287 = vmatpush.msra.mxu0 0.0
        %1288 = vmatpush.msra.mxu0 0.0
        %1289 = vmatpush.msra.mxu0 0.0
        %1290 = vmatpush.msra.mxu0 0.0
        %1291 = vmatpush.msra.mxu0 0.0
        %1292 = vmatpush.msra.mxu0 0.0
        %1293 = vmatpush.msra.mxu0 %v1276
        %1294 = vmatpush.msra.mxu0 %v1275
        %1295 = vmatpush.msra.mxu0 %v1274
        %1296 = vmatpush.msra.mxu0 %v1273
        %1297 = vmatpush.msra.mxu0 %v1272
        %1298 = vmatpush.msra.mxu0 %v1271
        %1299 = vmatpush.msra.mxu0 %v1270
        %1300 = vmatpush.msra.mxu0 %v1269
        %1301 = vmatmul.f32.gmra.mxu0 %v1283
        %v1302 = vpop.f32.mrf.mxu0
        %v1303 = vadd.f32 %v1279, %v1302
        %1304 = vdwg.mxu0
        %v1305 = vadd.f32 %v1303, %v1236
        %v1306 = vsel %vm487, %v1305, 0.0
        %1307 = vadd.xlane.f32.xlu0 %v1306
        %v1308 = vpop.xlane.xlu0 %1307
        %v1309 = vmul.f32 %v1308, %v828
        %v1310 = vsub.f32 %v1305, %v1309
        %v1311 = vmul.f32 %v1310, %v1310
        %v1312 = vsel %vm487, %v1311, 0.0
        %1313 = vadd.xlane.f32.xlu0 %v1312
        %v1314 = vpop.xlane.xlu0 %1313
        %v1315 = vmul.f32 %v1314, %v828
        %v1316 = vadd.f32 %v1315, 1e-05
        %v1317 = vrsqrt.pop %v1316
        %v1318 = vmul.f32 %v1317, %v1316
        %v1319 = vmul.f32 %v1318, %v1317
        %v1320 = vmul.f32 0.5, %v1319
        %v1321 = vsub.f32 1.5, %v1320
        %v1322 = vmul.f32 %v1317, %v1321
        %vm1323 = vweird.f32 %v1316
        %vm1324 = vweird.f32 %v1317
        %vm1325 = vmor %vm1323, %vm1324
        %v1326 = vsel %vm1325, %v1317, %v1322
        %v1327 = vmul.f32 %v1310, %v1326
        %v1328 = vperm.slane %v482, 4
        %v1329 = vmul.f32 %v1327, %v1328
        %v1330 = vperm.slane %v482, 5
        %v1331 = vadd.f32 %v1329, %v1330
        %s1332 = scalar_lea.vmem %s7, 8
        %v1333 = vld [vmem:[%s1332] sm:$0x3f]
        %s1334 = scalar_lea.vmem %s2, 32
        %v1335 = vld [vmem:[%s1334] sm:$0xff]
        %v1336 = vld [vmem:[%s1334 + $0x8] sm:$0xff]
        %v1337 = vld [vmem:[%s1334 + $0x10] sm:$0xff]
        %v1338 = vld [vmem:[%s1334 + $0x18] sm:$0xff]
        %v1340 = vsel %vm487, %v1331, 0
        %1342 = vmatpush.msra.mxu0 0.0
        %1343 = vmatpush.msra.mxu0 0.0
        %1344 = vmatpush.msra.mxu0 0.0
        %1345 = vmatpush.msra.mxu0 0.0
        %1346 = vmatpush.msra.mxu0 0.0
        %1347 = vmatpush.msra.mxu0 0.0
        %1348 = vmatpush.msra.mxu0 0.0
        %1349 = vmatpush.msra.mxu0 0.0
        %1350 = vmatpush.msra.mxu0 0.0
        %1351 = vmatpush.msra.mxu0 0.0
        %1352 = vmatpush.msra.mxu0 0.0
        %1353 = vmatpush.msra.mxu0 0.0
        %1354 = vmatpush.msra.mxu0 %v1338
        %1355 = vmatpush.msra.mxu0 %v1337
        %1356 = vmatpush.msra.mxu0 %v1336
        %1357 = vmatpush.msra.mxu0 %v1335
        %1358 = vmatmul.f32.gmra.mxu0 %v1340
        %v1359 = vpop.f32.mrf.mxu0
        %v1360 = vadd.f32 0.0, %v1359
        %1361 = vdwg.mxu0
        %s1362 = scalar_lea.vmem %s3, 32
        %v1363 = vld [vmem:[%s1362] sm:$0xff]
        %v1364 = vld [vmem:[%s1362 + $0x8] sm:$0xff]
        %v1365 = vld [vmem:[%s1362 + $0x10] sm:$0xff]
        %v1366 = vld [vmem:[%s1362 + $0x18] sm:$0xff]
        %1368 = vrot.lane.b32.xlu0 %v1360, 96
        %v1369 = vpop.permute.xlu0 %1368
        %v1370 = vsel %vm518, %v1360, 0
        %v1372 = vsel %vm518, %v1369, 0
        %1374 = vmatpush.xpose.msra.mxu0 0.0
        %1375 = vmatpush.xpose.msra.mxu0 0.0
        %1376 = vmatpush.xpose.msra.mxu0 0.0
        %1377 = vmatpush.xpose.msra.mxu0 0.0
        %1378 = vmatpush.xpose.msra.mxu0 0.0
        %1379 = vmatpush.xpose.msra.mxu0 0.0
        %1380 = vmatpush.xpose.msra.mxu0 0.0
        %1381 = vmatpush.xpose.msra.mxu0 0.0
        %1382 = vmatpush.xpose.msra.mxu0 0.0
        %1383 = vmatpush.xpose.msra.mxu0 0.0
        %1384 = vmatpush.xpose.msra.mxu0 0.0
        %1385 = vmatpush.xpose.msra.mxu0 0.0
        %1386 = vmatpush.xpose.msra.mxu0 0.0
        %1387 = vmatpush.xpose.msra.mxu0 0.0
        %1388 = vmatpush.xpose.msra.mxu0 0.0
        %1389 = vmatpush.xpose.msra.mxu0 %v1372
        %1390 = vmatmul.f32.gmra.mxu0 %v1370
        %v1391 = vpop.f32.mrf.mxu0
        %v1392 = vadd.f32 0.0, %v1391
        %1393 = vdwg.mxu0
        %v1394 = vmul.f32 %v1392, 0.17677669
        %v1395 = vsel %vm518, %v1394, -inf
        %1396 = vmax.xlane.f32.xlu0 %v1395
        %v1397 = vpop.xlane.xlu0 %1396
        %v1398 = vsub.f32 %v1394, %v1397
        %v1399 = vmul.f32 %v1398, 1.442695
        %v1400 = vpow.pop %v1399
        %v1401 = vsel %vm518, %v1400, 0.0
        %1402 = vadd.xlane.f32.xlu0 %v1401
        %v1403 = vpop.xlane.xlu0 %1402
        %v1404 = vrcp.pop %v1403
        %v1405 = vmul.f32 %v1400, %v1404
        %1406 = vrot.lane.b32.xlu0 %v1360, 64
        %v1407 = vpop.permute.xlu0 %1406
        %v1410 = vsel %vm518, %v1405, 0
        %1412 = vmatpush.msra.mxu0 0.0
        %1413 = vmatpush.msra.mxu0 0.0
        %1414 = vmatpush.msra.mxu0 0.0
        %1415 = vmatpush.msra.mxu0 0.0
        %1416 = vmatpush.msra.mxu0 0.0
        %1417 = vmatpush.msra.mxu0 0.0
        %1418 = vmatpush.msra.mxu0 0.0
        %1419 = vmatpush.msra.mxu0 0.0
        %1420 = vmatpush.msra.mxu0 0.0
        %1421 = vmatpush.msra.mxu0 0.0
        %1422 = vmatpush.msra.mxu0 0.0
        %1423 = vmatpush.msra.mxu0 0.0
        %1424 = vmatpush.msra.mxu0 0.0
        %1425 = vmatpush.msra.mxu0 0.0
        %1426 = vmatpush.msra.mxu0 0.0
        %1427 = vmatpush.msra.mxu0 %v1407
        %1428 = vmatmul.f32.gmra.mxu0 %v1410
        %v1429 = vpop.f32.mrf.mxu0
        %v1430 = vadd.f32 0.0, %v1429
        %1431 = vdwg.mxu0
        %1432 = vrot.lane.b32.xlu0 %v1360, 120
        %v1433 = vpop.permute.xlu0 %1432
        %1434 = vrot.lane.b32.xlu0 %v1360, 88
        %v1435 = vpop.permute.xlu0 %1434
        %v1436 = vsel %vm518, %v1433, 0
        %v1438 = vsel %vm518, %v1435, 0
        %1440 = vmatpush.xpose.msra.mxu0 0.0
        %1441 = vmatpush.xpose.msra.mxu0 0.0
        %1442 = vmatpush.xpose.msra.mxu0 0.0
        %1443 = vmatpush.xpose.msra.mxu0 0.0
        %1444 = vmatpush.xpose.msra.mxu0 0.0
        %1445 = vmatpush.xpose.msra.mxu0 0.0
        %1446 = vmatpush.xpose.msra.mxu0 0.0
        %1447 = vmatpush.xpose.msra.mxu0 0.0
        %1448 = vmatpush.xpose.msra.mxu0 0.0
        %1449 = vmatpush.xpose.msra.mxu0 0.0
        %1450 = vmatpush.xpose.msra.mxu0 0.0
        %1451 = vmatpush.xpose.msra.mxu0 0.0
        %1452 = vmatpush.xpose.msra.mxu0 0.0
        %1453 = vmatpush.xpose.msra.mxu0 0.0
        %1454 = vmatpush.xpose.msra.mxu0 0.0
        %1455 = vmatpush.xpose.msra.mxu0 %v1438
        %1456 = vmatmul.f32.gmra.mxu0 %v1436
        %v1457 = vpop.f32.mrf.mxu0
        %v1458 = vadd.f32 0.0, %v1457
        %1459 = vdwg.mxu0
        %v1460 = vmul.f32 %v1458, 0.17677669
        %v1461 = vsel %vm518, %v1460, -inf
        %1462 = vmax.xlane.f32.xlu0 %v1461
        %v1463 = vpop.xlane.xlu0 %1462
        %v1464 = vsub.f32 %v1460, %v1463
        %v1465 = vmul.f32 %v1464, 1.442695
        %v1466 = vpow.pop %v1465
        %v1467 = vsel %vm518, %v1466, 0.0
        %1468 = vadd.xlane.f32.xlu0 %v1467
        %v1469 = vpop.xlane.xlu0 %1468
        %v1470 = vrcp.pop %v1469
        %v1471 = vmul.f32 %v1466, %v1470
        %1472 = vrot.lane.b32.xlu0 %v1360, 56
        %v1473 = vpop.permute.xlu0 %1472
        %v1476 = vsel %vm518, %v1471, 0
        %1478 = vmatpush.msra.mxu0 0.0
        %1479 = vmatpush.msra.mxu0 0.0
        %1480 = vmatpush.msra.mxu0 0.0
        %1481 = vmatpush.msra.mxu0 0.0
        %1482 = vmatpush.msra.mxu0 0.0
        %1483 = vmatpush.msra.mxu0 0.0
        %1484 = vmatpush.msra.mxu0 0.0
        %1485 = vmatpush.msra.mxu0 0.0
        %1486 = vmatpush.msra.mxu0 0.0
        %1487 = vmatpush.msra.mxu0 0.0
        %1488 = vmatpush.msra.mxu0 0.0
        %1489 = vmatpush.msra.mxu0 0.0
        %1490 = vmatpush.msra.mxu0 0.0
        %1491 = vmatpush.msra.mxu0 0.0
        %1492 = vmatpush.msra.mxu0 0.0
        %1493 = vmatpush.msra.mxu0 %v1473
        %1494 = vmatmul.f32.gmra.mxu0 %v1476
        %v1495 = vpop.f32.mrf.mxu0
        %v1496 = vadd.f32 0.0, %v1495
        %1497 = vdwg.mxu0
        %1498 = vrot.lane.b32.xlu0 %v1360, 112
        %v1499 = vpop.permute.xlu0 %1498
        %1500 = vrot.lane.b32.xlu0 %v1360, 80
        %v1501 = vpop.permute.xlu0 %1500
        %v1502 = vsel %vm518, %v1499, 0
        %v1504 = vsel %vm518, %v1501, 0
        %1506 = vmatpush.xpose.msra.mxu0 0.0
        %1507 = vmatpush.xpose.msra.mxu0 0.0
        %1508 = vmatpush.xpose.msra.mxu0 0.0
        %1509 = vmatpush.xpose.msra.mxu0 0.0
        %1510 = vmatpush.xpose.msra.mxu0 0.0
        %1511 = vmatpush.xpose.msra.mxu0 0.0
        %1512 = vmatpush.xpose.msra.mxu0 0.0
        %1513 = vmatpush.xpose.msra.mxu0 0.0
        %1514 = vmatpush.xpose.msra.mxu0 0.0
        %1515 = vmatpush.xpose.msra.mxu0 0.0
        %1516 = vmatpush.xpose.msra.mxu0 0.0
        %1517 = vmatpush.xpose.msra.mxu0 0.0
        %1518 = vmatpush.xpose.msra.mxu0 0.0
        %1519 = vmatpush.xpose.msra.mxu0 0.0
        %1520 = vmatpush.xpose.msra.mxu0 0.0
        %1521 = vmatpush.xpose.msra.mxu0 %v1504
        %1522 = vmatmul.f32.gmra.mxu0 %v1502
        %v1523 = vpop.f32.mrf.mxu0
        %v1524 = vadd.f32 0.0, %v1523
        %1525 = vdwg.mxu0
        %v1526 = vmul.f32 %v1524, 0.17677669
        %v1527 = vsel %vm518, %v1526, -inf
        %1528 = vmax.xlane.f32.xlu0 %v1527
        %v1529 = vpop.xlane.xlu0 %1528
        %v1530 = vsub.f32 %v1526, %v1529
        %v1531 = vmul.f32 %v1530, 1.442695
        %v1532 = vpow.pop %v1531
        %v1533 = vsel %vm518, %v1532, 0.0
        %1534 = vadd.xlane.f32.xlu0 %v1533
        %v1535 = vpop.xlane.xlu0 %1534
        %v1536 = vrcp.pop %v1535
        %v1537 = vmul.f32 %v1532, %v1536
        %1538 = vrot.lane.b32.xlu0 %v1360, 48
        %v1539 = vpop.permute.xlu0 %1538
        %v1542 = vsel %vm518, %v1537, 0
        %1544 = vmatpush.msra.mxu0 0.0
        %1545 = vmatpush.msra.mxu0 0.0
        %1546 = vmatpush.msra.mxu0 0.0
        %1547 = vmatpush.msra.mxu0 0.0
        %1548 = vmatpush.msra.mxu0 0.0
        %1549 = vmatpush.msra.mxu0 0.0
        %1550 = vmatpush.msra.mxu0 0.0
        %1551 = vmatpush.msra.mxu0 0.0
        %1552 = vmatpush.msra.mxu0 0.0
        %1553 = vmatpush.msra.mxu0 0.0
        %1554 = vmatpush.msra.mxu0 0.0
        %1555 = vmatpush.msra.mxu0 0.0
        %1556 = vmatpush.msra.mxu0 0.0
        %1557 = vmatpush.msra.mxu0 0.0
        %1558 = vmatpush.msra.mxu0 0.0
        %1559 = vmatpush.msra.mxu0 %v1539
        %1560 = vmatmul.f32.gmra.mxu0 %v1542
        %v1561 = vpop.f32.mrf.mxu0
        %v1562 = vadd.f32 0.0, %v1561
        %1563 = vdwg.mxu0
        %1564 = vrot.lane.b32.xlu0 %v1360, 104
        %v1565 = vpop.permute.xlu0 %1564
        %1566 = vrot.lane.b32.xlu0 %v1360, 72
        %v1567 = vpop.permute.xlu0 %1566
        %v1568 = vsel %vm518, %v1565, 0
        %v1570 = vsel %vm518, %v1567, 0
        %1572 = vmatpush.xpose.msra.mxu0 0.0
        %1573 = vmatpush.xpose.msra.mxu0 0.0
        %1574 = vmatpush.xpose.msra.mxu0 0.0
        %1575 = vmatpush.xpose.msra.mxu0 0.0
        %1576 = vmatpush.xpose.msra.mxu0 0.0
        %1577 = vmatpush.xpose.msra.mxu0 0.0
        %1578 = vmatpush.xpose.msra.mxu0 0.0
        %1579 = vmatpush.xpose.msra.mxu0 0.0
        %1580 = vmatpush.xpose.msra.mxu0 0.0
        %1581 = vmatpush.xpose.msra.mxu0 0.0
        %1582 = vmatpush.xpose.msra.mxu0 0.0
        %1583 = vmatpush.xpose.msra.mxu0 0.0
        %1584 = vmatpush.xpose.msra.mxu0 0.0
        %1585 = vmatpush.xpose.msra.mxu0 0.0
        %1586 = vmatpush.xpose.msra.mxu0 0.0
        %1587 = vmatpush.xpose.msra.mxu0 %v1570
        %1588 = vmatmul.f32.gmra.mxu0 %v1568
        %v1589 = vpop.f32.mrf.mxu0
        %v1590 = vadd.f32 0.0, %v1589
        %1591 = vdwg.mxu0
        %v1592 = vmul.f32 %v1590, 0.17677669
        %v1593 = vsel %vm518, %v1592, -inf
        %1594 = vmax.xlane.f32.xlu0 %v1593
        %v1595 = vpop.xlane.xlu0 %1594
        %v1596 = vsub.f32 %v1592, %v1595
        %v1597 = vmul.f32 %v1596, 1.442695
        %v1598 = vpow.pop %v1597
        %v1599 = vsel %vm518, %v1598, 0.0
        %1600 = vadd.xlane.f32.xlu0 %v1599
        %v1601 = vpop.xlane.xlu0 %1600
        %v1602 = vrcp.pop %v1601
        %v1603 = vmul.f32 %v1598, %v1602
        %1604 = vrot.lane.b32.xlu0 %v1360, 40
        %v1605 = vpop.permute.xlu0 %1604
        %v1608 = vsel %vm518, %v1603, 0
        %1610 = vmatpush.msra.mxu0 0.0
        %1611 = vmatpush.msra.mxu0 0.0
        %1612 = vmatpush.msra.mxu0 0.0
        %1613 = vmatpush.msra.mxu0 0.0
        %1614 = vmatpush.msra.mxu0 0.0
        %1615 = vmatpush.msra.mxu0 0.0
        %1616 = vmatpush.msra.mxu0 0.0
        %1617 = vmatpush.msra.mxu0 0.0
        %1618 = vmatpush.msra.mxu0 0.0
        %1619 = vmatpush.msra.mxu0 0.0
        %1620 = vmatpush.msra.mxu0 0.0
        %1621 = vmatpush.msra.mxu0 0.0
        %1622 = vmatpush.msra.mxu0 0.0
        %1623 = vmatpush.msra.mxu0 0.0
        %1624 = vmatpush.msra.mxu0 0.0
        %1625 = vmatpush.msra.mxu0 %v1605
        %1626 = vmatmul.f32.gmra.mxu0 %v1608
        %v1627 = vpop.f32.mrf.mxu0
        %v1628 = vadd.f32 0.0, %v1627
        %1629 = vdwg.mxu0
        %1631 = vrot.lane.b32.xlu0 %v1496, 8
        %v1632 = vpop.permute.xlu0 %1631
        %1635 = vrot.lane.b32.xlu0 %v1562, 16
        %v1636 = vpop.permute.xlu0 %1635
        %1639 = vrot.lane.b32.xlu0 %v1628, 24
        %v1640 = vpop.permute.xlu0 %1639
        %v1642 = vsel %vm518, %v1430, %v1632
        %v1643 = vsel %vm792, %v1642, %v1636
        %v1644 = vsel %vm794, %v1643, %v1640
        %v1646 = vsel %vm487, %v1644, 0
        %1648 = vmatpush.msra.mxu0 0.0
        %1649 = vmatpush.msra.mxu0 0.0
        %1650 = vmatpush.msra.mxu0 0.0
        %1651 = vmatpush.msra.mxu0 0.0
        %1652 = vmatpush.msra.mxu0 0.0
        %1653 = vmatpush.msra.mxu0 0.0
        %1654 = vmatpush.msra.mxu0 0.0
        %1655 = vmatpush.msra.mxu0 0.0
        %1656 = vmatpush.msra.mxu0 0.0
        %1657 = vmatpush.msra.mxu0 0.0
        %1658 = vmatpush.msra.mxu0 0.0
        %1659 = vmatpush.msra.mxu0 0.0
        %1660 = vmatpush.msra.mxu0 %v1366
        %1661 = vmatpush.msra.mxu0 %v1365
        %1662 = vmatpush.msra.mxu0 %v1364
        %1663 = vmatpush.msra.mxu0 %v1363
        %1664 = vmatmul.f32.gmra.mxu0 %v1646
        %v1665 = vpop.f32.mrf.mxu0
        %v1666 = vadd.f32 %v1331, %v1665
        %1667 = vdwg.mxu0
        %v1668 = vsel %vm487, %v1666, 0.0
        %1669 = vadd.xlane.f32.xlu0 %v1668
        %v1670 = vpop.xlane.xlu0 %1669
        %v1671 = vmul.f32 %v1670, %v828
        %v1672 = vsub.f32 %v1666, %v1671
        %v1673 = vmul.f32 %v1672, %v1672
        %v1674 = vsel %vm487, %v1673, 0.0
        %1675 = vadd.xlane.f32.xlu0 %v1674
        %v1676 = vpop.xlane.xlu0 %1675
        %v1677 = vmul.f32 %v1676, %v828
        %v1678 = vadd.f32 %v1677, 1e-05
        %v1679 = vrsqrt.pop %v1678
        %v1680 = vmul.f32 %v1679, %v1678
        %v1681 = vmul.f32 %v1680, %v1679
        %v1682 = vmul.f32 0.5, %v1681
        %v1683 = vsub.f32 1.5, %v1682
        %v1684 = vmul.f32 %v1679, %v1683
        %vm1685 = vweird.f32 %v1678
        %vm1686 = vweird.f32 %v1679
        %vm1687 = vmor %vm1685, %vm1686
        %v1688 = vsel %vm1687, %v1679, %v1684
        %v1689 = vmul.f32 %v1672, %v1688
        %v1690 = vperm.slane %v1333, 0
        %v1691 = vmul.f32 %v1689, %v1690
        %v1692 = vperm.slane %v1333, 1
        %v1693 = vadd.f32 %v1691, %v1692
        %s1694 = scalar_lea.vmem %s4, 32
        %v1695 = vld [vmem:[%s1694] sm:$0xff]
        %v1696 = vld [vmem:[%s1694 + $0x8] sm:$0xff]
        %v1697 = vld [vmem:[%s1694 + $0x10] sm:$0xff]
        %v1698 = vld [vmem:[%s1694 + $0x18] sm:$0xff]
        %v1700 = vsel %vm487, %v1693, 0
        %1702 = vmatpush.msra.mxu0 0.0
        %1703 = vmatpush.msra.mxu0 0.0
        %1704 = vmatpush.msra.mxu0 0.0
        %1705 = vmatpush.msra.mxu0 0.0
        %1706 = vmatpush.msra.mxu0 0.0
        %1707 = vmatpush.msra.mxu0 0.0
        %1708 = vmatpush.msra.mxu0 0.0
        %1709 = vmatpush.msra.mxu0 0.0
        %1710 = vmatpush.msra.mxu0 0.0
        %1711 = vmatpush.msra.mxu0 0.0
        %1712 = vmatpush.msra.mxu0 0.0
        %1713 = vmatpush.msra.mxu0 0.0
        %1714 = vmatpush.msra.mxu0 %v1698
        %1715 = vmatpush.msra.mxu0 %v1697
        %1716 = vmatpush.msra.mxu0 %v1696
        %1717 = vmatpush.msra.mxu0 %v1695
        %1718 = vmatmul.f32.gmra.mxu0 %v1700
        %v1719 = vpop.f32.mrf.mxu0
        %v1720 = vadd.f32 0.0, %v1719
        %1721 = vdwg.mxu0
        %s1722 = scalar_lea.vmem %s5, 32
        %v1723 = vld [vmem:[%s1722] sm:$0xff]
        %v1724 = vld [vmem:[%s1722 + $0x8] sm:$0xff]
        %v1725 = vld [vmem:[%s1722 + $0x10] sm:$0xff]
        %v1726 = vld [vmem:[%s1722 + $0x18] sm:$0xff]
        %1727 = vmatpush.msra.mxu0 0.0
        %1728 = vmatpush.msra.mxu0 0.0
        %1729 = vmatpush.msra.mxu0 0.0
        %1730 = vmatpush.msra.mxu0 0.0
        %1731 = vmatpush.msra.mxu0 0.0
        %1732 = vmatpush.msra.mxu0 0.0
        %1733 = vmatpush.msra.mxu0 0.0
        %1734 = vmatpush.msra.mxu0 0.0
        %1735 = vmatpush.msra.mxu0 0.0
        %1736 = vmatpush.msra.mxu0 0.0
        %1737 = vmatpush.msra.mxu0 0.0
        %1738 = vmatpush.msra.mxu0 0.0
        %1739 = vmatpush.msra.mxu0 %v1726
        %1740 = vmatpush.msra.mxu0 %v1725
        %1741 = vmatpush.msra.mxu0 %v1724
        %1742 = vmatpush.msra.mxu0 %v1723
        %1743 = vmatmul.f32.gmra.mxu0 %v884
        %v1744 = vpop.f32.mrf.mxu0
        %v1745 = vadd.f32 0.0, %v1744
        %1746 = vdwg.mxu0
        %s1747 = scalar_lea.vmem %s6, 32
        %v1748 = vld [vmem:[%s1747] sm:$0xff]
        %v1749 = vld [vmem:[%s1747 + $0x8] sm:$0xff]
        %v1750 = vld [vmem:[%s1747 + $0x10] sm:$0xff]
        %v1751 = vld [vmem:[%s1747 + $0x18] sm:$0xff]
        %v1753 = vsel %vm518, %v1720, 0
        %v1756 = vsel %vm518, %v1745, 0
        %1758 = vmatpush.xpose.msra.mxu0 0.0
        %1759 = vmatpush.xpose.msra.mxu0 0.0
        %1760 = vmatpush.xpose.msra.mxu0 0.0
        %1761 = vmatpush.xpose.msra.mxu0 0.0
        %1762 = vmatpush.xpose.msra.mxu0 0.0
        %1763 = vmatpush.xpose.msra.mxu0 0.0
        %1764 = vmatpush.xpose.msra.mxu0 0.0
        %1765 = vmatpush.xpose.msra.mxu0 0.0
        %1766 = vmatpush.xpose.msra.mxu0 0.0
        %1767 = vmatpush.xpose.msra.mxu0 0.0
        %1768 = vmatpush.xpose.msra.mxu0 0.0
        %1769 = vmatpush.xpose.msra.mxu0 0.0
        %1770 = vmatpush.xpose.msra.mxu0 0.0
        %1771 = vmatpush.xpose.msra.mxu0 0.0
        %1772 = vmatpush.xpose.msra.mxu0 0.0
        %1773 = vmatpush.xpose.msra.mxu0 %v1756
        %1774 = vmatmul.f32.gmra.mxu0 %v1753
        %v1775 = vpop.f32.mrf.mxu0
        %v1776 = vadd.f32 0.0, %v1775
        %1777 = vdwg.mxu0
        %v1778 = vmul.f32 %v1776, 0.17677669
        %v1779 = vsel %vm518, %v1778, -inf
        %1780 = vmax.xlane.f32.xlu0 %v1779
        %v1781 = vpop.xlane.xlu0 %1780
        %v1782 = vsub.f32 %v1778, %v1781
        %v1783 = vmul.f32 %v1782, 1.442695
        %v1784 = vpow.pop %v1783
        %v1785 = vsel %vm518, %v1784, 0.0
        %1786 = vadd.xlane.f32.xlu0 %v1785
        %v1787 = vpop.xlane.xlu0 %1786
        %v1788 = vrcp.pop %v1787
        %v1789 = vmul.f32 %v1784, %v1788
        %1790 = vrot.lane.b32.xlu0 %v1745, 96
        %v1791 = vpop.permute.xlu0 %1790
        %v1794 = vsel %vm518, %v1789, 0
        %1796 = vmatpush.msra.mxu0 0.0
        %1797 = vmatpush.msra.mxu0 0.0
        %1798 = vmatpush.msra.mxu0 0.0
        %1799 = vmatpush.msra.mxu0 0.0
        %1800 = vmatpush.msra.mxu0 0.0
        %1801 = vmatpush.msra.mxu0 0.0
        %1802 = vmatpush.msra.mxu0 0.0
        %1803 = vmatpush.msra.mxu0 0.0
        %1804 = vmatpush.msra.mxu0 0.0
        %1805 = vmatpush.msra.mxu0 0.0
        %1806 = vmatpush.msra.mxu0 0.0
        %1807 = vmatpush.msra.mxu0 0.0
        %1808 = vmatpush.msra.mxu0 0.0
        %1809 = vmatpush.msra.mxu0 0.0
        %1810 = vmatpush.msra.mxu0 0.0
        %1811 = vmatpush.msra.mxu0 %v1791
        %1812 = vmatmul.f32.gmra.mxu0 %v1794
        %v1813 = vpop.f32.mrf.mxu0
        %v1814 = vadd.f32 0.0, %v1813
        %1815 = vdwg.mxu0
        %1816 = vrot.lane.b32.xlu0 %v1720, 120
        %v1817 = vpop.permute.xlu0 %1816
        %1818 = vrot.lane.b32.xlu0 %v1745, 120
        %v1819 = vpop.permute.xlu0 %1818
        %v1820 = vsel %vm518, %v1817, 0
        %v1822 = vsel %vm518, %v1819, 0
        %1824 = vmatpush.xpose.msra.mxu0 0.0
        %1825 = vmatpush.xpose.msra.mxu0 0.0
        %1826 = vmatpush.xpose.msra.mxu0 0.0
        %1827 = vmatpush.xpose.msra.mxu0 0.0
        %1828 = vmatpush.xpose.msra.mxu0 0.0
        %1829 = vmatpush.xpose.msra.mxu0 0.0
        %1830 = vmatpush.xpose.msra.mxu0 0.0
        %1831 = vmatpush.xpose.msra.mxu0 0.0
        %1832 = vmatpush.xpose.msra.mxu0 0.0
        %1833 = vmatpush.xpose.msra.mxu0 0.0
        %1834 = vmatpush.xpose.msra.mxu0 0.0
        %1835 = vmatpush.xpose.msra.mxu0 0.0
        %1836 = vmatpush.xpose.msra.mxu0 0.0
        %1837 = vmatpush.xpose.msra.mxu0 0.0
        %1838 = vmatpush.xpose.msra.mxu0 0.0
        %1839 = vmatpush.xpose.msra.mxu0 %v1822
        %1840 = vmatmul.f32.gmra.mxu0 %v1820
        %v1841 = vpop.f32.mrf.mxu0
        %v1842 = vadd.f32 0.0, %v1841
        %1843 = vdwg.mxu0
        %v1844 = vmul.f32 %v1842, 0.17677669
        %v1845 = vsel %vm518, %v1844, -inf
        %1846 = vmax.xlane.f32.xlu0 %v1845
        %v1847 = vpop.xlane.xlu0 %1846
        %v1848 = vsub.f32 %v1844, %v1847
        %v1849 = vmul.f32 %v1848, 1.442695
        %v1850 = vpow.pop %v1849
        %v1851 = vsel %vm518, %v1850, 0.0
        %1852 = vadd.xlane.f32.xlu0 %v1851
        %v1853 = vpop.xlane.xlu0 %1852
        %v1854 = vrcp.pop %v1853
        %v1855 = vmul.f32 %v1850, %v1854
        %1856 = vrot.lane.b32.xlu0 %v1745, 88
        %v1857 = vpop.permute.xlu0 %1856
        %v1860 = vsel %vm518, %v1855, 0
        %1862 = vmatpush.msra.mxu0 0.0
        %1863 = vmatpush.msra.mxu0 0.0
        %1864 = vmatpush.msra.mxu0 0.0
        %1865 = vmatpush.msra.mxu0 0.0
        %1866 = vmatpush.msra.mxu0 0.0
        %1867 = vmatpush.msra.mxu0 0.0
        %1868 = vmatpush.msra.mxu0 0.0
        %1869 = vmatpush.msra.mxu0 0.0
        %1870 = vmatpush.msra.mxu0 0.0
        %1871 = vmatpush.msra.mxu0 0.0
        %1872 = vmatpush.msra.mxu0 0.0
        %1873 = vmatpush.msra.mxu0 0.0
        %1874 = vmatpush.msra.mxu0 0.0
        %1875 = vmatpush.msra.mxu0 0.0
        %1876 = vmatpush.msra.mxu0 0.0
        %1877 = vmatpush.msra.mxu0 %v1857
        %1878 = vmatmul.f32.gmra.mxu0 %v1860
        %v1879 = vpop.f32.mrf.mxu0
        %v1880 = vadd.f32 0.0, %v1879
        %1881 = vdwg.mxu0
        %1882 = vrot.lane.b32.xlu0 %v1720, 112
        %v1883 = vpop.permute.xlu0 %1882
        %1884 = vrot.lane.b32.xlu0 %v1745, 112
        %v1885 = vpop.permute.xlu0 %1884
        %v1886 = vsel %vm518, %v1883, 0
        %v1888 = vsel %vm518, %v1885, 0
        %1890 = vmatpush.xpose.msra.mxu0 0.0
        %1891 = vmatpush.xpose.msra.mxu0 0.0
        %1892 = vmatpush.xpose.msra.mxu0 0.0
        %1893 = vmatpush.xpose.msra.mxu0 0.0
        %1894 = vmatpush.xpose.msra.mxu0 0.0
        %1895 = vmatpush.xpose.msra.mxu0 0.0
        %1896 = vmatpush.xpose.msra.mxu0 0.0
        %1897 = vmatpush.xpose.msra.mxu0 0.0
        %1898 = vmatpush.xpose.msra.mxu0 0.0
        %1899 = vmatpush.xpose.msra.mxu0 0.0
        %1900 = vmatpush.xpose.msra.mxu0 0.0
        %1901 = vmatpush.xpose.msra.mxu0 0.0
        %1902 = vmatpush.xpose.msra.mxu0 0.0
        %1903 = vmatpush.xpose.msra.mxu0 0.0
        %1904 = vmatpush.xpose.msra.mxu0 0.0
        %1905 = vmatpush.xpose.msra.mxu0 %v1888
        %1906 = vmatmul.f32.gmra.mxu0 %v1886
        %v1907 = vpop.f32.mrf.mxu0
        %v1908 = vadd.f32 0.0, %v1907
        %1909 = vdwg.mxu0
        %v1910 = vmul.f32 %v1908, 0.17677669
        %v1911 = vsel %vm518, %v1910, -inf
        %1912 = vmax.xlane.f32.xlu0 %v1911
        %v1913 = vpop.xlane.xlu0 %1912
        %v1914 = vsub.f32 %v1910, %v1913
        %v1915 = vmul.f32 %v1914, 1.442695
        %v1916 = vpow.pop %v1915
        %v1917 = vsel %vm518, %v1916, 0.0
        %1918 = vadd.xlane.f32.xlu0 %v1917
        %v1919 = vpop.xlane.xlu0 %1918
        %v1920 = vrcp.pop %v1919
        %v1921 = vmul.f32 %v1916, %v1920
        %1922 = vrot.lane.b32.xlu0 %v1745, 80
        %v1923 = vpop.permute.xlu0 %1922
        %v1926 = vsel %vm518, %v1921, 0
        %1928 = vmatpush.msra.mxu0 0.0
        %1929 = vmatpush.msra.mxu0 0.0
        %1930 = vmatpush.msra.mxu0 0.0
        %1931 = vmatpush.msra.mxu0 0.0
        %1932 = vmatpush.msra.mxu0 0.0
        %1933 = vmatpush.msra.mxu0 0.0
        %1934 = vmatpush.msra.mxu0 0.0
        %1935 = vmatpush.msra.mxu0 0.0
        %1936 = vmatpush.msra.mxu0 0.0
        %1937 = vmatpush.msra.mxu0 0.0
        %1938 = vmatpush.msra.mxu0 0.0
        %1939 = vmatpush.msra.mxu0 0.0
        %1940 = vmatpush.msra.mxu0 0.0
        %1941 = vmatpush.msra.mxu0 0.0
        %1942 = vmatpush.msra.mxu0 0.0
        %1943 = vmatpush.msra.mxu0 %v1923
        %1944 = vmatmul.f32.gmra.mxu0 %v1926
        %v1945 = vpop.f32.mrf.mxu0
        %v1946 = vadd.f32 0.0, %v1945
        %1947 = vdwg.mxu0
        %1948 = vrot.lane.b32.xlu0 %v1720, 104
        %v1949 = vpop.permute.xlu0 %1948
        %1950 = vrot.lane.b32.xlu0 %v1745, 104
        %v1951 = vpop.permute.xlu0 %1950
        %v1952 = vsel %vm518, %v1949, 0
        %v1954 = vsel %vm518, %v1951, 0
        %1956 = vmatpush.xpose.msra.mxu0 0.0
        %1957 = vmatpush.xpose.msra.mxu0 0.0
        %1958 = vmatpush.xpose.msra.mxu0 0.0
        %1959 = vmatpush.xpose.msra.mxu0 0.0
        %1960 = vmatpush.xpose.msra.mxu0 0.0
        %1961 = vmatpush.xpose.msra.mxu0 0.0
        %1962 = vmatpush.xpose.msra.mxu0 0.0
        %1963 = vmatpush.xpose.msra.mxu0 0.0
        %1964 = vmatpush.xpose.msra.mxu0 0.0
        %1965 = vmatpush.xpose.msra.mxu0 0.0
        %1966 = vmatpush.xpose.msra.mxu0 0.0
        %1967 = vmatpush.xpose.msra.mxu0 0.0
        %1968 = vmatpush.xpose.msra.mxu0 0.0
        %1969 = vmatpush.xpose.msra.mxu0 0.0
        %1970 = vmatpush.xpose.msra.mxu0 0.0
        %1971 = vmatpush.xpose.msra.mxu0 %v1954
        %1972 = vmatmul.f32.gmra.mxu0 %v1952
        %v1973 = vpop.f32.mrf.mxu0
        %v1974 = vadd.f32 0.0, %v1973
        %1975 = vdwg.mxu0
        %v1976 = vmul.f32 %v1974, 0.17677669
        %v1977 = vsel %vm518, %v1976, -inf
        %1978 = vmax.xlane.f32.xlu0 %v1977
        %v1979 = vpop.xlane.xlu0 %1978
        %v1980 = vsub.f32 %v1976, %v1979
        %v1981 = vmul.f32 %v1980, 1.442695
        %v1982 = vpow.pop %v1981
        %v1983 = vsel %vm518, %v1982, 0.0
        %1984 = vadd.xlane.f32.xlu0 %v1983
        %v1985 = vpop.xlane.xlu0 %1984
        %v1986 = vrcp.pop %v1985
        %v1987 = vmul.f32 %v1982, %v1986
        %1988 = vrot.lane.b32.xlu0 %v1745, 72
        %v1989 = vpop.permute.xlu0 %1988
        %v1992 = vsel %vm518, %v1987, 0
        %1994 = vmatpush.msra.mxu0 0.0
        %1995 = vmatpush.msra.mxu0 0.0
        %1996 = vmatpush.msra.mxu0 0.0
        %1997 = vmatpush.msra.mxu0 0.0
        %1998 = vmatpush.msra.mxu0 0.0
        %1999 = vmatpush.msra.mxu0 0.0
        %2000 = vmatpush.msra.mxu0 0.0
        %2001 = vmatpush.msra.mxu0 0.0
        %2002 = vmatpush.msra.mxu0 0.0
        %2003 = vmatpush.msra.mxu0 0.0
        %2004 = vmatpush.msra.mxu0 0.0
        %2005 = vmatpush.msra.mxu0 0.0
        %2006 = vmatpush.msra.mxu0 0.0
        %2007 = vmatpush.msra.mxu0 0.0
        %2008 = vmatpush.msra.mxu0 0.0
        %2009 = vmatpush.msra.mxu0 %v1989
        %2010 = vmatmul.f32.gmra.mxu0 %v1992
        %v2011 = vpop.f32.mrf.mxu0
        %v2012 = vadd.f32 0.0, %v2011
        %2013 = vdwg.mxu0
        %2015 = vrot.lane.b32.xlu0 %v1880, 8
        %v2016 = vpop.permute.xlu0 %2015
        %2019 = vrot.lane.b32.xlu0 %v1946, 16
        %v2020 = vpop.permute.xlu0 %2019
        %2023 = vrot.lane.b32.xlu0 %v2012, 24
        %v2024 = vpop.permute.xlu0 %2023
        %v2026 = vsel %vm518, %v1814, %v2016
        %v2027 = vsel %vm792, %v2026, %v2020
        %v2028 = vsel %vm794, %v2027, %v2024
        %v2030 = vsel %vm487, %v2028, 0
        %2032 = vmatpush.msra.mxu0 0.0
        %2033 = vmatpush.msra.mxu0 0.0
        %2034 = vmatpush.msra.mxu0 0.0
        %2035 = vmatpush.msra.mxu0 0.0
        %2036 = vmatpush.msra.mxu0 0.0
        %2037 = vmatpush.msra.mxu0 0.0
        %2038 = vmatpush.msra.mxu0 0.0
        %2039 = vmatpush.msra.mxu0 0.0
        %2040 = vmatpush.msra.mxu0 0.0
        %2041 = vmatpush.msra.mxu0 0.0
        %2042 = vmatpush.msra.mxu0 0.0
        %2043 = vmatpush.msra.mxu0 0.0
        %2044 = vmatpush.msra.mxu0 %v1751
        %2045 = vmatpush.msra.mxu0 %v1750
        %2046 = vmatpush.msra.mxu0 %v1749
        %2047 = vmatpush.msra.mxu0 %v1748
        %2048 = vmatmul.f32.gmra.mxu0 %v2030
        %v2049 = vpop.f32.mrf.mxu0
        %v2050 = vadd.f32 0.0, %v2049
        %2051 = vdwg.mxu0
        %v2052 = vadd.f32 %v1693, %v2050
        %v2053 = vsel %vm487, %v2052, 0.0
        %2054 = vadd.xlane.f32.xlu0 %v2053
        %v2055 = vpop.xlane.xlu0 %2054
        %v2056 = vmul.f32 %v2055, %v828
        %v2057 = vsub.f32 %v2052, %v2056
        %v2058 = vmul.f32 %v2057, %v2057
        %v2059 = vsel %vm487, %v2058, 0.0
        %2060 = vadd.xlane.f32.xlu0 %v2059
        %v2061 = vpop.xlane.xlu0 %2060
        %v2062 = vmul.f32 %v2061, %v828
        %v2063 = vadd.f32 %v2062, 1e-05
        %v2064 = vrsqrt.pop %v2063
        %v2065 = vmul.f32 %v2064, %v2063
        %v2066 = vmul.f32 %v2065, %v2064
        %v2067 = vmul.f32 0.5, %v2066
        %v2068 = vsub.f32 1.5, %v2067
        %v2069 = vmul.f32 %v2064, %v2068
        %vm2070 = vweird.f32 %v2063
        %vm2071 = vweird.f32 %v2064
        %vm2072 = vmor %vm2070, %vm2071
        %v2073 = vsel %vm2072, %v2064, %v2069
        %v2074 = vmul.f32 %v2057, %v2073
        %v2075 = vperm.slane %v1333, 2
        %v2076 = vmul.f32 %v2074, %v2075
        %v2077 = vperm.slane %v1333, 3
        %v2078 = vadd.f32 %v2076, %v2077
        %s2079 = scalar_lea.vmem %s8, 32
        %v2080 = vld [vmem:[%s2079] sm:$0xff]
        %v2081 = vld [vmem:[%s2079 + $0x8] sm:$0xff]
        %v2082 = vld [vmem:[%s2079 + $0x10] sm:$0xff]
        %v2083 = vld [vmem:[%s2079 + $0x18] sm:$0xff]
        %s2084 = scalar_lea.vmem %s9, 1
        %v2085 = vld [vmem:[%s2084] sm:$0x1]
        %v2087 = vperm.slane %v2085, 0
        %v2090 = vsel %vm487, %v2078, 0
        %2092 = vmatpush.msra.mxu0 0.0
        %2093 = vmatpush.msra.mxu0 0.0
        %2094 = vmatpush.msra.mxu0 0.0
        %2095 = vmatpush.msra.mxu0 0.0
        %2096 = vmatpush.msra.mxu0 0.0
        %2097 = vmatpush.msra.mxu0 0.0
        %2098 = vmatpush.msra.mxu0 0.0
        %2099 = vmatpush.msra.mxu0 0.0
        %2100 = vmatpush.msra.mxu0 0.0
        %2101 = vmatpush.msra.mxu0 0.0
        %2102 = vmatpush.msra.mxu0 0.0
        %2103 = vmatpush.msra.mxu0 0.0
        %2104 = vmatpush.msra.mxu0 %v2083
        %2105 = vmatpush.msra.mxu0 %v2082
        %2106 = vmatpush.msra.mxu0 %v2081
        %2107 = vmatpush.msra.mxu0 %v2080
        %2108 = vmatmul.f32.gmra.mxu0 %v2090
        %v2109 = vpop.f32.mrf.mxu0
        %v2110 = vadd.f32 %v2087, %v2109
        %2111 = vdwg.mxu0
        %v2112 = vmax.f32 %v2110, 0.0
        %s2113 = scalar_lea.vmem %s10, 64
        %v2114 = vld [vmem:[%s2113] sm:$0xff]
        %v2115 = vld [vmem:[%s2113 + $0x8] sm:$0xff]
        %v2116 = vld [vmem:[%s2113 + $0x10] sm:$0xff]
        %v2117 = vld [vmem:[%s2113 + $0x18] sm:$0xff]
        %v2118 = vld [vmem:[%s2113 + $0x20] sm:$0xff]
        %v2119 = vld [vmem:[%s2113 + $0x28] sm:$0xff]
        %v2120 = vld [vmem:[%s2113 + $0x30] sm:$0xff]
        %v2121 = vld [vmem:[%s2113 + $0x38] sm:$0xff]
        %s2122 = scalar_lea.vmem %s11, 1
        %v2123 = vld [vmem:[%s2122] sm:$0x1]
        %v2125 = vperm.slane %v2123, 0
        %v2128 = vsel %vm1281, %v2112, 0
        %2130 = vmatpush.msra.mxu0 0.0
        %2131 = vmatpush.msra.mxu0 0.0
        %2132 = vmatpush.msra.mxu0 0.0
        %2133 = vmatpush.msra.mxu0 0.0
        %2134 = vmatpush.msra.mxu0 0.0
        %2135 = vmatpush.msra.mxu0 0.0
        %2136 = vmatpush.msra.mxu0 0.0
        %2137 = vmatpush.msra.mxu0 0.0
        %2138 = vmatpush.msra.mxu0 %v2121
        %2139 = vmatpush.msra.mxu0 %v2120
        %2140 = vmatpush.msra.mxu0 %v2119
        %2141 = vmatpush.msra.mxu0 %v2118
        %2142 = vmatpush.msra.mxu0 %v2117
        %2143 = vmatpush.msra.mxu0 %v2116
        %2144 = vmatpush.msra.mxu0 %v2115
        %2145 = vmatpush.msra.mxu0 %v2114
        %2146 = vmatmul.f32.gmra.mxu0 %v2128
        %v2147 = vpop.f32.mrf.mxu0
        %v2148 = vadd.f32 %v2125, %v2147
        %2149 = vdwg.mxu0
        %v2150 = vadd.f32 %v2148, %v2078
        %v2151 = vsel %vm487, %v2150, 0.0
        %2152 = vadd.xlane.f32.xlu0 %v2151
        %v2153 = vpop.xlane.xlu0 %2152
        %v2154 = vmul.f32 %v2153, %v828
        %v2155 = vsub.f32 %v2150, %v2154
        %v2156 = vmul.f32 %v2155, %v2155
        %v2157 = vsel %vm487, %v2156, 0.0
        %2158 = vadd.xlane.f32.xlu0 %v2157
        %v2159 = vpop.xlane.xlu0 %2158
        %v2160 = vmul.f32 %v2159, %v828
        %v2161 = vadd.f32 %v2160, 1e-05
        %v2162 = vrsqrt.pop %v2161
        %v2163 = vmul.f32 %v2162, %v2161
        %v2164 = vmul.f32 %v2163, %v2162
        %v2165 = vmul.f32 0.5, %v2164
        %v2166 = vsub.f32 1.5, %v2165
        %v2167 = vmul.f32 %v2162, %v2166
        %vm2168 = vweird.f32 %v2161
        %vm2169 = vweird.f32 %v2162
        %vm2170 = vmor %vm2168, %vm2169
        %v2171 = vsel %vm2170, %v2162, %v2167
        %v2172 = vmul.f32 %v2155, %v2171
        %v2173 = vperm.slane %v1333, 4
        %v2174 = vmul.f32 %v2172, %v2173
        %v2175 = vperm.slane %v1333, 5
        %v2176 = vadd.f32 %v2174, %v2175
        %v2177 = vld [vmem:[%s12] sm:$0xff]
        %v2178 = vld [vmem:[%s12 + $0x8] sm:$0xff]
        %v2179 = vld [vmem:[%s12 + $0x10] sm:$0xff]
        %v2180 = vld [vmem:[%s12 + $0x18] sm:$0xff]
        %v2181 = vld [vmem:[%s13] sm:$0x1]
        %v2183 = vperm.slane %v2181, 0
        %v2186 = vsel %vm487, %v2176, 0
        %2188 = vmatpush.msra.mxu0 0.0
        %2189 = vmatpush.msra.mxu0 0.0
        %2190 = vmatpush.msra.mxu0 0.0
        %2191 = vmatpush.msra.mxu0 0.0
        %2192 = vmatpush.msra.mxu0 0.0
        %2193 = vmatpush.msra.mxu0 0.0
        %2194 = vmatpush.msra.mxu0 0.0
        %2195 = vmatpush.msra.mxu0 0.0
        %2196 = vmatpush.msra.mxu0 0.0
        %2197 = vmatpush.msra.mxu0 0.0
        %2198 = vmatpush.msra.mxu0 0.0
        %2199 = vmatpush.msra.mxu0 0.0
        %2200 = vmatpush.msra.mxu0 %v2180
        %2201 = vmatpush.msra.mxu0 %v2179
        %2202 = vmatpush.msra.mxu0 %v2178
        %2203 = vmatpush.msra.mxu0 %v2177
        %2204 = vmatmul.f32.gmra.mxu0 %v2186
        %v2205 = vpop.f32.mrf.mxu0
        %v2206 = vadd.f32 %v2183, %v2205
        %2207 = vdwg.mxu0
        %2208 = vst [vmem:[%s471] sm:$0xff] %v2206
        %s2209 = sand.u32 %s340, 1
        %s2210 = scalar_lea.sflag [#allocation3], %s2209
        %s2211 = sand.u32 %s340, 1
        %s2212 = smul.addr %s2211, 8
        %s2213 = scalar_lea.vmem [#allocation2], %s2212
        // Predicated region
        $region77: #{decoder_forward.1} parent=75 // pred_check
          %p2214 = pneg %p350
        $region78: #{decoder_forward.1} parent=75 // pred_check_branch
          %2216 = sbr.rel (%p2214) target = $region80
        $region79: #{decoder_forward.1} parent=75 // pred_region
          %2218 = vsyncadd %s2210, 0
          %s2219 = smul.addr %s28, 8
          %s2220 = scalar_lea.hbm %s14, %s2219
          %s2222 = sshll.u32 %s2213, 4
          %s2223 = int_to_ptr.vmem [resolvable:$true] %s2222
          %s2224 = sshll.u32 %s2220, 4
          %s2225 = int_to_ptr.hbm [resolvable:$true] %s2224
          %2227 = dma.vmem_to_hbm [thread:$0]  %s2223, 128, %s2225, %s2210
        $region80: #{decoder_forward.1} parent=75 // pred_fallthru
          _
      $region76: #{decoder_forward.1} parent=5 // pred_fallthru
        _
      %p2228 = scmp.le.s32.totalorder 2, %s23
      // Predicated region
      $region81: #{decoder_forward.1} parent=5 // pred_check
        %p2229 = pneg %p2228
      $region82: #{decoder_forward.1} parent=5 // pred_check_branch
        %2231 = sbr.rel (%p2229) target = $region84
      $region83: #{decoder_forward.1} parent=5 // pred_region
        %s2232 = ssub.s32 %s23, 2
        // Predicated region
        $region85: #{decoder_forward.1} parent=83 // pred_check
          %p2233 = pneg %p356
        $region86: #{decoder_forward.1} parent=83 // pred_check_branch
          %2235 = sbr.rel (%p2233) target = $region88
        $region87: #{decoder_forward.1} parent=83 // pred_region
          %s2236 = sand.u32 %s341, 1
          %s2237 = scalar_lea.sflag [#allocation3], %s2236
          %s2238 = sand.u32 %s341, 1
          %s2239 = smul.addr %s2238, 8
          %s2240 = scalar_lea.vmem [#allocation2], %s2239
          %2242 = dma.done %s2237, 128
        $region88: #{decoder_forward.1} parent=83 // pred_fallthru
          _
      $region84: #{decoder_forward.1} parent=5 // pred_fallthru
        _
    $region6: #{decoder_forward.1} parent=1 // loop_footer
      %s27 = sadd.s32 1, %s23
    $region7: #{decoder_forward.1} parent=1 // loop_footer_branch
      %22 = sbr.rel target = $region3
    $region8: #{decoder_forward.1} parent=1 // loop_exit
      _
    %2243 = vsyncpa [#allocation3], 1
    %s2244 = scalar_lea.sflag [#allocation3], 1
    %2245 = vsyncpa %s2244, 1

</llo_original>
